<compile_context>
chip_gen: v7x
topology: tpu7x:2x2x1
jax: 0.10.0
libtpu: 0.0.40
codegen_flags: <defaults>
</compile_context>

<pallas_src>
import jax
import jax.numpy as jnp
from jax import lax
from jax.experimental import pallas as pl
from jax.experimental.pallas import tpu as pltpu


_VMEM_LIMIT_BYTES = 32 * 1024 * 1024  # covers v5e's 16 MiB default; <= every gen's physical


def _cdiv(a, b):
    return -(-a // b)


def _pick_tm(m, tm, min_split=2):
    """Row-tile size: multiple of 8, <= tm, small enough for >= min_split grid steps."""
    tm = max(8, (int(tm) // 8) * 8)                 # round-to-multiple-of-8 guard
    target = 8 * _cdiv(_cdiv(m, min_split), 8)      # >=2 steps so both v7x TCs get work
    t = min(tm, target)
    return m if t >= m else t                       # full-dim block is always legal


# ---------------------------------------------------------------------------
# Pallas kernels
# ---------------------------------------------------------------------------
def _conv_relu_pool_kernel(p_ref, w_ref, b_ref, o_ref):
    """p_ref: (4, TM, K) bf16 quadrant patches; w_ref: (K, Cout) bf16; b_ref: (1, Cout) f32.

    out = relu(max_over_quadrants(p @ w) + b): bias/ReLU commute with the max (shared bias,
    ReLU monotonic) -> fused conv + bias + ReLU + 2x2 maxpool in one MXU pass.
    Partial last blocks feed Pallas-padded garbage rows through dot/max/relu; that is safe
    here (no exp/div) and the padded rows are masked on writeback.
    """
    nq, tm, k = p_ref.shape
    w = w_ref[...]
    if tm % 8 == 0:
        # One long systolic pass over all 4 quadrants (layout-free leading-dim merge),
        # then the pool as a VPU max over the 4 result slabs.
        acc = jnp.dot(p_ref[...].reshape(nq * tm, k), w,
                      preferred_element_type=jnp.float32)
        acc = acc.reshape(nq, tm, acc.shape[-1])
        out = acc[0]
        for qi in range(1, nq):
            out = jnp.maximum(out, acc[qi])
    else:
        # Fallback (only reachable for tiny, non-8-aligned row tiles): 4 separate dots.
        out = jnp.dot(p_ref[0], w, preferred_element_type=jnp.float32)
        for qi in range(1, nq):
            out = jnp.maximum(out, jnp.dot(p_ref[qi], w,
                                           preferred_element_type=jnp.float32))
    o_ref[...] = jnp.maximum(out + b_ref[...], 0.0).astype(o_ref.dtype)


def _fc_chain_kernel(x_ref, w1_ref, b1_ref, w2_ref, b2_ref, w3_ref, b3_ref, o_ref):
    """fc1 -> ReLU -> fc2 -> ReLU -> fc3, all intermediates kept on-chip."""
    h = jnp.dot(x_ref[...], w1_ref[...], preferred_element_type=jnp.float32)
    h = jnp.maximum(h + b1_ref[...], 0.0).astype(jnp.bfloat16)
    h = jnp.dot(h, w2_ref[...], preferred_element_type=jnp.float32)
    h = jnp.maximum(h + b2_ref[...], 0.0).astype(jnp.bfloat16)
    h = jnp.dot(h, w3_ref[...], preferred_element_type=jnp.float32)
    o_ref[...] = (h + b3_ref[...]).astype(o_ref.dtype)


# ---------------------------------------------------------------------------
# Pallas wrappers (row-tiled grids; block == full array on every other axis)
# ---------------------------------------------------------------------------
def conv_relu_pool(patches, w, b, tm=2048):
    """patches: (4, M, K) bf16; w: (K, Cout) bf16; b: (1, Cout) f32 -> (M, Cout) bf16."""
    _, M, K = patches.shape
    Cout = w.shape[1]
    TM = _pick_tm(M, tm)
    return pl.pallas_call(
        _conv_relu_pool_kernel,
        out_shape=jax.ShapeDtypeStruct((M, Cout), jnp.bfloat16),
        grid=(pl.cdiv(M, TM),),
        in_specs=[
            pl.BlockSpec((4, TM, K), lambda i: (0, i, 0)),
            pl.BlockSpec((K, Cout), lambda i: (0, 0)),
            pl.BlockSpec((1, Cout), lambda i: (0, 0)),
        ],
        out_specs=pl.BlockSpec((TM, Cout), lambda i: (i, 0)),
        compiler_params=pltpu.CompilerParams(
            dimension_semantics=("parallel",),
            vmem_limit_bytes=_VMEM_LIMIT_BYTES),
    )(patches, w, b)


def fc_chain(x, w1, b1, w2, b2, w3, b3, tm=1024):
    """x: (M, K) bf16; weights bf16 (K, N) layout; biases f32 (1, N) -> (M, 10) f32."""
    M, K = x.shape
    TM = _pick_tm(M, tm)
    return pl.pallas_call(
        _fc_chain_kernel,
        out_shape=jax.ShapeDtypeStruct((M, w3.shape[1]), jnp.float32),
        grid=(pl.cdiv(M, TM),),
        in_specs=[
            pl.BlockSpec((TM, K), lambda i: (i, 0)),
            pl.BlockSpec(w1.shape, lambda i: (0, 0)),
            pl.BlockSpec(b1.shape, lambda i: (0, 0)),
            pl.BlockSpec(w2.shape, lambda i: (0, 0)),
            pl.BlockSpec(b2.shape, lambda i: (0, 0)),
            pl.BlockSpec(w3.shape, lambda i: (0, 0)),
            pl.BlockSpec(b3.shape, lambda i: (0, 0)),
        ],
        out_specs=pl.BlockSpec((TM, w3.shape[1]), lambda i: (i, 0)),
        compiler_params=pltpu.CompilerParams(
            dimension_semantics=("parallel",),
            vmem_limit_bytes=_VMEM_LIMIT_BYTES),
    )(x, w1, b1, w2, b2, w3, b3)


# ---------------------------------------------------------------------------
# XLA glue: quadrant im2col for fused conv+pool (single pass, no strided re-reads)
# ---------------------------------------------------------------------------
def _pool_quadrant_patches(x_nhwc, KH, KW):
    """Build the 4 im2col patch matrices, one per 2x2-pool quadrant.

    Quadrant (dh, dw), row (n, p, q) holds the conv patch for output position
    (2p+dh, 2q+dw); column order is (kh, kw, cin) to match the conv weight matrix.
    Returns (4, N*Po*Qo, KH*KW*Cin).  The quadrant split is a single reshape+transpose
    of the patch matrix (not 4 strided re-reads + stack).
    """
    N, H, W, C = x_nhwc.shape
    Ho, Wo = H - KH + 1, W - KW + 1
    Po, Qo = Ho // 2, Wo // 2
    K = KH * KW * C
    cols = [x_nhwc[:, kh:kh + Ho, kw:kw + Wo, :] for kh in range(KH) for kw in range(KW)]
    patches = jnp.concatenate(cols, axis=-1)                        # (N, Ho, Wo, K)
    p = patches[:, :2 * Po, :2 * Qo, :].reshape(N, Po, 2, Qo, 2, K)
    p = jnp.transpose(p, (2, 4, 0, 1, 3, 5))                        # (2, 2, N, Po, Qo, K)
    return p.reshape(4, N * Po * Qo, K)


# ---------------------------------------------------------------------------
# Parameters (PyTorch-style init) and one-time weight layout/dtype preparation
# ---------------------------------------------------------------------------
def init_params(key):
    ks = jax.random.split(key, 10)

    def u(k, shape, fan_in):
        bound = 1.0 / (fan_in ** 0.5)
        return jax.random.uniform(k, shape, jnp.float32, -bound, bound)

    return {
        "conv1_w": u(ks[0], (6, 3, 5, 5), 3 * 5 * 5),
        "conv1_b": u(ks[1], (6,), 3 * 5 * 5),
        "conv2_w": u(ks[2], (16, 6, 5, 5), 6 * 5 * 5),
        "conv2_b": u(ks[3], (16,), 6 * 5 * 5),
        "fc1_w": u(ks[4], (120, 400), 400),
        "fc1_b": u(ks[5], (120,), 400),
        "fc2_w": u(ks[6], (84, 120), 120),
        "fc2_b": u(ks[7], (84,), 120),
        "fc3_w": u(ks[8], (10, 84), 84),
        "fc3_b": u(ks[9], (10,), 84),
    }


def prepare_params(params):
    """One-time weight prep, hoisted out of the forward (runs once, not per step)."""
    # conv weights: (O, I, KH, KW) -> (KH*KW*I, O) matching the (kh, kw, cin) patch columns
    w1 = jnp.transpose(params["conv1_w"], (2, 3, 1, 0)).reshape(75, 6).astype(jnp.bfloat16)
    w2 = jnp.transpose(params["conv2_w"], (2, 3, 1, 0)).reshape(150, 16).astype(jnp.bfloat16)
    # fc1: permute columns from PyTorch's NCHW-flatten order (c, h, w) to our (h, w, c)
    fw1 = (params["fc1_w"].reshape(120, 16, 5, 5).transpose(0, 2, 3, 1)
           .reshape(120, 400).T.astype(jnp.bfloat16))
    fw2 = params["fc2_w"].T.astype(jnp.bfloat16)
    fw3 = params["fc3_w"].T.astype(jnp.bfloat16)
    return {
        "conv1_w": w1, "conv1_b": params["conv1_b"].reshape(1, -1).astype(jnp.float32),
        "conv2_w": w2, "conv2_b": params["conv2_b"].reshape(1, -1).astype(jnp.float32),
        "fc1_w": fw1, "fc1_b": params["fc1_b"].reshape(1, -1).astype(jnp.float32),
        "fc2_w": fw2, "fc2_b": params["fc2_b"].reshape(1, -1).astype(jnp.float32),
        "fc3_w": fw3, "fc3_b": params["fc3_b"].reshape(1, -1).astype(jnp.float32),
    }


# ---------------------------------------------------------------------------
# Net forward (mirrors the PyTorch module)
# ---------------------------------------------------------------------------
def net_forward(prepped, x_nchw):
    N = x_nchw.shape[0]
    x = jnp.transpose(x_nchw, (0, 2, 3, 1)).astype(jnp.bfloat16)      # NCHW -> NHWC, bf16

    # stage 1: conv1(3->6, 5x5) + ReLU + 2x2 maxpool, fused in one kernel
    p1 = _pool_quadrant_patches(x, 5, 5)                              # (4, N*14*14, 75)
    y1 = conv_relu_pool(p1, prepped["conv1_w"], prepped["conv1_b"]).reshape(N, 14, 14, 6)

    # stage 2: conv2(6->16, 5x5) + ReLU + 2x2 maxpool, fused in one kernel
    p2 = _pool_quadrant_patches(y1, 5, 5)                             # (4, N*5*5, 150)
    y2 = conv_relu_pool(p2, prepped["conv2_w"], prepped["conv2_b"])   # (N*25, 16) bf16

    # flatten: rows are (n, h, w), columns c -> features in (h, w, c) order; the fc1
    # weight columns were pre-permuted accordingly in prepare_params.
    xf = y2.reshape(N, 400)
    return fc_chain(xf, prepped["fc1_w"], prepped["fc1_b"],
                    prepped["fc2_w"], prepped["fc2_b"],
                    prepped["fc3_w"], prepped["fc3_b"])               # (N, 10) f32


# Pure-JAX reference (f32) for a sanity check.
def net_forward_ref(params, x_nchw):
    x = jnp.transpose(x_nchw, (0, 2, 3, 1))
    dn = ("NHWC", "HWIO", "NHWC")

    def conv_relu_pool_ref(x, w_oihw, b):
        w = jnp.transpose(w_oihw, (2, 3, 1, 0))
        y = lax.conv_general_dilated(x, w, (1, 1), "VALID", dimension_numbers=dn)
        y = jax.nn.relu(y + b)
        return lax.reduce_window(y, -jnp.inf, lax.max, (1, 2, 2, 1), (1, 2, 2, 1), "VALID")

    x = conv_relu_pool_ref(x, params["conv1_w"], params["conv1_b"])
    x = conv_relu_pool_ref(x, params["conv2_w"], params["conv2_b"])
    f = jnp.transpose(x, (0, 3, 1, 2)).reshape(x.shape[0], -1)        # NCHW flatten
    f = jax.nn.relu(f @ params["fc1_w"].T + params["fc1_b"])
    f = jax.nn.relu(f @ params["fc2_w"].T + params["fc2_b"])
    return f @ params["fc3_w"].T + params["fc3_b"]


if __name__ == "__main__":
    key = jax.random.PRNGKey(0)
    k_params, k_x = jax.random.split(key)
    params = init_params(k_params)
    prepped = prepare_params(params)          # one-time weight layout/dtype prep
    # conv1(5) -> pool -> conv2(5) -> pool -> 16*5*5 features implies 32x32 input
    x = jax.random.normal(k_x, (2, 3, 32, 32), dtype=jnp.float32)

    fwd = jax.jit(net_forward)
    out = jax.block_until_ready(fwd(prepped, x))
    assert out.shape == (2, 10), out.shape

    ref = net_forward_ref(params, x)
    # loose tolerance: bf16 activations/operands with f32 accumulation (accepted tradeoff)
    assert jnp.allclose(out, ref, rtol=1e-1, atol=1e-1), float(jnp.max(jnp.abs(out - ref)))
    print("KERNEL_OK")
</pallas_src>

<mosaic_0001>
module attributes {stable_mosaic.version = 11 : i64} {
  func.func @_conv_relu_pool_kernel(%arg0: i32, %arg1: memref<4x200x75xbf16, #tpu.memory_space<vmem>>, %arg2: memref<75x6xbf16, #tpu.memory_space<vmem>>, %arg3: memref<1x6xf32, #tpu.memory_space<vmem>>, %arg4: memref<200x6xbf16, #tpu.memory_space<vmem>>) attributes {dimension_semantics = [#tpu.dimension_semantics<parallel>], iteration_bounds = array<i64: 2>, scalar_prefetch = 0 : i64, scratch_operands = 0 : i64, tpu.core_type = #tpu.core_type<tc>, window_params = [{transform_indices = @transform_0, window_bounds = array<i64: 4, 200, 75>}, {pipeline_mode = #tpu.pipeline_mode<synchronous>, transform_indices = @transform_1, window_bounds = array<i64: 75, 6>}, {pipeline_mode = #tpu.pipeline_mode<synchronous>, transform_indices = @transform_2, window_bounds = array<i64: 1, 6>}, {transform_indices = @transform_3, window_bounds = array<i64: 200, 6>}]} {
    %c0 = arith.constant 0 : index
    %c0_0 = arith.constant 0 : index
    %0 = vector.load %arg2[%c0, %c0_0] : memref<75x6xbf16, #tpu.memory_space<vmem>>, vector<75x6xbf16>
    %c0_1 = arith.constant 0 : index
    %c0_2 = arith.constant 0 : index
    %c0_3 = arith.constant 0 : index
    %1 = vector.load %arg1[%c0_1, %c0_2, %c0_3] : memref<4x200x75xbf16, #tpu.memory_space<vmem>>, vector<4x200x75xbf16>
    %2 = vector.shape_cast %1 : vector<4x200x75xbf16> to vector<800x75xbf16>
    %cst = arith.constant dense<0.000000e+00> : vector<800x6xf32>
    %3 = tpu.matmul %2, %0, %cst {dimension_numbers = #tpu.dot_dimension_numbers<[1], [0], [0], [1], [0, 0, 1, 1], [], []>} : vector<800x75xbf16>, vector<75x6xbf16>, vector<800x6xf32> -> vector<800x6xf32>
    %4 = vector.shape_cast %3 : vector<800x6xf32> to vector<4x200x6xf32>
    %5 = vector.extract_strided_slice %4 {offsets = [0, 0, 0], sizes = [1, 200, 6], strides = [1, 1, 1]} : vector<4x200x6xf32> to vector<1x200x6xf32>
    %6 = vector.shape_cast %5 : vector<1x200x6xf32> to vector<200x6xf32>
    %7 = vector.extract_strided_slice %4 {offsets = [1, 0, 0], sizes = [1, 200, 6], strides = [1, 1, 1]} : vector<4x200x6xf32> to vector<1x200x6xf32>
    %8 = vector.shape_cast %7 : vector<1x200x6xf32> to vector<200x6xf32>
    %9 = arith.maximumf %6, %8 : vector<200x6xf32>
    %10 = vector.extract_strided_slice %4 {offsets = [2, 0, 0], sizes = [1, 200, 6], strides = [1, 1, 1]} : vector<4x200x6xf32> to vector<1x200x6xf32>
    %11 = vector.shape_cast %10 : vector<1x200x6xf32> to vector<200x6xf32>
    %12 = arith.maximumf %9, %11 : vector<200x6xf32>
    %13 = vector.extract_strided_slice %4 {offsets = [3, 0, 0], sizes = [1, 200, 6], strides = [1, 1, 1]} : vector<4x200x6xf32> to vector<1x200x6xf32>
    %14 = vector.shape_cast %13 : vector<1x200x6xf32> to vector<200x6xf32>
    %15 = arith.maximumf %12, %14 : vector<200x6xf32>
    %c0_4 = arith.constant 0 : index
    %c0_5 = arith.constant 0 : index
    %16 = vector.load %arg3[%c0_4, %c0_5] : memref<1x6xf32, #tpu.memory_space<vmem>>, vector<1x6xf32>
    %17 = vector.broadcast %16 : vector<1x6xf32> to vector<200x6xf32>
    %18 = arith.addf %15, %17 : vector<200x6xf32>
    %cst_6 = arith.constant 0.000000e+00 : f32
    %19 = vector.broadcast %cst_6 : f32 to vector<200x6xf32>
    %20 = arith.maximumf %18, %19 : vector<200x6xf32>
    %21 = arith.truncf %20 : vector<200x6xf32> to vector<200x6xbf16>
    %c0_7 = arith.constant 0 : index
    %c0_8 = arith.constant 0 : index
    %22 = vector.load %arg4[%c0_7, %c0_8] : memref<200x6xbf16, #tpu.memory_space<vmem>>, vector<200x6xbf16>
    tpu.vector_store %arg4[%c0_7, %c0_8], %21 {strides = array<i32>} : memref<200x6xbf16, #tpu.memory_space<vmem>>, vector<200x6xbf16>,
    return
  }
  func.func @transform_0(%arg0: i32) -> (i32, i32, i32) {
    %c0_i32 = arith.constant 0 : i32
    %c0_i32_0 = arith.constant 0 : i32
    %c0_i32_1 = arith.constant 0 : i32
    return %c0_i32, %arg0, %c0_i32_0 : i32, i32, i32
  }
  func.func @transform_1(%arg0: i32) -> (i32, i32) {
    %c0_i32 = arith.constant 0 : i32
    %c0_i32_0 = arith.constant 0 : i32
    %c0_i32_1 = arith.constant 0 : i32
    return %c0_i32, %c0_i32_0 : i32, i32
  }
  func.func @transform_2(%arg0: i32) -> (i32, i32) {
    %c0_i32 = arith.constant 0 : i32
    %c0_i32_0 = arith.constant 0 : i32
    %c0_i32_1 = arith.constant 0 : i32
    return %c0_i32, %c0_i32_0 : i32, i32
  }
  func.func @transform_3(%arg0: i32) -> (i32, i32) {
    %c0_i32 = arith.constant 0 : i32
    %c0_i32_0 = arith.constant 0 : i32
    return %arg0, %c0_i32 : i32, i32
  }
}

module attributes {stable_mosaic.version = 11 : i64} {
  func.func @_conv_relu_pool_kernel(%arg0: i32, %arg1: memref<4x32x150xbf16, #tpu.memory_space<vmem>>, %arg2: memref<150x16xbf16, #tpu.memory_space<vmem>>, %arg3: memref<1x16xf32, #tpu.memory_space<vmem>>, %arg4: memref<32x16xbf16, #tpu.memory_space<vmem>>) attributes {dimension_semantics = [#tpu.dimension_semantics<parallel>], iteration_bounds = array<i64: 2>, scalar_prefetch = 0 : i64, scratch_operands = 0 : i64, tpu.core_type = #tpu.core_type<tc>, window_params = [{transform_indices = @transform_0, window_bounds = array<i64: 4, 32, 150>}, {pipeline_mode = #tpu.pipeline_mode<synchronous>, transform_indices = @transform_1, window_bounds = array<i64: 150, 16>}, {pipeline_mode = #tpu.pipeline_mode<synchronous>, transform_indices = @transform_2, window_bounds = array<i64: 1, 16>}, {transform_indices = @transform_3, window_bounds = array<i64: 32, 16>}]} {
    %c0 = arith.constant 0 : index
    %c0_0 = arith.constant 0 : index
    %0 = vector.load %arg2[%c0, %c0_0] : memref<150x16xbf16, #tpu.memory_space<vmem>>, vector<150x16xbf16>
    %c0_1 = arith.constant 0 : index
    %c0_2 = arith.constant 0 : index
    %c0_3 = arith.constant 0 : index
    %1 = vector.load %arg1[%c0_1, %c0_2, %c0_3] : memref<4x32x150xbf16, #tpu.memory_space<vmem>>, vector<4x32x150xbf16>
    %2 = vector.shape_cast %1 : vector<4x32x150xbf16> to vector<128x150xbf16>
    %cst = arith.constant dense<0.000000e+00> : vector<128x16xf32>
    %3 = tpu.matmul %2, %0, %cst {dimension_numbers = #tpu.dot_dimension_numbers<[1], [0], [0], [1], [0, 0, 1, 1], [], []>} : vector<128x150xbf16>, vector<150x16xbf16>, vector<128x16xf32> -> vector<128x16xf32>
    %4 = vector.shape_cast %3 : vector<128x16xf32> to vector<4x32x16xf32>
    %5 = vector.extract_strided_slice %4 {offsets = [0, 0, 0], sizes = [1, 32, 16], strides = [1, 1, 1]} : vector<4x32x16xf32> to vector<1x32x16xf32>
    %6 = vector.shape_cast %5 : vector<1x32x16xf32> to vector<32x16xf32>
    %7 = vector.extract_strided_slice %4 {offsets = [1, 0, 0], sizes = [1, 32, 16], strides = [1, 1, 1]} : vector<4x32x16xf32> to vector<1x32x16xf32>
    %8 = vector.shape_cast %7 : vector<1x32x16xf32> to vector<32x16xf32>
    %9 = arith.maximumf %6, %8 : vector<32x16xf32>
    %10 = vector.extract_strided_slice %4 {offsets = [2, 0, 0], sizes = [1, 32, 16], strides = [1, 1, 1]} : vector<4x32x16xf32> to vector<1x32x16xf32>
    %11 = vector.shape_cast %10 : vector<1x32x16xf32> to vector<32x16xf32>
    %12 = arith.maximumf %9, %11 : vector<32x16xf32>
    %13 = vector.extract_strided_slice %4 {offsets = [3, 0, 0], sizes = [1, 32, 16], strides = [1, 1, 1]} : vector<4x32x16xf32> to vector<1x32x16xf32>
    %14 = vector.shape_cast %13 : vector<1x32x16xf32> to vector<32x16xf32>
    %15 = arith.maximumf %12, %14 : vector<32x16xf32>
    %c0_4 = arith.constant 0 : index
    %c0_5 = arith.constant 0 : index
    %16 = vector.load %arg3[%c0_4, %c0_5] : memref<1x16xf32, #tpu.memory_space<vmem>>, vector<1x16xf32>
    %17 = vector.broadcast %16 : vector<1x16xf32> to vector<32x16xf32>
    %18 = arith.addf %15, %17 : vector<32x16xf32>
    %cst_6 = arith.constant 0.000000e+00 : f32
    %19 = vector.broadcast %cst_6 : f32 to vector<32x16xf32>
    %20 = arith.maximumf %18, %19 : vector<32x16xf32>
    %21 = arith.truncf %20 : vector<32x16xf32> to vector<32x16xbf16>
    %c0_7 = arith.constant 0 : index
    %c0_8 = arith.constant 0 : index
    %22 = vector.load %arg4[%c0_7, %c0_8] : memref<32x16xbf16, #tpu.memory_space<vmem>>, vector<32x16xbf16>
    tpu.vector_store %arg4[%c0_7, %c0_8], %21 {strides = array<i32>} : memref<32x16xbf16, #tpu.memory_space<vmem>>, vector<32x16xbf16>,
    return
  }
  func.func @transform_0(%arg0: i32) -> (i32, i32, i32) {
    %c0_i32 = arith.constant 0 : i32
    %c0_i32_0 = arith.constant 0 : i32
    %c0_i32_1 = arith.constant 0 : i32
    return %c0_i32, %arg0, %c0_i32_0 : i32, i32, i32
  }
  func.func @transform_1(%arg0: i32) -> (i32, i32) {
    %c0_i32 = arith.constant 0 : i32
    %c0_i32_0 = arith.constant 0 : i32
    %c0_i32_1 = arith.constant 0 : i32
    return %c0_i32, %c0_i32_0 : i32, i32
  }
  func.func @transform_2(%arg0: i32) -> (i32, i32) {
    %c0_i32 = arith.constant 0 : i32
    %c0_i32_0 = arith.constant 0 : i32
    %c0_i32_1 = arith.constant 0 : i32
    return %c0_i32, %c0_i32_0 : i32, i32
  }
  func.func @transform_3(%arg0: i32) -> (i32, i32) {
    %c0_i32 = arith.constant 0 : i32
    %c0_i32_0 = arith.constant 0 : i32
    return %arg0, %c0_i32 : i32, i32
  }
}

module attributes {stable_mosaic.version = 11 : i64} {
  func.func @_fc_chain_kernel(%arg0: i32, %arg1: memref<2x400xbf16, #tpu.memory_space<vmem>>, %arg2: memref<400x120xbf16, #tpu.memory_space<vmem>>, %arg3: memref<1x120xf32, #tpu.memory_space<vmem>>, %arg4: memref<120x84xbf16, #tpu.memory_space<vmem>>, %arg5: memref<1x84xf32, #tpu.memory_space<vmem>>, %arg6: memref<84x10xbf16, #tpu.memory_space<vmem>>, %arg7: memref<1x10xf32, #tpu.memory_space<vmem>>, %arg8: memref<2x10xf32, #tpu.memory_space<vmem>>) attributes {dimension_semantics = [#tpu.dimension_semantics<parallel>], iteration_bounds = array<i64: 1>, scalar_prefetch = 0 : i64, scratch_operands = 0 : i64, tpu.core_type = #tpu.core_type<tc>, window_params = [{transform_indices = @transform_0, window_bounds = array<i64: 2, 400>}, {pipeline_mode = #tpu.pipeline_mode<synchronous>, transform_indices = @transform_1, window_bounds = array<i64: 400, 120>}, {pipeline_mode = #tpu.pipeline_mode<synchronous>, transform_indices = @transform_2, window_bounds = array<i64: 1, 120>}, {pipeline_mode = #tpu.pipeline_mode<synchronous>, transform_indices = @transform_3, window_bounds = array<i64: 120, 84>}, {pipeline_mode = #tpu.pipeline_mode<synchronous>, transform_indices = @transform_4, window_bounds = array<i64: 1, 84>}, {pipeline_mode = #tpu.pipeline_mode<synchronous>, transform_indices = @transform_5, window_bounds = array<i64: 84, 10>}, {pipeline_mode = #tpu.pipeline_mode<synchronous>, transform_indices = @transform_6, window_bounds = array<i64: 1, 10>}, {transform_indices = @transform_7, window_bounds = array<i64: 2, 10>}]} {
    %c0 = arith.constant 0 : index
    %c0_0 = arith.constant 0 : index
    %0 = vector.load %arg1[%c0, %c0_0] : memref<2x400xbf16, #tpu.memory_space<vmem>>, vector<2x400xbf16>
    %c0_1 = arith.constant 0 : index
    %c0_2 = arith.constant 0 : index
    %1 = vector.load %arg2[%c0_1, %c0_2] : memref<400x120xbf16, #tpu.memory_space<vmem>>, vector<400x120xbf16>
    %cst = arith.constant dense<0.000000e+00> : vector<2x120xf32>
    %2 = tpu.matmul %0, %1, %cst {dimension_numbers = #tpu.dot_dimension_numbers<[1], [0], [0], [1], [0, 0, 1, 1], [], []>} : vector<2x400xbf16>, vector<400x120xbf16>, vector<2x120xf32> -> vector<2x120xf32>
    %c0_3 = arith.constant 0 : index
    %c0_4 = arith.constant 0 : index
    %3 = vector.load %arg3[%c0_3, %c0_4] : memref<1x120xf32, #tpu.memory_space<vmem>>, vector<1x120xf32>
    %4 = vector.broadcast %3 : vector<1x120xf32> to vector<2x120xf32>
    %5 = arith.addf %2, %4 : vector<2x120xf32>
    %cst_5 = arith.constant 0.000000e+00 : f32
    %6 = vector.broadcast %cst_5 : f32 to vector<2x120xf32>
    %7 = arith.maximumf %5, %6 : vector<2x120xf32>
    %8 = arith.truncf %7 : vector<2x120xf32> to vector<2x120xbf16>
    %c0_6 = arith.constant 0 : index
    %c0_7 = arith.constant 0 : index
    %9 = vector.load %arg4[%c0_6, %c0_7] : memref<120x84xbf16, #tpu.memory_space<vmem>>, vector<120x84xbf16>
    %cst_8 = arith.constant dense<0.000000e+00> : vector<2x84xf32>
    %10 = tpu.matmul %8, %9, %cst_8 {dimension_numbers = #tpu.dot_dimension_numbers<[1], [0], [0], [1], [0, 0, 1, 1], [], []>} : vector<2x120xbf16>, vector<120x84xbf16>, vector<2x84xf32> -> vector<2x84xf32>
    %c0_9 = arith.constant 0 : index
    %c0_10 = arith.constant 0 : index
    %11 = vector.load %arg5[%c0_9, %c0_10] : memref<1x84xf32, #tpu.memory_space<vmem>>, vector<1x84xf32>
    %12 = vector.broadcast %11 : vector<1x84xf32> to vector<2x84xf32>
    %13 = arith.addf %10, %12 : vector<2x84xf32>
    %cst_11 = arith.constant 0.000000e+00 : f32
    %14 = vector.broadcast %cst_11 : f32 to vector<2x84xf32>
    %15 = arith.maximumf %13, %14 : vector<2x84xf32>
    %16 = arith.truncf %15 : vector<2x84xf32> to vector<2x84xbf16>
    %c0_12 = arith.constant 0 : index
    %c0_13 = arith.constant 0 : index
    %17 = vector.load %arg6[%c0_12, %c0_13] : memref<84x10xbf16, #tpu.memory_space<vmem>>, vector<84x10xbf16>
    %cst_14 = arith.constant dense<0.000000e+00> : vector<2x10xf32>
    %18 = tpu.matmul %16, %17, %cst_14 {dimension_numbers = #tpu.dot_dimension_numbers<[1], [0], [0], [1], [0, 0, 1, 1], [], []>} : vector<2x84xbf16>, vector<84x10xbf16>, vector<2x10xf32> -> vector<2x10xf32>
    %c0_15 = arith.constant 0 : index
    %c0_16 = arith.constant 0 : index
    %19 = vector.load %arg7[%c0_15, %c0_16] : memref<1x10xf32, #tpu.memory_space<vmem>>, vector<1x10xf32>
    %20 = vector.broadcast %19 : vector<1x10xf32> to vector<2x10xf32>
    %21 = arith.addf %18, %20 : vector<2x10xf32>
    %c0_17 = arith.constant 0 : index
    %c0_18 = arith.constant 0 : index
    %22 = vector.load %arg8[%c0_17, %c0_18] : memref<2x10xf32, #tpu.memory_space<vmem>>, vector<2x10xf32>
    tpu.vector_store %arg8[%c0_17, %c0_18], %21 {strides = array<i32>} : memref<2x10xf32, #tpu.memory_space<vmem>>, vector<2x10xf32>,
    return
  }
  func.func @transform_0(%arg0: i32) -> (i32, i32) {
    %c0_i32 = arith.constant 0 : i32
    %c0_i32_0 = arith.constant 0 : i32
    return %arg0, %c0_i32 : i32, i32
  }
  func.func @transform_1(%arg0: i32) -> (i32, i32) {
    %c0_i32 = arith.constant 0 : i32
    %c0_i32_0 = arith.constant 0 : i32
    %c0_i32_1 = arith.constant 0 : i32
    return %c0_i32, %c0_i32_0 : i32, i32
  }
  func.func @transform_2(%arg0: i32) -> (i32, i32) {
    %c0_i32 = arith.constant 0 : i32
    %c0_i32_0 = arith.constant 0 : i32
    %c0_i32_1 = arith.constant 0 : i32
    return %c0_i32, %c0_i32_0 : i32, i32
  }
  func.func @transform_3(%arg0: i32) -> (i32, i32) {
    %c0_i32 = arith.constant 0 : i32
    %c0_i32_0 = arith.constant 0 : i32
    %c0_i32_1 = arith.constant 0 : i32
    return %c0_i32, %c0_i32_0 : i32, i32
  }
  func.func @transform_4(%arg0: i32) -> (i32, i32) {
    %c0_i32 = arith.constant 0 : i32
    %c0_i32_0 = arith.constant 0 : i32
    %c0_i32_1 = arith.constant 0 : i32
    return %c0_i32, %c0_i32_0 : i32, i32
  }
  func.func @transform_5(%arg0: i32) -> (i32, i32) {
    %c0_i32 = arith.constant 0 : i32
    %c0_i32_0 = arith.constant 0 : i32
    %c0_i32_1 = arith.constant 0 : i32
    return %c0_i32, %c0_i32_0 : i32, i32
  }
  func.func @transform_6(%arg0: i32) -> (i32, i32) {
    %c0_i32 = arith.constant 0 : i32
    %c0_i32_0 = arith.constant 0 : i32
    %c0_i32_1 = arith.constant 0 : i32
    return %c0_i32, %c0_i32_0 : i32, i32
  }
  func.func @transform_7(%arg0: i32) -> (i32, i32) {
    %c0_i32 = arith.constant 0 : i32
    %c0_i32_0 = arith.constant 0 : i32
    return %arg0, %c0_i32 : i32, i32
  }
}

</mosaic_0001>

<llo_original>
// kernel: net_forward.3
$region0: #{net_forward.3}
  #allocation0 [shape = 'u32[]', space=smem, size = 0x4, offset = 0x4, fixed_abs, tag = 'smem constant byte address 0x4 - core index']
  #allocation1 [shape = 'u32[144,128]{1,0:T(1,128)}', space=vmem, size = 0x12000, scoped, tag = 'internal scratch']
  %s0 = inlined_call_operand.vmem [shape: bf16[4,392,75], index: 0, kind: input, shape index: {}]
  %s1 = inlined_call_operand.vmem [shape: bf16[75,6], index: 1, kind: input, shape index: {}]
  %s2 = inlined_call_operand.vmem [shape: f32[1,6], index: 2, kind: input, shape index: {}]
  %s3 = inlined_call_operand.vmem [shape: bf16[392,6], index: 3, kind: output, shape index: {}]
  %s4 = sld [smem:[#allocation0]]
  $region151: #{net_forward.3} parent=0
    _
  %s6 = ssub.s32 1, %s4
  %s7 = scalar_select 0, %s6, %s4
  $region1: #{net_forward.3} parent=0
    #allocation2 [shape = 'u8[409600]{0}', space=vmem, size = 0x64000, scoped, tag = 'input window, operand 0']
    #allocation3 [shape = 'u8[102400]{0}', space=vmem, size = 0x19000, scoped, tag = 'output window, operand 0']
    loop: start=0, step=1, limit=4
    $region2: #{net_forward.3} parent=1 // loop_pre_header
      _
    $region3: #{net_forward.3} parent=1 // loop_header
      %s9 = sphi 0, %s13
      %p10 = scmp.ge.s32.totalorder %s9, 4
      %s19 = sphi 0, %s21
      %s22 = sphi 0, %s19
      %s23 = sphi 0, %s22
      %s39 = sphi 0, %s23
      %s43 = sphi 0, %s43
      %s45 = sphi 0, %s43
      %s46 = sphi 0, %s45
      %s60 = sphi 0, %s46
      %s64 = sphi 0, %s64
      %s66 = sphi 0, %s64
      %s67 = sphi 0, %s66
      %s81 = sphi 0, %s67
      %s87 = sphi 0, %s89
      %s90 = sphi 0, %s87
      %s91 = sphi 0, %s90
      %s107 = sphi 0, %s91
    $region4: #{net_forward.3} parent=1 // loop_header_branch
      %12 = sbr.rel (%p10) target = $region8
    $region5: #{net_forward.3} parent=1 // loop_body
      %s14 = ssub.s32 %s9, 1
      %s15 = ssub.s32 %s9, 2
      %s16 = sadd.s32 %s9, 1
      %s17 = ssub.s32 %s9, %s16
      %p18 = scmp.eq.s32.totalorder %s17, 0
      %s20 = sadd.s32 %s19, 1
      %s21 = scalar_select %p18, %s19, %s20
      %p24 = pneg %p18
      %p25 = scmp.eq.s32.totalorder %s9, 1
      %p26 = por %p24, %p25
      %p27 = scmp.ne.s32.totalorder %s19, %s22
      %p28 = scmp.eq.s32.totalorder %s9, 0
      %p29 = por %p27, %p28
      %p30 = scmp.ne.s32.totalorder %s19, %s22
      %p31 = scmp.eq.s32.totalorder %s14, 1
      %p32 = por %p30, %p31
      %p33 = scmp.ne.s32.totalorder %s22, %s23
      %p34 = scmp.eq.s32.totalorder %s14, 0
      %p35 = por %p33, %p34
      %p36 = scmp.ne.s32.totalorder %s22, %s23
      %p37 = scmp.eq.s32.totalorder %s15, 1
      %p38 = por %p36, %p37
      %p40 = scmp.ne.s32.totalorder %s23, %s39
      %p41 = scmp.eq.s32.totalorder %s15, 0
      %p42 = por %p40, %p41
      %s44 = sadd.s32 %s43, 1
      %p47 = scmp.eq.s32.totalorder %s9, 1
      %p48 = scmp.ne.s32.totalorder %s43, %s45
      %p49 = scmp.eq.s32.totalorder %s9, 0
      %p50 = por %p48, %p49
      %p51 = scmp.ne.s32.totalorder %s43, %s45
      %p52 = scmp.eq.s32.totalorder %s14, 1
      %p53 = por %p51, %p52
      %p54 = scmp.ne.s32.totalorder %s45, %s46
      %p55 = scmp.eq.s32.totalorder %s14, 0
      %p56 = por %p54, %p55
      %p57 = scmp.ne.s32.totalorder %s45, %s46
      %p58 = scmp.eq.s32.totalorder %s15, 1
      %p59 = por %p57, %p58
      %p61 = scmp.ne.s32.totalorder %s46, %s60
      %p62 = scmp.eq.s32.totalorder %s15, 0
      %p63 = por %p61, %p62
      %s65 = sadd.s32 %s64, 1
      %p68 = scmp.eq.s32.totalorder %s9, 1
      %p69 = scmp.ne.s32.totalorder %s64, %s66
      %p70 = scmp.eq.s32.totalorder %s9, 0
      %p71 = por %p69, %p70
      %p72 = scmp.ne.s32.totalorder %s64, %s66
      %p73 = scmp.eq.s32.totalorder %s14, 1
      %p74 = por %p72, %p73
      %p75 = scmp.ne.s32.totalorder %s66, %s67
      %p76 = scmp.eq.s32.totalorder %s14, 0
      %p77 = por %p75, %p76
      %p78 = scmp.ne.s32.totalorder %s66, %s67
      %p79 = scmp.eq.s32.totalorder %s15, 1
      %p80 = por %p78, %p79
      %p82 = scmp.ne.s32.totalorder %s67, %s81
      %p83 = scmp.eq.s32.totalorder %s15, 0
      %p84 = por %p82, %p83
      %s85 = ssub.s32 %s9, %s16
      %p86 = scmp.eq.s32.totalorder %s85, 0
      %s88 = sadd.s32 %s87, 1
      %s89 = scalar_select %p86, %s87, %s88
      %p92 = pneg %p86
      %p93 = scmp.eq.s32.totalorder %s9, 1
      %p94 = por %p92, %p93
      %p95 = scmp.ne.s32.totalorder %s87, %s90
      %p96 = scmp.eq.s32.totalorder %s9, 0
      %p97 = por %p95, %p96
      %p98 = scmp.ne.s32.totalorder %s87, %s90
      %p99 = scmp.eq.s32.totalorder %s14, 1
      %p100 = por %p98, %p99
      %p101 = scmp.ne.s32.totalorder %s90, %s91
      %p102 = scmp.eq.s32.totalorder %s14, 0
      %p103 = por %p101, %p102
      %p104 = scmp.ne.s32.totalorder %s90, %s91
      %p105 = scmp.eq.s32.totalorder %s15, 1
      %p106 = por %p104, %p105
      %p108 = scmp.ne.s32.totalorder %s91, %s107
      %p109 = scmp.eq.s32.totalorder %s15, 0
      %p110 = por %p108, %p109
      %p111 = scmp.le.s32.totalorder 1, %s9
      %p112 = scmp.lt.s32.totalorder %s9, 3
      %p113 = pnand %p111, %p112
      %p114 = pneg %p113
      // Predicated region
      $region9: #{net_forward.3} parent=5 // pred_check
        _
      $region10: #{net_forward.3} parent=5 // pred_check_branch
        %116 = sbr.rel (%p113) target = $region12
      $region11: #{net_forward.3} parent=5 // pred_region
        %s117 = ssub.s32 %s9, 1
        // Predicated region
        $region13: #{net_forward.3} parent=11 // pred_check
          %p118 = pneg %p56
        $region14: #{net_forward.3} parent=11 // pred_check_branch
          %120 = sbr.rel (%p118) target = $region16
        $region15: #{net_forward.3} parent=11 // pred_region
          _
        $region16: #{net_forward.3} parent=11 // pred_fallthru
          _
        // Predicated region
        $region17: #{net_forward.3} parent=11 // pred_check
          %p121 = pneg %p77
        $region18: #{net_forward.3} parent=11 // pred_check_branch
          %123 = sbr.rel (%p121) target = $region20
        $region19: #{net_forward.3} parent=11 // pred_region
          _
        $region20: #{net_forward.3} parent=11 // pred_fallthru
          _
      $region12: #{net_forward.3} parent=5 // pred_fallthru
        _
      %p124 = scmp.lt.s32.totalorder %s9, 2
      // Predicated region
      $region21: #{net_forward.3} parent=5 // pred_check
        %p125 = pneg %p124
      $region22: #{net_forward.3} parent=5 // pred_check_branch
        %127 = sbr.rel (%p125) target = $region24
      $region23: #{net_forward.3} parent=5 // pred_region
        // Predicated region
        $region25: #{net_forward.3} parent=23 // pred_check
          %p128 = pneg %p29
        $region26: #{net_forward.3} parent=23 // pred_check_branch
          %130 = sbr.rel (%p128) target = $region28
        $region27: #{net_forward.3} parent=23 // pred_region
          %s131 = sand.u32 %s19, 1
          %s132 = sand.u32 %s19, 1
          %s133 = smul.addr %s132, 400
          %s134 = scalar_lea.vmem [#allocation2], %s133
          %s135 = smul.u32 25, %s9
          %s136 = ssub.s32 49, %s135
          %p137 = scmp.lt.s32.totalorder %s136, 25
          %s138 = scalar_select %p137, %s136, 25
          %s139 = smul.u32 256, %s138
          %p140 = scmp.ne.s32.totalorder 0, %s139
          %s141 = smul.addr %s135, 4
          %s142 = scalar_lea.vmem %s0, %s141
          // Predicated region
          $region29: #{net_forward.3} parent=27 // pred_check
            %p143 = pneg %p140
          $region30: #{net_forward.3} parent=27 // pred_check_branch
            %145 = sbr.rel (%p143) target = $region32
          $region31: #{net_forward.3} parent=27 // pred_region
            // Predicated region
            $region33: #{net_forward.3} parent=31 // pred_check
              _
            $region34: #{net_forward.3} parent=31 // pred_check_branch
              %147 = sbr.rel target = $region36
            $region35: #{net_forward.3} parent=31 // pred_region
              // Predicated region
              $region55: #{net_forward.3} parent=35 // pred_check
                _
              $region56: #{net_forward.3} parent=35 // pred_check_branch
                %328 = sbr.rel (0) target = $region58
              $region57: #{net_forward.3} parent=35 // pred_region
                %s329 = sdiv.u32.pop %s138, 25
                %s330 = srem.u32.pop %s138, 25
                // While loop
                $region59: #{net_forward.3} parent=57 // loop_pre_header
                  _
                $region60: #{net_forward.3} parent=57 // loop_header
                  %s332 = sphi 0, %s334
                  %p333 = scmp.ge.s32.totalorder %s332, %s329
                  %s337 = sphi 0, %s342
                  %s338 = sphi %s142, %s345
                  %s339 = sphi %s134, %s346
                $region61: #{net_forward.3} parent=57 // loop_header_branch
                  %336 = sbr.rel (%p333) target = $region65
                $region62: #{net_forward.3} parent=57 // loop_body
                  %s340 = sadd.s32 1, %s337
                  %p341 = scmp.ge.s32.totalorder %s340, %s329
                  %s342 = scalar_select %p341, 0, %s340
                  %s343 = smul.u32 %s342, 100
                  %s344 = smul.u32 %s342, 100
                  %s345 = scalar_lea.vmem %s142, %s343
                  %s346 = scalar_lea.vmem %s134, %s344 [#allocation2]
                $region63: #{net_forward.3} parent=57 // loop_footer
                  %s334 = sadd.s32 %s332, 1
                $region64: #{net_forward.3} parent=57 // loop_footer_branch
                  %331 = sbr.rel target = $region60
                $region65: #{net_forward.3} parent=57 // loop_exit
                  _
                %s347 = sdiv.u32.pop %s138, 25
                %s348 = srem.u32.pop %s138, 25
                %s349 = smul.u32 %s347, 25
                %s350 = smul.u32 4, %s349
                %s351 = scalar_lea.vmem %s142, %s350
                %s352 = smul.u32 4, %s349
                %s353 = scalar_lea.vmem %s134, %s352 [#allocation2]
                // While loop
                $region66: #{net_forward.3} parent=57 // loop_pre_header
                  _
                $region67: #{net_forward.3} parent=57 // loop_header
                  %s355 = sphi 0, %s357
                  %p356 = scmp.ge.s32.totalorder %s355, %s348
                  %s360 = sphi 0, %s365
                  %s361 = sphi %s351, %s368
                  %s362 = sphi %s353, %s369
                $region68: #{net_forward.3} parent=57 // loop_header_branch
                  %359 = sbr.rel (%p356) target = $region72
                $region69: #{net_forward.3} parent=57 // loop_body
                  %s363 = sadd.s32 1, %s360
                  %p364 = scmp.ge.s32.totalorder %s363, %s348
                  %s365 = scalar_select %p364, 0, %s363
                  %s366 = smul.u32 %s365, 4
                  %s367 = smul.u32 %s365, 4
                  %s368 = scalar_lea.vmem %s351, %s366
                  %s369 = scalar_lea.vmem %s353, %s367 [#allocation2]
                $region70: #{net_forward.3} parent=57 // loop_footer
                  %s357 = sadd.s32 %s355, 1
                $region71: #{net_forward.3} parent=57 // loop_footer_branch
                  %354 = sbr.rel target = $region67
                $region72: #{net_forward.3} parent=57 // loop_exit
                  _
                %s371 = sshrl.u32 %s138, 4
                // While loop
                $region73: #{net_forward.3} parent=57 // loop_pre_header
                  _
                $region74: #{net_forward.3} parent=57 // loop_header
                  %s373 = sphi 0, %s375
                  %p374 = scmp.ge.s32.totalorder %s373, %s371
                  %s378 = sphi 0, %s511
                  %s379 = sphi %s142, %s514
                  %s380 = sphi %s134, %s515
                $region75: #{net_forward.3} parent=57 // loop_header_branch
                  %377 = sbr.rel (%p374) target = $region79
                $region76: #{net_forward.3} parent=57 // loop_body
                  %v381 = vld [vmem:[%s379] sm:$0xf]
                  %382 = vst [vmem:[%s380] sm:$0xf] %v381
                  %v383 = vld [vmem:[%s379 + $0x4] sm:$0xf]
                  %384 = vst [vmem:[%s380 + $0x4] sm:$0xf] %v383
                  %v385 = vld [vmem:[%s379 + $0x8] sm:$0xf]
                  %386 = vst [vmem:[%s380 + $0x8] sm:$0xf] %v385
                  %v387 = vld [vmem:[%s379 + $0xc] sm:$0xf]
                  %388 = vst [vmem:[%s380 + $0xc] sm:$0xf] %v387
                  %v389 = vld [vmem:[%s379 + $0x10] sm:$0xf]
                  %390 = vst [vmem:[%s380 + $0x10] sm:$0xf] %v389
                  %v391 = vld [vmem:[%s379 + $0x14] sm:$0xf]
                  %392 = vst [vmem:[%s380 + $0x14] sm:$0xf] %v391
                  %v393 = vld [vmem:[%s379 + $0x18] sm:$0xf]
                  %394 = vst [vmem:[%s380 + $0x18] sm:$0xf] %v393
                  %v395 = vld [vmem:[%s379 + $0x1c] sm:$0xf]
                  %396 = vst [vmem:[%s380 + $0x1c] sm:$0xf] %v395
                  %v397 = vld [vmem:[%s379 + $0x20] sm:$0xf]
                  %398 = vst [vmem:[%s380 + $0x20] sm:$0xf] %v397
                  %v399 = vld [vmem:[%s379 + $0x24] sm:$0xf]
                  %400 = vst [vmem:[%s380 + $0x24] sm:$0xf] %v399
                  %v401 = vld [vmem:[%s379 + $0x28] sm:$0xf]
                  %402 = vst [vmem:[%s380 + $0x28] sm:$0xf] %v401
                  %v403 = vld [vmem:[%s379 + $0x2c] sm:$0xf]
                  %404 = vst [vmem:[%s380 + $0x2c] sm:$0xf] %v403
                  %v405 = vld [vmem:[%s379 + $0x30] sm:$0xf]
                  %406 = vst [vmem:[%s380 + $0x30] sm:$0xf] %v405
                  %v407 = vld [vmem:[%s379 + $0x34] sm:$0xf]
                  %408 = vst [vmem:[%s380 + $0x34] sm:$0xf] %v407
                  %v409 = vld [vmem:[%s379 + $0x38] sm:$0xf]
                  %410 = vst [vmem:[%s380 + $0x38] sm:$0xf] %v409
                  %v411 = vld [vmem:[%s379 + $0x3c] sm:$0xf]
                  %412 = vst [vmem:[%s380 + $0x3c] sm:$0xf] %v411
                  %v413 = vld [vmem:[%s379 + $0xc4] sm:$0xf]
                  %414 = vst [vmem:[%s380 + $0x64] sm:$0xf] %v413
                  %v415 = vld [vmem:[%s379 + $0xc8] sm:$0xf]
                  %416 = vst [vmem:[%s380 + $0x68] sm:$0xf] %v415
                  %v417 = vld [vmem:[%s379 + $0xcc] sm:$0xf]
                  %418 = vst [vmem:[%s380 + $0x6c] sm:$0xf] %v417
                  %v419 = vld [vmem:[%s379 + $0xd0] sm:$0xf]
                  %420 = vst [vmem:[%s380 + $0x70] sm:$0xf] %v419
                  %v421 = vld [vmem:[%s379 + $0xd4] sm:$0xf]
                  %422 = vst [vmem:[%s380 + $0x74] sm:$0xf] %v421
                  %v423 = vld [vmem:[%s379 + $0xd8] sm:$0xf]
                  %424 = vst [vmem:[%s380 + $0x78] sm:$0xf] %v423
                  %v425 = vld [vmem:[%s379 + $0xdc] sm:$0xf]
                  %426 = vst [vmem:[%s380 + $0x7c] sm:$0xf] %v425
                  %v427 = vld [vmem:[%s379 + $0xe0] sm:$0xf]
                  %428 = vst [vmem:[%s380 + $0x80] sm:$0xf] %v427
                  %v429 = vld [vmem:[%s379 + $0xe4] sm:$0xf]
                  %430 = vst [vmem:[%s380 + $0x84] sm:$0xf] %v429
                  %v431 = vld [vmem:[%s379 + $0xe8] sm:$0xf]
                  %432 = vst [vmem:[%s380 + $0x88] sm:$0xf] %v431
                  %v433 = vld [vmem:[%s379 + $0xec] sm:$0xf]
                  %434 = vst [vmem:[%s380 + $0x8c] sm:$0xf] %v433
                  %v435 = vld [vmem:[%s379 + $0xf0] sm:$0xf]
                  %436 = vst [vmem:[%s380 + $0x90] sm:$0xf] %v435
                  %v437 = vld [vmem:[%s379 + $0xf4] sm:$0xf]
                  %438 = vst [vmem:[%s380 + $0x94] sm:$0xf] %v437
                  %v439 = vld [vmem:[%s379 + $0xf8] sm:$0xf]
                  %440 = vst [vmem:[%s380 + $0x98] sm:$0xf] %v439
                  %v441 = vld [vmem:[%s379 + $0xfc] sm:$0xf]
                  %442 = vst [vmem:[%s380 + $0x9c] sm:$0xf] %v441
                  %v443 = vld [vmem:[%s379 + $0x100] sm:$0xf]
                  %444 = vst [vmem:[%s380 + $0xa0] sm:$0xf] %v443
                  %v445 = vld [vmem:[%s379 + $0x188] sm:$0xf]
                  %446 = vst [vmem:[%s380 + $0xc8] sm:$0xf] %v445
                  %v447 = vld [vmem:[%s379 + $0x18c] sm:$0xf]
                  %448 = vst [vmem:[%s380 + $0xcc] sm:$0xf] %v447
                  %v449 = vld [vmem:[%s379 + $0x190] sm:$0xf]
                  %450 = vst [vmem:[%s380 + $0xd0] sm:$0xf] %v449
                  %v451 = vld [vmem:[%s379 + $0x194] sm:$0xf]
                  %452 = vst [vmem:[%s380 + $0xd4] sm:$0xf] %v451
                  %v453 = vld [vmem:[%s379 + $0x198] sm:$0xf]
                  %454 = vst [vmem:[%s380 + $0xd8] sm:$0xf] %v453
                  %v455 = vld [vmem:[%s379 + $0x19c] sm:$0xf]
                  %456 = vst [vmem:[%s380 + $0xdc] sm:$0xf] %v455
                  %v457 = vld [vmem:[%s379 + $0x1a0] sm:$0xf]
                  %458 = vst [vmem:[%s380 + $0xe0] sm:$0xf] %v457
                  %v459 = vld [vmem:[%s379 + $0x1a4] sm:$0xf]
                  %460 = vst [vmem:[%s380 + $0xe4] sm:$0xf] %v459
                  %v461 = vld [vmem:[%s379 + $0x1a8] sm:$0xf]
                  %462 = vst [vmem:[%s380 + $0xe8] sm:$0xf] %v461
                  %v463 = vld [vmem:[%s379 + $0x1ac] sm:$0xf]
                  %464 = vst [vmem:[%s380 + $0xec] sm:$0xf] %v463
                  %v465 = vld [vmem:[%s379 + $0x1b0] sm:$0xf]
                  %466 = vst [vmem:[%s380 + $0xf0] sm:$0xf] %v465
                  %v467 = vld [vmem:[%s379 + $0x1b4] sm:$0xf]
                  %468 = vst [vmem:[%s380 + $0xf4] sm:$0xf] %v467
                  %v469 = vld [vmem:[%s379 + $0x1b8] sm:$0xf]
                  %470 = vst [vmem:[%s380 + $0xf8] sm:$0xf] %v469
                  %v471 = vld [vmem:[%s379 + $0x1bc] sm:$0xf]
                  %472 = vst [vmem:[%s380 + $0xfc] sm:$0xf] %v471
                  %v473 = vld [vmem:[%s379 + $0x1c0] sm:$0xf]
                  %474 = vst [vmem:[%s380 + $0x100] sm:$0xf] %v473
                  %v475 = vld [vmem:[%s379 + $0x1c4] sm:$0xf]
                  %476 = vst [vmem:[%s380 + $0x104] sm:$0xf] %v475
                  %v477 = vld [vmem:[%s379 + $0x24c] sm:$0xf]
                  %478 = vst [vmem:[%s380 + $0x12c] sm:$0xf] %v477
                  %v479 = vld [vmem:[%s379 + $0x250] sm:$0xf]
                  %480 = vst [vmem:[%s380 + $0x130] sm:$0xf] %v479
                  %v481 = vld [vmem:[%s379 + $0x254] sm:$0xf]
                  %482 = vst [vmem:[%s380 + $0x134] sm:$0xf] %v481
                  %v483 = vld [vmem:[%s379 + $0x258] sm:$0xf]
                  %484 = vst [vmem:[%s380 + $0x138] sm:$0xf] %v483
                  %v485 = vld [vmem:[%s379 + $0x25c] sm:$0xf]
                  %486 = vst [vmem:[%s380 + $0x13c] sm:$0xf] %v485
                  %v487 = vld [vmem:[%s379 + $0x260] sm:$0xf]
                  %488 = vst [vmem:[%s380 + $0x140] sm:$0xf] %v487
                  %v489 = vld [vmem:[%s379 + $0x264] sm:$0xf]
                  %490 = vst [vmem:[%s380 + $0x144] sm:$0xf] %v489
                  %v491 = vld [vmem:[%s379 + $0x268] sm:$0xf]
                  %492 = vst [vmem:[%s380 + $0x148] sm:$0xf] %v491
                  %v493 = vld [vmem:[%s379 + $0x26c] sm:$0xf]
                  %494 = vst [vmem:[%s380 + $0x14c] sm:$0xf] %v493
                  %v495 = vld [vmem:[%s379 + $0x270] sm:$0xf]
                  %496 = vst [vmem:[%s380 + $0x150] sm:$0xf] %v495
                  %v497 = vld [vmem:[%s379 + $0x274] sm:$0xf]
                  %498 = vst [vmem:[%s380 + $0x154] sm:$0xf] %v497
                  %v499 = vld [vmem:[%s379 + $0x278] sm:$0xf]
                  %500 = vst [vmem:[%s380 + $0x158] sm:$0xf] %v499
                  %v501 = vld [vmem:[%s379 + $0x27c] sm:$0xf]
                  %502 = vst [vmem:[%s380 + $0x15c] sm:$0xf] %v501
                  %v503 = vld [vmem:[%s379 + $0x280] sm:$0xf]
                  %504 = vst [vmem:[%s380 + $0x160] sm:$0xf] %v503
                  %v505 = vld [vmem:[%s379 + $0x284] sm:$0xf]
                  %506 = vst [vmem:[%s380 + $0x164] sm:$0xf] %v505
                  %v507 = vld [vmem:[%s379 + $0x288] sm:$0xf]
                  %508 = vst [vmem:[%s380 + $0x168] sm:$0xf] %v507
                  %s509 = sadd.s32 1, %s378
                  %p510 = scmp.ge.s32.totalorder %s509, %s371
                  %s511 = scalar_select %p510, 0, %s509
                  %s512 = smul.u32 %s511, 64
                  %s513 = smul.u32 %s511, 64
                  %s514 = scalar_lea.vmem %s142, %s512
                  %s515 = scalar_lea.vmem %s134, %s513 [#allocation2]
                $region77: #{net_forward.3} parent=57 // loop_footer
                  %s375 = sadd.s32 %s373, 1
                $region78: #{net_forward.3} parent=57 // loop_footer_branch
                  %372 = sbr.rel target = $region74
                $region79: #{net_forward.3} parent=57 // loop_exit
                  _
                %s516 = sshrl.u32 %s138, 4
                %s517 = sand.u32 %s138, 15
                %s518 = smul.u32 %s516, 16
                %s519 = smul.u32 4, %s518
                %s520 = scalar_lea.vmem %s142, %s519
                %s521 = smul.u32 4, %s518
                %s522 = scalar_lea.vmem %s134, %s521 [#allocation2]
                // While loop
                $region80: #{net_forward.3} parent=57 // loop_pre_header
                  _
                $region81: #{net_forward.3} parent=57 // loop_header
                  %s524 = sphi 0, %s526
                  %p525 = scmp.ge.s32.totalorder %s524, %s517
                  %s529 = sphi 0, %s542
                  %s530 = sphi %s520, %s545
                  %s531 = sphi %s522, %s546
                $region82: #{net_forward.3} parent=57 // loop_header_branch
                  %528 = sbr.rel (%p525) target = $region86
                $region83: #{net_forward.3} parent=57 // loop_body
                  %v532 = vld [vmem:[%s530] sm:$0xf]
                  %533 = vst [vmem:[%s531] sm:$0xf] %v532
                  %v534 = vld [vmem:[%s530 + $0xc4] sm:$0xf]
                  %535 = vst [vmem:[%s531 + $0x64] sm:$0xf] %v534
                  %v536 = vld [vmem:[%s530 + $0x188] sm:$0xf]
                  %537 = vst [vmem:[%s531 + $0xc8] sm:$0xf] %v536
                  %v538 = vld [vmem:[%s530 + $0x24c] sm:$0xf]
                  %539 = vst [vmem:[%s531 + $0x12c] sm:$0xf] %v538
                  %s540 = sadd.s32 1, %s529
                  %p541 = scmp.ge.s32.totalorder %s540, %s517
                  %s542 = scalar_select %p541, 0, %s540
                  %s543 = smul.u32 %s542, 4
                  %s544 = smul.u32 %s542, 4
                  %s545 = scalar_lea.vmem %s520, %s543
                  %s546 = scalar_lea.vmem %s522, %s544 [#allocation2]
                $region84: #{net_forward.3} parent=57 // loop_footer
                  %s526 = sadd.s32 %s524, 1
                $region85: #{net_forward.3} parent=57 // loop_footer_branch
                  %523 = sbr.rel target = $region81
                $region86: #{net_forward.3} parent=57 // loop_exit
                  _
              $region58: #{net_forward.3} parent=35 // pred_fallthru
                _
            $region36: #{net_forward.3} parent=31 // pred_fallthru
              _
            // Predicated region
            $region37: #{net_forward.3} parent=31 // pred_check
              _
            $region38: #{net_forward.3} parent=31 // pred_check_branch
              %149 = sbr.rel (0) target = $region40
            $region39: #{net_forward.3} parent=31 // pred_region
              %s151 = sshrl.u32 %s138, 4
              // While loop
              $region41: #{net_forward.3} parent=39 // loop_pre_header
                _
              $region42: #{net_forward.3} parent=39 // loop_header
                %s153 = sphi 0, %s155
                %p154 = scmp.ge.s32.totalorder %s153, %s151
                %s158 = sphi 0, %s291
                %s159 = sphi %s142, %s294
                %s160 = sphi %s134, %s295
              $region43: #{net_forward.3} parent=39 // loop_header_branch
                %157 = sbr.rel (%p154) target = $region47
              $region44: #{net_forward.3} parent=39 // loop_body
                %v161 = vld [vmem:[%s159] sm:$0xf]
                %162 = vst [vmem:[%s160] sm:$0xf] %v161
                %v163 = vld [vmem:[%s159 + $0x4] sm:$0xf]
                %164 = vst [vmem:[%s160 + $0x4] sm:$0xf] %v163
                %v165 = vld [vmem:[%s159 + $0x8] sm:$0xf]
                %166 = vst [vmem:[%s160 + $0x8] sm:$0xf] %v165
                %v167 = vld [vmem:[%s159 + $0xc] sm:$0xf]
                %168 = vst [vmem:[%s160 + $0xc] sm:$0xf] %v167
                %v169 = vld [vmem:[%s159 + $0x10] sm:$0xf]
                %170 = vst [vmem:[%s160 + $0x10] sm:$0xf] %v169
                %v171 = vld [vmem:[%s159 + $0x14] sm:$0xf]
                %172 = vst [vmem:[%s160 + $0x14] sm:$0xf] %v171
                %v173 = vld [vmem:[%s159 + $0x18] sm:$0xf]
                %174 = vst [vmem:[%s160 + $0x18] sm:$0xf] %v173
                %v175 = vld [vmem:[%s159 + $0x1c] sm:$0xf]
                %176 = vst [vmem:[%s160 + $0x1c] sm:$0xf] %v175
                %v177 = vld [vmem:[%s159 + $0x20] sm:$0xf]
                %178 = vst [vmem:[%s160 + $0x20] sm:$0xf] %v177
                %v179 = vld [vmem:[%s159 + $0x24] sm:$0xf]
                %180 = vst [vmem:[%s160 + $0x24] sm:$0xf] %v179
                %v181 = vld [vmem:[%s159 + $0x28] sm:$0xf]
                %182 = vst [vmem:[%s160 + $0x28] sm:$0xf] %v181
                %v183 = vld [vmem:[%s159 + $0x2c] sm:$0xf]
                %184 = vst [vmem:[%s160 + $0x2c] sm:$0xf] %v183
                %v185 = vld [vmem:[%s159 + $0x30] sm:$0xf]
                %186 = vst [vmem:[%s160 + $0x30] sm:$0xf] %v185
                %v187 = vld [vmem:[%s159 + $0x34] sm:$0xf]
                %188 = vst [vmem:[%s160 + $0x34] sm:$0xf] %v187
                %v189 = vld [vmem:[%s159 + $0x38] sm:$0xf]
                %190 = vst [vmem:[%s160 + $0x38] sm:$0xf] %v189
                %v191 = vld [vmem:[%s159 + $0x3c] sm:$0xf]
                %192 = vst [vmem:[%s160 + $0x3c] sm:$0xf] %v191
                %v193 = vld [vmem:[%s159 + $0xc4] sm:$0xf]
                %194 = vst [vmem:[%s160 + $0x64] sm:$0xf] %v193
                %v195 = vld [vmem:[%s159 + $0xc8] sm:$0xf]
                %196 = vst [vmem:[%s160 + $0x68] sm:$0xf] %v195
                %v197 = vld [vmem:[%s159 + $0xcc] sm:$0xf]
                %198 = vst [vmem:[%s160 + $0x6c] sm:$0xf] %v197
                %v199 = vld [vmem:[%s159 + $0xd0] sm:$0xf]
                %200 = vst [vmem:[%s160 + $0x70] sm:$0xf] %v199
                %v201 = vld [vmem:[%s159 + $0xd4] sm:$0xf]
                %202 = vst [vmem:[%s160 + $0x74] sm:$0xf] %v201
                %v203 = vld [vmem:[%s159 + $0xd8] sm:$0xf]
                %204 = vst [vmem:[%s160 + $0x78] sm:$0xf] %v203
                %v205 = vld [vmem:[%s159 + $0xdc] sm:$0xf]
                %206 = vst [vmem:[%s160 + $0x7c] sm:$0xf] %v205
                %v207 = vld [vmem:[%s159 + $0xe0] sm:$0xf]
                %208 = vst [vmem:[%s160 + $0x80] sm:$0xf] %v207
                %v209 = vld [vmem:[%s159 + $0xe4] sm:$0xf]
                %210 = vst [vmem:[%s160 + $0x84] sm:$0xf] %v209
                %v211 = vld [vmem:[%s159 + $0xe8] sm:$0xf]
                %212 = vst [vmem:[%s160 + $0x88] sm:$0xf] %v211
                %v213 = vld [vmem:[%s159 + $0xec] sm:$0xf]
                %214 = vst [vmem:[%s160 + $0x8c] sm:$0xf] %v213
                %v215 = vld [vmem:[%s159 + $0xf0] sm:$0xf]
                %216 = vst [vmem:[%s160 + $0x90] sm:$0xf] %v215
                %v217 = vld [vmem:[%s159 + $0xf4] sm:$0xf]
                %218 = vst [vmem:[%s160 + $0x94] sm:$0xf] %v217
                %v219 = vld [vmem:[%s159 + $0xf8] sm:$0xf]
                %220 = vst [vmem:[%s160 + $0x98] sm:$0xf] %v219
                %v221 = vld [vmem:[%s159 + $0xfc] sm:$0xf]
                %222 = vst [vmem:[%s160 + $0x9c] sm:$0xf] %v221
                %v223 = vld [vmem:[%s159 + $0x100] sm:$0xf]
                %224 = vst [vmem:[%s160 + $0xa0] sm:$0xf] %v223
                %v225 = vld [vmem:[%s159 + $0x188] sm:$0xf]
                %226 = vst [vmem:[%s160 + $0xc8] sm:$0xf] %v225
                %v227 = vld [vmem:[%s159 + $0x18c] sm:$0xf]
                %228 = vst [vmem:[%s160 + $0xcc] sm:$0xf] %v227
                %v229 = vld [vmem:[%s159 + $0x190] sm:$0xf]
                %230 = vst [vmem:[%s160 + $0xd0] sm:$0xf] %v229
                %v231 = vld [vmem:[%s159 + $0x194] sm:$0xf]
                %232 = vst [vmem:[%s160 + $0xd4] sm:$0xf] %v231
                %v233 = vld [vmem:[%s159 + $0x198] sm:$0xf]
                %234 = vst [vmem:[%s160 + $0xd8] sm:$0xf] %v233
                %v235 = vld [vmem:[%s159 + $0x19c] sm:$0xf]
                %236 = vst [vmem:[%s160 + $0xdc] sm:$0xf] %v235
                %v237 = vld [vmem:[%s159 + $0x1a0] sm:$0xf]
                %238 = vst [vmem:[%s160 + $0xe0] sm:$0xf] %v237
                %v239 = vld [vmem:[%s159 + $0x1a4] sm:$0xf]
                %240 = vst [vmem:[%s160 + $0xe4] sm:$0xf] %v239
                %v241 = vld [vmem:[%s159 + $0x1a8] sm:$0xf]
                %242 = vst [vmem:[%s160 + $0xe8] sm:$0xf] %v241
                %v243 = vld [vmem:[%s159 + $0x1ac] sm:$0xf]
                %244 = vst [vmem:[%s160 + $0xec] sm:$0xf] %v243
                %v245 = vld [vmem:[%s159 + $0x1b0] sm:$0xf]
                %246 = vst [vmem:[%s160 + $0xf0] sm:$0xf] %v245
                %v247 = vld [vmem:[%s159 + $0x1b4] sm:$0xf]
                %248 = vst [vmem:[%s160 + $0xf4] sm:$0xf] %v247
                %v249 = vld [vmem:[%s159 + $0x1b8] sm:$0xf]
                %250 = vst [vmem:[%s160 + $0xf8] sm:$0xf] %v249
                %v251 = vld [vmem:[%s159 + $0x1bc] sm:$0xf]
                %252 = vst [vmem:[%s160 + $0xfc] sm:$0xf] %v251
                %v253 = vld [vmem:[%s159 + $0x1c0] sm:$0xf]
                %254 = vst [vmem:[%s160 + $0x100] sm:$0xf] %v253
                %v255 = vld [vmem:[%s159 + $0x1c4] sm:$0xf]
                %256 = vst [vmem:[%s160 + $0x104] sm:$0xf] %v255
                %v257 = vld [vmem:[%s159 + $0x24c] sm:$0xf]
                %258 = vst [vmem:[%s160 + $0x12c] sm:$0xf] %v257
                %v259 = vld [vmem:[%s159 + $0x250] sm:$0xf]
                %260 = vst [vmem:[%s160 + $0x130] sm:$0xf] %v259
                %v261 = vld [vmem:[%s159 + $0x254] sm:$0xf]
                %262 = vst [vmem:[%s160 + $0x134] sm:$0xf] %v261
                %v263 = vld [vmem:[%s159 + $0x258] sm:$0xf]
                %264 = vst [vmem:[%s160 + $0x138] sm:$0xf] %v263
                %v265 = vld [vmem:[%s159 + $0x25c] sm:$0xf]
                %266 = vst [vmem:[%s160 + $0x13c] sm:$0xf] %v265
                %v267 = vld [vmem:[%s159 + $0x260] sm:$0xf]
                %268 = vst [vmem:[%s160 + $0x140] sm:$0xf] %v267
                %v269 = vld [vmem:[%s159 + $0x264] sm:$0xf]
                %270 = vst [vmem:[%s160 + $0x144] sm:$0xf] %v269
                %v271 = vld [vmem:[%s159 + $0x268] sm:$0xf]
                %272 = vst [vmem:[%s160 + $0x148] sm:$0xf] %v271
                %v273 = vld [vmem:[%s159 + $0x26c] sm:$0xf]
                %274 = vst [vmem:[%s160 + $0x14c] sm:$0xf] %v273
                %v275 = vld [vmem:[%s159 + $0x270] sm:$0xf]
                %276 = vst [vmem:[%s160 + $0x150] sm:$0xf] %v275
                %v277 = vld [vmem:[%s159 + $0x274] sm:$0xf]
                %278 = vst [vmem:[%s160 + $0x154] sm:$0xf] %v277
                %v279 = vld [vmem:[%s159 + $0x278] sm:$0xf]
                %280 = vst [vmem:[%s160 + $0x158] sm:$0xf] %v279
                %v281 = vld [vmem:[%s159 + $0x27c] sm:$0xf]
                %282 = vst [vmem:[%s160 + $0x15c] sm:$0xf] %v281
                %v283 = vld [vmem:[%s159 + $0x280] sm:$0xf]
                %284 = vst [vmem:[%s160 + $0x160] sm:$0xf] %v283
                %v285 = vld [vmem:[%s159 + $0x284] sm:$0xf]
                %286 = vst [vmem:[%s160 + $0x164] sm:$0xf] %v285
                %v287 = vld [vmem:[%s159 + $0x288] sm:$0xf]
                %288 = vst [vmem:[%s160 + $0x168] sm:$0xf] %v287
                %s289 = sadd.s32 1, %s158
                %p290 = scmp.ge.s32.totalorder %s289, %s151
                %s291 = scalar_select %p290, 0, %s289
                %s292 = smul.u32 %s291, 64
                %s293 = smul.u32 %s291, 64
                %s294 = scalar_lea.vmem %s142, %s292
                %s295 = scalar_lea.vmem %s134, %s293 [#allocation2]
              $region45: #{net_forward.3} parent=39 // loop_footer
                %s155 = sadd.s32 %s153, 1
              $region46: #{net_forward.3} parent=39 // loop_footer_branch
                %152 = sbr.rel target = $region42
              $region47: #{net_forward.3} parent=39 // loop_exit
                _
              %s296 = sshrl.u32 %s138, 4
              %s297 = sand.u32 %s138, 15
              %s298 = smul.u32 %s296, 16
              %s299 = smul.u32 4, %s298
              %s300 = scalar_lea.vmem %s142, %s299
              %s301 = smul.u32 4, %s298
              %s302 = scalar_lea.vmem %s134, %s301 [#allocation2]
              // While loop
              $region48: #{net_forward.3} parent=39 // loop_pre_header
                _
              $region49: #{net_forward.3} parent=39 // loop_header
                %s304 = sphi 0, %s306
                %p305 = scmp.ge.s32.totalorder %s304, %s297
                %s309 = sphi 0, %s322
                %s310 = sphi %s300, %s325
                %s311 = sphi %s302, %s326
              $region50: #{net_forward.3} parent=39 // loop_header_branch
                %308 = sbr.rel (%p305) target = $region54
              $region51: #{net_forward.3} parent=39 // loop_body
                %v312 = vld [vmem:[%s310] sm:$0xf]
                %313 = vst [vmem:[%s311] sm:$0xf] %v312
                %v314 = vld [vmem:[%s310 + $0xc4] sm:$0xf]
                %315 = vst [vmem:[%s311 + $0x64] sm:$0xf] %v314
                %v316 = vld [vmem:[%s310 + $0x188] sm:$0xf]
                %317 = vst [vmem:[%s311 + $0xc8] sm:$0xf] %v316
                %v318 = vld [vmem:[%s310 + $0x24c] sm:$0xf]
                %319 = vst [vmem:[%s311 + $0x12c] sm:$0xf] %v318
                %s320 = sadd.s32 1, %s309
                %p321 = scmp.ge.s32.totalorder %s320, %s297
                %s322 = scalar_select %p321, 0, %s320
                %s323 = smul.u32 %s322, 4
                %s324 = smul.u32 %s322, 4
                %s325 = scalar_lea.vmem %s300, %s323
                %s326 = scalar_lea.vmem %s302, %s324 [#allocation2]
              $region52: #{net_forward.3} parent=39 // loop_footer
                %s306 = sadd.s32 %s304, 1
              $region53: #{net_forward.3} parent=39 // loop_footer_branch
                %303 = sbr.rel target = $region49
              $region54: #{net_forward.3} parent=39 // loop_exit
                _
            $region40: #{net_forward.3} parent=31 // pred_fallthru
              _
          $region32: #{net_forward.3} parent=27 // pred_fallthru
            _
          %547 = vnop
        $region28: #{net_forward.3} parent=23 // pred_fallthru
          _
      $region24: #{net_forward.3} parent=5 // pred_fallthru
        _
      %p548 = scmp.le.s32.totalorder 1, %s9
      %p549 = scmp.lt.s32.totalorder %s9, 3
      %p550 = pnand %p548, %p549
      %p551 = pneg %p550
      // Predicated region
      $region87: #{net_forward.3} parent=5 // pred_check
        _
      $region88: #{net_forward.3} parent=5 // pred_check_branch
        %553 = sbr.rel (%p550) target = $region90
      $region89: #{net_forward.3} parent=5 // pred_region
        %s554 = ssub.s32 %s9, 1
        %s555 = sand.u32 %s22, 1
        %s556 = sand.u32 %s22, 1
        %s557 = smul.addr %s556, 400
        %s558 = scalar_lea.vmem [#allocation2], %s557
        // Predicated region
        $region91: #{net_forward.3} parent=89 // pred_check
          %p559 = pneg %p35
        $region92: #{net_forward.3} parent=89 // pred_check_branch
          %561 = sbr.rel (%p559) target = $region94
        $region93: #{net_forward.3} parent=89 // pred_region
          _
        $region94: #{net_forward.3} parent=89 // pred_fallthru
          _
        %s562 = sand.u32 %s22, 1
        %s563 = sand.u32 %s22, 1
        %s564 = smul.addr %s563, 400
        %s565 = scalar_lea.vmem [#allocation2], %s564
        %p566 = pneg %p35
        %p567 = pneg %p32
        %p568 = pneg %p56
        %p569 = pneg %p53
        %p570 = pneg %p77
        %p571 = pneg %p74
        %p572 = pneg %p103
        %p573 = pneg %p100
        %s574 = sand.u32 %s90, 1
        %s575 = sand.u32 %s90, 1
        %s576 = smul.addr %s575, 100
        %s577 = scalar_lea.vmem [#allocation3], %s576
        %s578 = smul.u32 25, %s14
        %s579 = ssub.s32 49, %s578
        %p580 = scmp.lt.s32.totalorder %s579, 25
        %s581 = scalar_select %p580, %s579, 25
        %s582 = smul.u32 256, %s581
        %s583 = smul.u32 25, %s14
        %s584 = ssub.s32 49, %s583
        %p585 = scmp.lt.s32.totalorder %s584, 25
        %s586 = scalar_select %p585, %s584, 25
        %s587 = smul.u32 64, %s586
        %v589 = vld [vmem:[%s1] sm:$0xf]
        %v590 = vld [vmem:[%s1 + $0x4] sm:$0xf]
        %v591 = vld [vmem:[%s1 + $0x8] sm:$0xf]
        %v592 = vld [vmem:[%s1 + $0xc] sm:$0xf]
        %v593 = vld [vmem:[%s1 + $0x10] sm:$0xf]
        %v594 = vld [vmem:[%s1 + $0x14] sm:$0xf]
        %v595 = vld [vmem:[%s1 + $0x18] sm:$0xf]
        %v596 = vld [vmem:[%s1 + $0x1c] sm:$0xf]
        %v597 = vld [vmem:[%s1 + $0x20] sm:$0xf]
        %v598 = vld [vmem:[%s1 + $0x24] sm:$0x3]
        %v599 = vld [vmem:[%s558] sm:$0xf]
        %v600 = vld [vmem:[%s558 + $0x4] sm:$0xf]
        %v601 = vld [vmem:[%s558 + $0x8] sm:$0xf]
        %v602 = vld [vmem:[%s558 + $0xc] sm:$0xf]
        %v603 = vld [vmem:[%s558 + $0x10] sm:$0xf]
        %v604 = vld [vmem:[%s558 + $0x14] sm:$0xf]
        %v605 = vld [vmem:[%s558 + $0x18] sm:$0xf]
        %v606 = vld [vmem:[%s558 + $0x1c] sm:$0xf]
        %v607 = vld [vmem:[%s558 + $0x20] sm:$0xf]
        %v608 = vld [vmem:[%s558 + $0x24] sm:$0xf]
        %v609 = vld [vmem:[%s558 + $0x28] sm:$0xf]
        %v610 = vld [vmem:[%s558 + $0x2c] sm:$0xf]
        %v611 = vld [vmem:[%s558 + $0x30] sm:$0xf]
        %v612 = vld [vmem:[%s558 + $0x34] sm:$0xf]
        %v613 = vld [vmem:[%s558 + $0x38] sm:$0xf]
        %v614 = vld [vmem:[%s558 + $0x3c] sm:$0xf]
        %v615 = vld [vmem:[%s558 + $0x40] sm:$0xf]
        %v616 = vld [vmem:[%s558 + $0x44] sm:$0xf]
        %v617 = vld [vmem:[%s558 + $0x48] sm:$0xf]
        %v618 = vld [vmem:[%s558 + $0x4c] sm:$0xf]
        %v619 = vld [vmem:[%s558 + $0x50] sm:$0xf]
        %v620 = vld [vmem:[%s558 + $0x54] sm:$0xf]
        %v621 = vld [vmem:[%s558 + $0x58] sm:$0xf]
        %v622 = vld [vmem:[%s558 + $0x5c] sm:$0xf]
        %v623 = vld [vmem:[%s558 + $0x60] sm:$0xf]
        %v624 = vld [vmem:[%s558 + $0x64] sm:$0xf]
        %v625 = vld [vmem:[%s558 + $0x68] sm:$0xf]
        %v626 = vld [vmem:[%s558 + $0x6c] sm:$0xf]
        %v627 = vld [vmem:[%s558 + $0x70] sm:$0xf]
        %v628 = vld [vmem:[%s558 + $0x74] sm:$0xf]
        %v629 = vld [vmem:[%s558 + $0x78] sm:$0xf]
        %v630 = vld [vmem:[%s558 + $0x7c] sm:$0xf]
        %v631 = vld [vmem:[%s558 + $0x80] sm:$0xf]
        %v632 = vld [vmem:[%s558 + $0x84] sm:$0xf]
        %v633 = vld [vmem:[%s558 + $0x88] sm:$0xf]
        %v634 = vld [vmem:[%s558 + $0x8c] sm:$0xf]
        %v635 = vld [vmem:[%s558 + $0x90] sm:$0xf]
        %v636 = vld [vmem:[%s558 + $0x94] sm:$0xf]
        %v637 = vld [vmem:[%s558 + $0x98] sm:$0xf]
        %v638 = vld [vmem:[%s558 + $0x9c] sm:$0xf]
        %v639 = vld [vmem:[%s558 + $0xa0] sm:$0xf]
        %v640 = vld [vmem:[%s558 + $0xa4] sm:$0xf]
        %v641 = vld [vmem:[%s558 + $0xa8] sm:$0xf]
        %v642 = vld [vmem:[%s558 + $0xac] sm:$0xf]
        %v643 = vld [vmem:[%s558 + $0xb0] sm:$0xf]
        %v644 = vld [vmem:[%s558 + $0xb4] sm:$0xf]
        %v645 = vld [vmem:[%s558 + $0xb8] sm:$0xf]
        %v646 = vld [vmem:[%s558 + $0xbc] sm:$0xf]
        %v647 = vld [vmem:[%s558 + $0xc0] sm:$0xf]
        %v648 = vld [vmem:[%s558 + $0xc4] sm:$0xf]
        %v649 = vld [vmem:[%s558 + $0xc8] sm:$0xf]
        %v650 = vld [vmem:[%s558 + $0xcc] sm:$0xf]
        %v651 = vld [vmem:[%s558 + $0xd0] sm:$0xf]
        %v652 = vld [vmem:[%s558 + $0xd4] sm:$0xf]
        %v653 = vld [vmem:[%s558 + $0xd8] sm:$0xf]
        %v654 = vld [vmem:[%s558 + $0xdc] sm:$0xf]
        %v655 = vld [vmem:[%s558 + $0xe0] sm:$0xf]
        %v656 = vld [vmem:[%s558 + $0xe4] sm:$0xf]
        %v657 = vld [vmem:[%s558 + $0xe8] sm:$0xf]
        %v658 = vld [vmem:[%s558 + $0xec] sm:$0xf]
        %v659 = vld [vmem:[%s558 + $0xf0] sm:$0xf]
        %v660 = vld [vmem:[%s558 + $0xf4] sm:$0xf]
        %v661 = vld [vmem:[%s558 + $0xf8] sm:$0xf]
        %v662 = vld [vmem:[%s558 + $0xfc] sm:$0xf]
        %v663 = vld [vmem:[%s558 + $0x100] sm:$0xf]
        %v664 = vld [vmem:[%s558 + $0x104] sm:$0xf]
        %v665 = vld [vmem:[%s558 + $0x108] sm:$0xf]
        %v666 = vld [vmem:[%s558 + $0x10c] sm:$0xf]
        %v667 = vld [vmem:[%s558 + $0x110] sm:$0xf]
        %v668 = vld [vmem:[%s558 + $0x114] sm:$0xf]
        %v669 = vld [vmem:[%s558 + $0x118] sm:$0xf]
        %v670 = vld [vmem:[%s558 + $0x11c] sm:$0xf]
        %v671 = vld [vmem:[%s558 + $0x120] sm:$0xf]
        %v672 = vld [vmem:[%s558 + $0x124] sm:$0xf]
        %v673 = vld [vmem:[%s558 + $0x128] sm:$0xf]
        %v674 = vld [vmem:[%s558 + $0x12c] sm:$0xf]
        %v675 = vld [vmem:[%s558 + $0x130] sm:$0xf]
        %v676 = vld [vmem:[%s558 + $0x134] sm:$0xf]
        %v677 = vld [vmem:[%s558 + $0x138] sm:$0xf]
        %v678 = vld [vmem:[%s558 + $0x13c] sm:$0xf]
        %v679 = vld [vmem:[%s558 + $0x140] sm:$0xf]
        %v680 = vld [vmem:[%s558 + $0x144] sm:$0xf]
        %v681 = vld [vmem:[%s558 + $0x148] sm:$0xf]
        %v682 = vld [vmem:[%s558 + $0x14c] sm:$0xf]
        %v683 = vld [vmem:[%s558 + $0x150] sm:$0xf]
        %v684 = vld [vmem:[%s558 + $0x154] sm:$0xf]
        %v685 = vld [vmem:[%s558 + $0x158] sm:$0xf]
        %v686 = vld [vmem:[%s558 + $0x15c] sm:$0xf]
        %v687 = vld [vmem:[%s558 + $0x160] sm:$0xf]
        %v688 = vld [vmem:[%s558 + $0x164] sm:$0xf]
        %v689 = vld [vmem:[%s558 + $0x168] sm:$0xf]
        %v690 = vld [vmem:[%s558 + $0x16c] sm:$0xf]
        %v691 = vld [vmem:[%s558 + $0x170] sm:$0xf]
        %v692 = vld [vmem:[%s558 + $0x174] sm:$0xf]
        %v693 = vld [vmem:[%s558 + $0x178] sm:$0xf]
        %v694 = vld [vmem:[%s558 + $0x17c] sm:$0xf]
        %v695 = vld [vmem:[%s558 + $0x180] sm:$0xf]
        %v696 = vld [vmem:[%s558 + $0x184] sm:$0xf]
        %v697 = vld [vmem:[%s558 + $0x188] sm:$0xf]
        %v698 = vld [vmem:[%s558 + $0x18c] sm:$0xf]
        %v799 = vunpack.c.l.b16 %v599
        %v800 = vunpack.c.l.b16 %v600
        %v801 = vunpack.c.l.b16 %v601
        %v802 = vunpack.c.l.b16 %v602
        %v803 = vunpack.c.l.b16 %v603
        %v804 = vunpack.c.l.b16 %v604
        %v805 = vunpack.c.l.b16 %v605
        %v806 = vunpack.c.l.b16 %v606
        %v807 = vunpack.c.l.b16 %v607
        %v808 = vunpack.c.l.b16 %v608
        %v809 = vunpack.c.l.b16 %v609
        %v810 = vunpack.c.l.b16 %v610
        %v811 = vunpack.c.l.b16 %v611
        %v812 = vunpack.c.l.b16 %v612
        %v813 = vunpack.c.l.b16 %v613
        %v814 = vunpack.c.l.b16 %v614
        %v815 = vunpack.c.l.b16 %v615
        %v816 = vunpack.c.l.b16 %v616
        %v817 = vunpack.c.l.b16 %v617
        %v818 = vunpack.c.l.b16 %v618
        %v819 = vunpack.c.l.b16 %v619
        %v820 = vunpack.c.l.b16 %v620
        %v821 = vunpack.c.l.b16 %v621
        %v822 = vunpack.c.l.b16 %v622
        %v823 = vunpack.c.l.b16 %v623
        %v824 = vunpack.c.l.b16 %v624
        %v825 = vunpack.c.l.b16 %v625
        %v826 = vunpack.c.l.b16 %v626
        %v827 = vunpack.c.l.b16 %v627
        %v828 = vunpack.c.l.b16 %v628
        %v829 = vunpack.c.l.b16 %v629
        %v830 = vunpack.c.l.b16 %v630
        %v831 = vunpack.c.l.b16 %v631
        %v832 = vunpack.c.l.b16 %v632
        %v833 = vunpack.c.l.b16 %v633
        %v834 = vunpack.c.l.b16 %v634
        %v835 = vunpack.c.l.b16 %v635
        %v836 = vunpack.c.l.b16 %v636
        %v837 = vunpack.c.l.b16 %v637
        %v838 = vunpack.c.l.b16 %v638
        %v839 = vunpack.c.l.b16 %v639
        %v840 = vunpack.c.l.b16 %v640
        %v841 = vunpack.c.l.b16 %v641
        %v842 = vunpack.c.l.b16 %v642
        %v843 = vunpack.c.l.b16 %v643
        %v844 = vunpack.c.l.b16 %v644
        %v845 = vunpack.c.l.b16 %v645
        %v846 = vunpack.c.l.b16 %v646
        %v847 = vunpack.c.l.b16 %v647
        %v848 = vunpack.c.l.b16 %v648
        %v849 = vunpack.c.l.b16 %v649
        %v850 = vunpack.c.l.b16 %v650
        %v851 = vunpack.c.l.b16 %v651
        %v852 = vunpack.c.l.b16 %v652
        %v853 = vunpack.c.l.b16 %v653
        %v854 = vunpack.c.l.b16 %v654
        %v855 = vunpack.c.l.b16 %v655
        %v856 = vunpack.c.l.b16 %v656
        %v857 = vunpack.c.l.b16 %v657
        %v858 = vunpack.c.l.b16 %v658
        %v859 = vunpack.c.l.b16 %v659
        %v860 = vunpack.c.l.b16 %v660
        %v861 = vunpack.c.l.b16 %v661
        %v862 = vunpack.c.l.b16 %v662
        %v863 = vunpack.c.l.b16 %v663
        %v864 = vunpack.c.l.b16 %v664
        %v865 = vunpack.c.l.b16 %v665
        %v866 = vunpack.c.l.b16 %v666
        %v867 = vunpack.c.l.b16 %v667
        %v868 = vunpack.c.l.b16 %v668
        %v869 = vunpack.c.l.b16 %v669
        %v870 = vunpack.c.l.b16 %v670
        %v871 = vunpack.c.l.b16 %v671
        %v872 = vunpack.c.l.b16 %v672
        %v873 = vunpack.c.l.b16 %v673
        %v874 = vunpack.c.l.b16 %v674
        %v875 = vunpack.c.l.b16 %v675
        %v876 = vunpack.c.l.b16 %v676
        %v877 = vunpack.c.l.b16 %v677
        %v878 = vunpack.c.l.b16 %v678
        %v879 = vunpack.c.l.b16 %v679
        %v880 = vunpack.c.l.b16 %v680
        %v881 = vunpack.c.l.b16 %v681
        %v882 = vunpack.c.l.b16 %v682
        %v883 = vunpack.c.l.b16 %v683
        %v884 = vunpack.c.l.b16 %v684
        %v885 = vunpack.c.l.b16 %v685
        %v886 = vunpack.c.l.b16 %v686
        %v887 = vunpack.c.l.b16 %v687
        %v888 = vunpack.c.l.b16 %v688
        %v889 = vunpack.c.l.b16 %v689
        %v890 = vunpack.c.l.b16 %v690
        %v891 = vunpack.c.l.b16 %v691
        %v892 = vunpack.c.l.b16 %v692
        %v893 = vunpack.c.l.b16 %v693
        %v894 = vunpack.c.l.b16 %v694
        %v895 = vunpack.c.l.b16 %v695
        %v896 = vunpack.c.l.b16 %v696
        %v897 = vunpack.c.l.b16 %v697
        %v898 = vunpack.c.l.b16 %v698
        %v899 = vpack.c.b16 %v800, %v799
        %v900 = vpack.c.b16 %v802, %v801
        %v901 = vpack.c.b16 %v804, %v803
        %v902 = vpack.c.b16 %v806, %v805
        %v903 = vpack.c.b16 %v808, %v807
        %v904 = vpack.c.b16 %v810, %v809
        %v905 = vpack.c.b16 %v812, %v811
        %v906 = vpack.c.b16 %v814, %v813
        %v907 = vpack.c.b16 %v816, %v815
        %v908 = vpack.c.b16 %v818, %v817
        %v909 = vpack.c.b16 %v820, %v819
        %v910 = vpack.c.b16 %v822, %v821
        %v911 = vpack.c.b16 %v824, %v823
        %v912 = vpack.c.b16 %v826, %v825
        %v913 = vpack.c.b16 %v828, %v827
        %v914 = vpack.c.b16 %v830, %v829
        %v915 = vpack.c.b16 %v832, %v831
        %v916 = vpack.c.b16 %v834, %v833
        %v917 = vpack.c.b16 %v836, %v835
        %v918 = vpack.c.b16 %v838, %v837
        %v919 = vpack.c.b16 %v840, %v839
        %v920 = vpack.c.b16 %v842, %v841
        %v921 = vpack.c.b16 %v844, %v843
        %v922 = vpack.c.b16 %v846, %v845
        %v923 = vpack.c.b16 %v848, %v847
        %v924 = vpack.c.b16 %v850, %v849
        %v925 = vpack.c.b16 %v852, %v851
        %v926 = vpack.c.b16 %v854, %v853
        %v927 = vpack.c.b16 %v856, %v855
        %v928 = vpack.c.b16 %v858, %v857
        %v929 = vpack.c.b16 %v860, %v859
        %v930 = vpack.c.b16 %v862, %v861
        %v931 = vpack.c.b16 %v864, %v863
        %v932 = vpack.c.b16 %v866, %v865
        %v933 = vpack.c.b16 %v868, %v867
        %v934 = vpack.c.b16 %v870, %v869
        %v935 = vpack.c.b16 %v872, %v871
        %v936 = vpack.c.b16 %v874, %v873
        %v937 = vpack.c.b16 %v876, %v875
        %v938 = vpack.c.b16 %v878, %v877
        %v939 = vpack.c.b16 %v880, %v879
        %v940 = vpack.c.b16 %v882, %v881
        %v941 = vpack.c.b16 %v884, %v883
        %v942 = vpack.c.b16 %v886, %v885
        %v943 = vpack.c.b16 %v888, %v887
        %v944 = vpack.c.b16 %v890, %v889
        %v945 = vpack.c.b16 %v892, %v891
        %v946 = vpack.c.b16 %v894, %v893
        %v947 = vpack.c.b16 %v896, %v895
        %v948 = vpack.c.b16 %v898, %v897
        %v959 = vunpack.c.l.b16 %v589
        %v960 = vunpack.c.l.b16 %v590
        %v961 = vunpack.c.l.b16 %v591
        %v962 = vunpack.c.l.b16 %v592
        %v963 = vunpack.c.l.b16 %v593
        %v964 = vunpack.c.l.b16 %v594
        %v965 = vunpack.c.l.b16 %v595
        %v966 = vunpack.c.l.b16 %v596
        %v967 = vunpack.c.l.b16 %v597
        %v968 = vunpack.c.l.b16 %v598
        %v969 = vpack.c.b16 %v960, %v959
        %v970 = vpack.c.b16 %v962, %v961
        %v971 = vpack.c.b16 %v964, %v963
        %v972 = vpack.c.b16 %v966, %v965
        %v973 = vpack.c.b16 %v968, %v967
        %vm978 = vcmask 613376
        %v980 = vsel %vm978, %v899, 0
        %v983 = vsel %vm978, %v900, 0
        %v986 = vsel %vm978, %v901, 0
        %v989 = vsel %vm978, %v902, 0
        %v992 = vsel %vm978, %v903, 0
        %v995 = vsel %vm978, %v904, 0
        %v998 = vsel %vm978, %v905, 0
        %v1001 = vsel %vm978, %v906, 0
        %v1004 = vsel %vm978, %v907, 0
        %v1007 = vsel %vm978, %v908, 0
        %v1010 = vsel %vm978, %v909, 0
        %v1013 = vsel %vm978, %v910, 0
        %v1016 = vsel %vm978, %v911, 0
        %v1019 = vsel %vm978, %v912, 0
        %v1022 = vsel %vm978, %v913, 0
        %v1025 = vsel %vm978, %v914, 0
        %v1028 = vsel %vm978, %v915, 0
        %v1031 = vsel %vm978, %v916, 0
        %v1034 = vsel %vm978, %v917, 0
        %v1037 = vsel %vm978, %v918, 0
        %v1040 = vsel %vm978, %v919, 0
        %v1043 = vsel %vm978, %v920, 0
        %v1046 = vsel %vm978, %v921, 0
        %v1049 = vsel %vm978, %v922, 0
        %v1052 = vsel %vm978, %v923, 0
        %v1055 = vsel %vm978, %v924, 0
        %v1058 = vsel %vm978, %v925, 0
        %v1061 = vsel %vm978, %v926, 0
        %v1064 = vsel %vm978, %v927, 0
        %v1067 = vsel %vm978, %v928, 0
        %v1070 = vsel %vm978, %v929, 0
        %v1073 = vsel %vm978, %v930, 0
        %v1076 = vsel %vm978, %v931, 0
        %v1079 = vsel %vm978, %v932, 0
        %v1082 = vsel %vm978, %v933, 0
        %v1085 = vsel %vm978, %v934, 0
        %v1088 = vsel %vm978, %v935, 0
        %v1091 = vsel %vm978, %v936, 0
        %v1094 = vsel %vm978, %v937, 0
        %v1097 = vsel %vm978, %v938, 0
        %v1100 = vsel %vm978, %v939, 0
        %v1103 = vsel %vm978, %v940, 0
        %v1106 = vsel %vm978, %v941, 0
        %v1109 = vsel %vm978, %v942, 0
        %v1112 = vsel %vm978, %v943, 0
        %v1115 = vsel %vm978, %v944, 0
        %v1118 = vsel %vm978, %v945, 0
        %v1121 = vsel %vm978, %v946, 0
        %v1124 = vsel %vm978, %v947, 0
        %v1127 = vsel %vm978, %v948, 0
        %vm1129 = vcmask 1044480
        %vm1130 = vcmask 1045504
        %v1131 = vsel %vm1129, 4294967295, 65535
        %v1132 = vsel %vm1130, %v1131, 0
        %v1134 = vand.u32 %v973, %v1132
        %1136 = vmatprep.subr.bf16.mxu0 0
        %1137 = vmatpush1.bf16.msra.mxu0 %v969
        %1138 = vmatprep.subr.bf16.mxu0 0
        %1139 = vmatpush1.bf16.msra.mxu0 %v970
        %1140 = vmatprep.subr.bf16.mxu0 0
        %1141 = vmatpush1.bf16.msra.mxu0 %v971
        %1142 = vmatprep.subr.bf16.mxu0 0
        %1143 = vmatpush1.bf16.msra.mxu0 %v972
        %1144 = vmatprep.subr.bf16.mxu0 0
        %1145 = vmatpush1.bf16.msra.mxu0 %v1134
        %1146 = vmatprep.subr.bf16.mxu0 0
        %1147 = vmatpush1.bf16.msra.mxu0 0
        %1148 = vmatprep.subr.bf16.mxu0 0
        %1149 = vmatpush1.bf16.msra.mxu0 0
        %1150 = vmatprep.subr.bf16.mxu0 0
        %1151 = vmatpush1.bf16.msra.mxu0 0
        %1152 = vmatprep.subr.bf16.mxu0 0
        %1153 = vmatpush1.bf16.msra.mxu0 0
        %1154 = vmatprep.subr.bf16.mxu0 0
        %1155 = vmatpush1.bf16.msra.mxu0 0
        %1156 = vmatprep.subr.bf16.mxu0 0
        %1157 = vmatpush1.bf16.msra.mxu0 0
        %1158 = vmatprep.subr.bf16.mxu0 0
        %1159 = vmatpush1.bf16.msra.mxu0 0
        %1160 = vmatprep.subr.bf16.mxu0 0
        %1161 = vmatpush1.bf16.msra.mxu0 0
        %1162 = vmatprep.subr.bf16.mxu0 0
        %1163 = vmatpush1.bf16.msra.mxu0 0
        %1164 = vmatprep.subr.bf16.mxu0 0
        %1165 = vmatpush1.bf16.msra.mxu0 0
        %1166 = vmatprep.subr.bf16.mxu0 0
        %1167 = vmatpush1.bf16.msra.mxu0 0
        %1168 = vmatprep.mubr.bf16.mxu0 0
        %1169 = vmatmul.mubr.bf16.gmra.mrb[0].mxu0 %v980
        %v1170 = vpop.f32.mrb[0].mxu0
        %v1171 = vadd.f32 0.0, %v1170
        %v1172 = vpop.f32.mrb[0].mxu0
        %v1173 = vpop.f32.mrb[0].mxu0
        %v1174 = vadd.f32 0.0, %v1173
        %v1175 = vpop.f32.mrb[0].mxu0
        %1176 = vmatprep.mubr.bf16.mxu0 0
        %1177 = vmatmul.mubr.bf16.gmra.mrb[0].mxu0 %v983
        %v1178 = vpop.f32.mrb[0].mxu0
        %v1179 = vadd.f32 0.0, %v1178
        %v1180 = vpop.f32.mrb[0].mxu0
        %v1181 = vpop.f32.mrb[0].mxu0
        %v1182 = vadd.f32 0.0, %v1181
        %v1183 = vpop.f32.mrb[0].mxu0
        %1184 = vmatprep.mubr.bf16.mxu0 0
        %1185 = vmatmul.mubr.bf16.gmra.mrb[0].mxu0 %v986
        %v1186 = vpop.f32.mrb[0].mxu0
        %v1187 = vadd.f32 0.0, %v1186
        %v1188 = vpop.f32.mrb[0].mxu0
        %v1189 = vpop.f32.mrb[0].mxu0
        %v1190 = vadd.f32 0.0, %v1189
        %v1191 = vpop.f32.mrb[0].mxu0
        %1192 = vmatprep.mubr.bf16.mxu0 0
        %1193 = vmatmul.mubr.bf16.gmra.mrb[0].mxu0 %v989
        %v1194 = vpop.f32.mrb[0].mxu0
        %v1195 = vadd.f32 0.0, %v1194
        %v1196 = vpop.f32.mrb[0].mxu0
        %v1197 = vpop.f32.mrb[0].mxu0
        %v1198 = vadd.f32 0.0, %v1197
        %v1199 = vpop.f32.mrb[0].mxu0
        %1200 = vmatprep.mubr.bf16.mxu0 0
        %1201 = vmatmul.mubr.bf16.gmra.mrb[0].mxu0 %v992
        %v1202 = vpop.f32.mrb[0].mxu0
        %v1203 = vadd.f32 0.0, %v1202
        %v1204 = vpop.f32.mrb[0].mxu0
        %v1205 = vpop.f32.mrb[0].mxu0
        %v1206 = vadd.f32 0.0, %v1205
        %v1207 = vpop.f32.mrb[0].mxu0
        %1208 = vmatprep.mubr.bf16.mxu0 0
        %1209 = vmatmul.mubr.bf16.gmra.mrb[0].mxu0 %v995
        %v1210 = vpop.f32.mrb[0].mxu0
        %v1211 = vadd.f32 0.0, %v1210
        %v1212 = vpop.f32.mrb[0].mxu0
        %v1213 = vpop.f32.mrb[0].mxu0
        %v1214 = vadd.f32 0.0, %v1213
        %v1215 = vpop.f32.mrb[0].mxu0
        %1216 = vmatprep.mubr.bf16.mxu0 0
        %1217 = vmatmul.mubr.bf16.gmra.mrb[0].mxu0 %v998
        %v1218 = vpop.f32.mrb[0].mxu0
        %v1219 = vadd.f32 0.0, %v1218
        %v1220 = vpop.f32.mrb[0].mxu0
        %v1221 = vpop.f32.mrb[0].mxu0
        %v1222 = vadd.f32 0.0, %v1221
        %v1223 = vpop.f32.mrb[0].mxu0
        %1224 = vmatprep.mubr.bf16.mxu0 0
        %1225 = vmatmul.mubr.bf16.gmra.mrb[0].mxu0 %v1001
        %v1226 = vpop.f32.mrb[0].mxu0
        %v1227 = vadd.f32 0.0, %v1226
        %v1228 = vpop.f32.mrb[0].mxu0
        %v1229 = vpop.f32.mrb[0].mxu0
        %v1230 = vadd.f32 0.0, %v1229
        %v1231 = vpop.f32.mrb[0].mxu0
        %1232 = vmatprep.mubr.bf16.mxu0 0
        %1233 = vmatmul.mubr.bf16.gmra.mrb[0].mxu0 %v1004
        %v1234 = vpop.f32.mrb[0].mxu0
        %v1235 = vadd.f32 0.0, %v1234
        %v1236 = vpop.f32.mrb[0].mxu0
        %v1237 = vpop.f32.mrb[0].mxu0
        %v1238 = vadd.f32 0.0, %v1237
        %v1239 = vpop.f32.mrb[0].mxu0
        %1240 = vmatprep.mubr.bf16.mxu0 0
        %1241 = vmatmul.mubr.bf16.gmra.mrb[0].mxu0 %v1007
        %v1242 = vpop.f32.mrb[0].mxu0
        %v1243 = vadd.f32 0.0, %v1242
        %v1244 = vpop.f32.mrb[0].mxu0
        %v1245 = vpop.f32.mrb[0].mxu0
        %v1246 = vadd.f32 0.0, %v1245
        %v1247 = vpop.f32.mrb[0].mxu0
        %1248 = vmatprep.mubr.bf16.mxu0 0
        %1249 = vmatmul.mubr.bf16.gmra.mrb[0].mxu0 %v1010
        %v1250 = vpop.f32.mrb[0].mxu0
        %v1251 = vadd.f32 0.0, %v1250
        %v1252 = vpop.f32.mrb[0].mxu0
        %v1253 = vpop.f32.mrb[0].mxu0
        %v1254 = vadd.f32 0.0, %v1253
        %v1255 = vpop.f32.mrb[0].mxu0
        %1256 = vmatprep.mubr.bf16.mxu0 0
        %1257 = vmatmul.mubr.bf16.gmra.mrb[0].mxu0 %v1013
        %v1258 = vpop.f32.mrb[0].mxu0
        %v1259 = vadd.f32 0.0, %v1258
        %v1260 = vpop.f32.mrb[0].mxu0
        %v1261 = vpop.f32.mrb[0].mxu0
        %v1262 = vadd.f32 0.0, %v1261
        %v1263 = vpop.f32.mrb[0].mxu0
        %1264 = vmatprep.mubr.bf16.mxu0 0
        %1265 = vmatmul.mubr.bf16.gmra.mrb[0].mxu0 %v1016
        %v1266 = vpop.f32.mrb[0].mxu0
        %v1267 = vadd.f32 0.0, %v1266
        %v1268 = vpop.f32.mrb[0].mxu0
        %v1269 = vpop.f32.mrb[0].mxu0
        %v1270 = vadd.f32 0.0, %v1269
        %v1271 = vpop.f32.mrb[0].mxu0
        %1272 = vmatprep.mubr.bf16.mxu0 0
        %1273 = vmatmul.mubr.bf16.gmra.mrb[0].mxu0 %v1019
        %v1274 = vpop.f32.mrb[0].mxu0
        %v1275 = vadd.f32 0.0, %v1274
        %v1276 = vpop.f32.mrb[0].mxu0
        %v1277 = vpop.f32.mrb[0].mxu0
        %v1278 = vadd.f32 0.0, %v1277
        %v1279 = vpop.f32.mrb[0].mxu0
        %1280 = vmatprep.mubr.bf16.mxu0 0
        %1281 = vmatmul.mubr.bf16.gmra.mrb[0].mxu0 %v1022
        %v1282 = vpop.f32.mrb[0].mxu0
        %v1283 = vadd.f32 0.0, %v1282
        %v1284 = vpop.f32.mrb[0].mxu0
        %v1285 = vpop.f32.mrb[0].mxu0
        %v1286 = vadd.f32 0.0, %v1285
        %v1287 = vpop.f32.mrb[0].mxu0
        %1288 = vmatprep.mubr.bf16.mxu0 0
        %1289 = vmatmul.mubr.bf16.gmra.mrb[0].mxu0 %v1025
        %v1290 = vpop.f32.mrb[0].mxu0
        %v1291 = vadd.f32 0.0, %v1290
        %v1292 = vpop.f32.mrb[0].mxu0
        %v1293 = vpop.f32.mrb[0].mxu0
        %v1294 = vadd.f32 0.0, %v1293
        %v1295 = vpop.f32.mrb[0].mxu0
        %1296 = vmatprep.mubr.bf16.mxu0 0
        %1297 = vmatmul.mubr.bf16.gmra.mrb[0].mxu0 %v1028
        %v1298 = vpop.f32.mrb[0].mxu0
        %v1299 = vadd.f32 0.0, %v1298
        %v1300 = vpop.f32.mrb[0].mxu0
        %v1301 = vpop.f32.mrb[0].mxu0
        %v1302 = vadd.f32 0.0, %v1301
        %v1303 = vpop.f32.mrb[0].mxu0
        %1304 = vmatprep.mubr.bf16.mxu0 0
        %1305 = vmatmul.mubr.bf16.gmra.mrb[0].mxu0 %v1031
        %v1306 = vpop.f32.mrb[0].mxu0
        %v1307 = vadd.f32 0.0, %v1306
        %v1308 = vpop.f32.mrb[0].mxu0
        %v1309 = vpop.f32.mrb[0].mxu0
        %v1310 = vadd.f32 0.0, %v1309
        %v1311 = vpop.f32.mrb[0].mxu0
        %1312 = vmatprep.mubr.bf16.mxu0 0
        %1313 = vmatmul.mubr.bf16.gmra.mrb[0].mxu0 %v1034
        %v1314 = vpop.f32.mrb[0].mxu0
        %v1315 = vadd.f32 0.0, %v1314
        %v1316 = vpop.f32.mrb[0].mxu0
        %v1317 = vpop.f32.mrb[0].mxu0
        %v1318 = vadd.f32 0.0, %v1317
        %v1319 = vpop.f32.mrb[0].mxu0
        %1320 = vmatprep.mubr.bf16.mxu0 0
        %1321 = vmatmul.mubr.bf16.gmra.mrb[0].mxu0 %v1037
        %v1322 = vpop.f32.mrb[0].mxu0
        %v1323 = vadd.f32 0.0, %v1322
        %v1324 = vpop.f32.mrb[0].mxu0
        %v1325 = vpop.f32.mrb[0].mxu0
        %v1326 = vadd.f32 0.0, %v1325
        %v1327 = vpop.f32.mrb[0].mxu0
        %1328 = vmatprep.mubr.bf16.mxu0 0
        %1329 = vmatmul.mubr.bf16.gmra.mrb[0].mxu0 %v1040
        %v1330 = vpop.f32.mrb[0].mxu0
        %v1331 = vadd.f32 0.0, %v1330
        %v1332 = vpop.f32.mrb[0].mxu0
        %v1333 = vpop.f32.mrb[0].mxu0
        %v1334 = vadd.f32 0.0, %v1333
        %v1335 = vpop.f32.mrb[0].mxu0
        %1336 = vmatprep.mubr.bf16.mxu0 0
        %1337 = vmatmul.mubr.bf16.gmra.mrb[0].mxu0 %v1043
        %v1338 = vpop.f32.mrb[0].mxu0
        %v1339 = vadd.f32 0.0, %v1338
        %v1340 = vpop.f32.mrb[0].mxu0
        %v1341 = vpop.f32.mrb[0].mxu0
        %v1342 = vadd.f32 0.0, %v1341
        %v1343 = vpop.f32.mrb[0].mxu0
        %1344 = vmatprep.mubr.bf16.mxu0 0
        %1345 = vmatmul.mubr.bf16.gmra.mrb[0].mxu0 %v1046
        %v1346 = vpop.f32.mrb[0].mxu0
        %v1347 = vadd.f32 0.0, %v1346
        %v1348 = vpop.f32.mrb[0].mxu0
        %v1349 = vpop.f32.mrb[0].mxu0
        %v1350 = vadd.f32 0.0, %v1349
        %v1351 = vpop.f32.mrb[0].mxu0
        %1352 = vmatprep.mubr.bf16.mxu0 0
        %1353 = vmatmul.mubr.bf16.gmra.mrb[0].mxu0 %v1049
        %v1354 = vpop.f32.mrb[0].mxu0
        %v1355 = vadd.f32 0.0, %v1354
        %v1356 = vpop.f32.mrb[0].mxu0
        %v1357 = vpop.f32.mrb[0].mxu0
        %v1358 = vadd.f32 0.0, %v1357
        %v1359 = vpop.f32.mrb[0].mxu0
        %1360 = vmatprep.mubr.bf16.mxu0 0
        %1361 = vmatmul.mubr.bf16.gmra.mrb[0].mxu0 %v1052
        %v1362 = vpop.f32.mrb[0].mxu0
        %v1363 = vadd.f32 0.0, %v1362
        %v1364 = vpop.f32.mrb[0].mxu0
        %v1365 = vpop.f32.mrb[0].mxu0
        %v1366 = vadd.f32 0.0, %v1365
        %v1367 = vpop.f32.mrb[0].mxu0
        %1368 = vmatprep.mubr.bf16.mxu0 0
        %1369 = vmatmul.mubr.bf16.gmra.mrb[0].mxu0 %v1055
        %v1370 = vpop.f32.mrb[0].mxu0
        %v1371 = vadd.f32 0.0, %v1370
        %v1372 = vpop.f32.mrb[0].mxu0
        %v1373 = vpop.f32.mrb[0].mxu0
        %v1374 = vadd.f32 0.0, %v1373
        %v1375 = vpop.f32.mrb[0].mxu0
        %1376 = vmatprep.mubr.bf16.mxu0 0
        %1377 = vmatmul.mubr.bf16.gmra.mrb[0].mxu0 %v1058
        %v1378 = vpop.f32.mrb[0].mxu0
        %v1379 = vadd.f32 0.0, %v1378
        %v1380 = vpop.f32.mrb[0].mxu0
        %v1381 = vpop.f32.mrb[0].mxu0
        %v1382 = vadd.f32 0.0, %v1381
        %v1383 = vpop.f32.mrb[0].mxu0
        %1384 = vmatprep.mubr.bf16.mxu0 0
        %1385 = vmatmul.mubr.bf16.gmra.mrb[0].mxu0 %v1061
        %v1386 = vpop.f32.mrb[0].mxu0
        %v1387 = vadd.f32 0.0, %v1386
        %v1388 = vpop.f32.mrb[0].mxu0
        %v1389 = vpop.f32.mrb[0].mxu0
        %v1390 = vadd.f32 0.0, %v1389
        %v1391 = vpop.f32.mrb[0].mxu0
        %1392 = vmatprep.mubr.bf16.mxu0 0
        %1393 = vmatmul.mubr.bf16.gmra.mrb[0].mxu0 %v1064
        %v1394 = vpop.f32.mrb[0].mxu0
        %v1395 = vadd.f32 0.0, %v1394
        %v1396 = vpop.f32.mrb[0].mxu0
        %v1397 = vpop.f32.mrb[0].mxu0
        %v1398 = vadd.f32 0.0, %v1397
        %v1399 = vpop.f32.mrb[0].mxu0
        %1400 = vmatprep.mubr.bf16.mxu0 0
        %1401 = vmatmul.mubr.bf16.gmra.mrb[0].mxu0 %v1067
        %v1402 = vpop.f32.mrb[0].mxu0
        %v1403 = vadd.f32 0.0, %v1402
        %v1404 = vpop.f32.mrb[0].mxu0
        %v1405 = vpop.f32.mrb[0].mxu0
        %v1406 = vadd.f32 0.0, %v1405
        %v1407 = vpop.f32.mrb[0].mxu0
        %1408 = vmatprep.mubr.bf16.mxu0 0
        %1409 = vmatmul.mubr.bf16.gmra.mrb[0].mxu0 %v1070
        %v1410 = vpop.f32.mrb[0].mxu0
        %v1411 = vadd.f32 0.0, %v1410
        %v1412 = vpop.f32.mrb[0].mxu0
        %v1413 = vpop.f32.mrb[0].mxu0
        %v1414 = vadd.f32 0.0, %v1413
        %v1415 = vpop.f32.mrb[0].mxu0
        %1416 = vmatprep.mubr.bf16.mxu0 0
        %1417 = vmatmul.mubr.bf16.gmra.mrb[0].mxu0 %v1073
        %v1418 = vpop.f32.mrb[0].mxu0
        %v1419 = vadd.f32 0.0, %v1418
        %v1420 = vpop.f32.mrb[0].mxu0
        %v1421 = vpop.f32.mrb[0].mxu0
        %v1422 = vadd.f32 0.0, %v1421
        %v1423 = vpop.f32.mrb[0].mxu0
        %1424 = vmatprep.mubr.bf16.mxu0 0
        %1425 = vmatmul.mubr.bf16.gmra.mrb[0].mxu0 %v1076
        %v1426 = vpop.f32.mrb[0].mxu0
        %v1427 = vadd.f32 0.0, %v1426
        %v1428 = vpop.f32.mrb[0].mxu0
        %v1429 = vpop.f32.mrb[0].mxu0
        %v1430 = vadd.f32 0.0, %v1429
        %v1431 = vpop.f32.mrb[0].mxu0
        %1432 = vmatprep.mubr.bf16.mxu0 0
        %1433 = vmatmul.mubr.bf16.gmra.mrb[0].mxu0 %v1079
        %v1434 = vpop.f32.mrb[0].mxu0
        %v1435 = vadd.f32 0.0, %v1434
        %v1436 = vpop.f32.mrb[0].mxu0
        %v1437 = vpop.f32.mrb[0].mxu0
        %v1438 = vadd.f32 0.0, %v1437
        %v1439 = vpop.f32.mrb[0].mxu0
        %1440 = vmatprep.mubr.bf16.mxu0 0
        %1441 = vmatmul.mubr.bf16.gmra.mrb[0].mxu0 %v1082
        %v1442 = vpop.f32.mrb[0].mxu0
        %v1443 = vadd.f32 0.0, %v1442
        %v1444 = vpop.f32.mrb[0].mxu0
        %v1445 = vpop.f32.mrb[0].mxu0
        %v1446 = vadd.f32 0.0, %v1445
        %v1447 = vpop.f32.mrb[0].mxu0
        %1448 = vmatprep.mubr.bf16.mxu0 0
        %1449 = vmatmul.mubr.bf16.gmra.mrb[0].mxu0 %v1085
        %v1450 = vpop.f32.mrb[0].mxu0
        %v1451 = vadd.f32 0.0, %v1450
        %v1452 = vpop.f32.mrb[0].mxu0
        %v1453 = vpop.f32.mrb[0].mxu0
        %v1454 = vadd.f32 0.0, %v1453
        %v1455 = vpop.f32.mrb[0].mxu0
        %1456 = vmatprep.mubr.bf16.mxu0 0
        %1457 = vmatmul.mubr.bf16.gmra.mrb[0].mxu0 %v1088
        %v1458 = vpop.f32.mrb[0].mxu0
        %v1459 = vadd.f32 0.0, %v1458
        %v1460 = vpop.f32.mrb[0].mxu0
        %v1461 = vpop.f32.mrb[0].mxu0
        %v1462 = vadd.f32 0.0, %v1461
        %v1463 = vpop.f32.mrb[0].mxu0
        %1464 = vmatprep.mubr.bf16.mxu0 0
        %1465 = vmatmul.mubr.bf16.gmra.mrb[0].mxu0 %v1091
        %v1466 = vpop.f32.mrb[0].mxu0
        %v1467 = vadd.f32 0.0, %v1466
        %v1468 = vpop.f32.mrb[0].mxu0
        %v1469 = vpop.f32.mrb[0].mxu0
        %v1470 = vadd.f32 0.0, %v1469
        %v1471 = vpop.f32.mrb[0].mxu0
        %1472 = vmatprep.mubr.bf16.mxu0 0
        %1473 = vmatmul.mubr.bf16.gmra.mrb[0].mxu0 %v1094
        %v1474 = vpop.f32.mrb[0].mxu0
        %v1475 = vadd.f32 0.0, %v1474
        %v1476 = vpop.f32.mrb[0].mxu0
        %v1477 = vpop.f32.mrb[0].mxu0
        %v1478 = vadd.f32 0.0, %v1477
        %v1479 = vpop.f32.mrb[0].mxu0
        %1480 = vmatprep.mubr.bf16.mxu0 0
        %1481 = vmatmul.mubr.bf16.gmra.mrb[0].mxu0 %v1097
        %v1482 = vpop.f32.mrb[0].mxu0
        %v1483 = vadd.f32 0.0, %v1482
        %v1484 = vpop.f32.mrb[0].mxu0
        %v1485 = vpop.f32.mrb[0].mxu0
        %v1486 = vadd.f32 0.0, %v1485
        %v1487 = vpop.f32.mrb[0].mxu0
        %1488 = vmatprep.mubr.bf16.mxu0 0
        %1489 = vmatmul.mubr.bf16.gmra.mrb[0].mxu0 %v1100
        %v1490 = vpop.f32.mrb[0].mxu0
        %v1491 = vadd.f32 0.0, %v1490
        %v1492 = vpop.f32.mrb[0].mxu0
        %v1493 = vpop.f32.mrb[0].mxu0
        %v1494 = vadd.f32 0.0, %v1493
        %v1495 = vpop.f32.mrb[0].mxu0
        %1496 = vmatprep.mubr.bf16.mxu0 0
        %1497 = vmatmul.mubr.bf16.gmra.mrb[0].mxu0 %v1103
        %v1498 = vpop.f32.mrb[0].mxu0
        %v1499 = vadd.f32 0.0, %v1498
        %v1500 = vpop.f32.mrb[0].mxu0
        %v1501 = vpop.f32.mrb[0].mxu0
        %v1502 = vadd.f32 0.0, %v1501
        %v1503 = vpop.f32.mrb[0].mxu0
        %1504 = vmatprep.mubr.bf16.mxu0 0
        %1505 = vmatmul.mubr.bf16.gmra.mrb[0].mxu0 %v1106
        %v1506 = vpop.f32.mrb[0].mxu0
        %v1507 = vadd.f32 0.0, %v1506
        %v1508 = vpop.f32.mrb[0].mxu0
        %v1509 = vpop.f32.mrb[0].mxu0
        %v1510 = vadd.f32 0.0, %v1509
        %v1511 = vpop.f32.mrb[0].mxu0
        %1512 = vmatprep.mubr.bf16.mxu0 0
        %1513 = vmatmul.mubr.bf16.gmra.mrb[0].mxu0 %v1109
        %v1514 = vpop.f32.mrb[0].mxu0
        %v1515 = vadd.f32 0.0, %v1514
        %v1516 = vpop.f32.mrb[0].mxu0
        %v1517 = vpop.f32.mrb[0].mxu0
        %v1518 = vadd.f32 0.0, %v1517
        %v1519 = vpop.f32.mrb[0].mxu0
        %1520 = vmatprep.mubr.bf16.mxu0 0
        %1521 = vmatmul.mubr.bf16.gmra.mrb[0].mxu0 %v1112
        %v1522 = vpop.f32.mrb[0].mxu0
        %v1523 = vadd.f32 0.0, %v1522
        %v1524 = vpop.f32.mrb[0].mxu0
        %v1525 = vpop.f32.mrb[0].mxu0
        %v1526 = vadd.f32 0.0, %v1525
        %v1527 = vpop.f32.mrb[0].mxu0
        %1528 = vmatprep.mubr.bf16.mxu0 0
        %1529 = vmatmul.mubr.bf16.gmra.mrb[0].mxu0 %v1115
        %v1530 = vpop.f32.mrb[0].mxu0
        %v1531 = vadd.f32 0.0, %v1530
        %v1532 = vpop.f32.mrb[0].mxu0
        %v1533 = vpop.f32.mrb[0].mxu0
        %v1534 = vadd.f32 0.0, %v1533
        %v1535 = vpop.f32.mrb[0].mxu0
        %1536 = vmatprep.mubr.bf16.mxu0 0
        %1537 = vmatmul.mubr.bf16.gmra.mrb[0].mxu0 %v1118
        %v1538 = vpop.f32.mrb[0].mxu0
        %v1539 = vadd.f32 0.0, %v1538
        %v1540 = vpop.f32.mrb[0].mxu0
        %v1541 = vpop.f32.mrb[0].mxu0
        %v1542 = vadd.f32 0.0, %v1541
        %v1543 = vpop.f32.mrb[0].mxu0
        %1544 = vmatprep.mubr.bf16.mxu0 0
        %1545 = vmatmul.mubr.bf16.gmra.mrb[0].mxu0 %v1121
        %v1546 = vpop.f32.mrb[0].mxu0
        %v1547 = vadd.f32 0.0, %v1546
        %v1548 = vpop.f32.mrb[0].mxu0
        %v1549 = vpop.f32.mrb[0].mxu0
        %v1550 = vadd.f32 0.0, %v1549
        %v1551 = vpop.f32.mrb[0].mxu0
        %1552 = vmatprep.mubr.bf16.mxu0 0
        %1553 = vmatmul.mubr.bf16.gmra.mrb[0].mxu0 %v1124
        %v1554 = vpop.f32.mrb[0].mxu0
        %v1555 = vadd.f32 0.0, %v1554
        %v1556 = vpop.f32.mrb[0].mxu0
        %v1557 = vpop.f32.mrb[0].mxu0
        %v1558 = vadd.f32 0.0, %v1557
        %v1559 = vpop.f32.mrb[0].mxu0
        %1560 = vmatprep.mubr.bf16.mxu0 0
        %1561 = vmatmul.mubr.bf16.gmra.mrb[0].mxu0 %v1127
        %v1562 = vpop.f32.mrb[0].mxu0
        %v1563 = vadd.f32 0.0, %v1562
        %v1564 = vpop.f32.mrb[0].mxu0
        %v1565 = vpop.f32.mrb[0].mxu0
        %v1566 = vadd.f32 0.0, %v1565
        %v1567 = vpop.f32.mrb[0].mxu0
        %1568 = vdwg.mxu0
        %v1569 = vmax.f32 %v1171, %v1270
        %v1570 = vmax.f32 %v1174, %v1275
        %v1571 = vmax.f32 %v1179, %v1278
        %v1572 = vmax.f32 %v1182, %v1283
        %v1573 = vmax.f32 %v1187, %v1286
        %v1574 = vmax.f32 %v1190, %v1291
        %v1575 = vmax.f32 %v1195, %v1294
        %v1576 = vmax.f32 %v1198, %v1299
        %v1577 = vmax.f32 %v1203, %v1302
        %v1578 = vmax.f32 %v1206, %v1307
        %v1579 = vmax.f32 %v1211, %v1310
        %v1580 = vmax.f32 %v1214, %v1315
        %v1581 = vmax.f32 %v1219, %v1318
        %v1582 = vmax.f32 %v1222, %v1323
        %v1583 = vmax.f32 %v1227, %v1326
        %v1584 = vmax.f32 %v1230, %v1331
        %v1585 = vmax.f32 %v1235, %v1334
        %v1586 = vmax.f32 %v1238, %v1339
        %v1587 = vmax.f32 %v1243, %v1342
        %v1588 = vmax.f32 %v1246, %v1347
        %v1589 = vmax.f32 %v1251, %v1350
        %v1590 = vmax.f32 %v1254, %v1355
        %v1591 = vmax.f32 %v1259, %v1358
        %v1592 = vmax.f32 %v1262, %v1363
        %v1593 = vmax.f32 %v1267, %v1366
        %v1594 = vmax.f32 %v1569, %v1371
        %v1595 = vmax.f32 %v1570, %v1374
        %v1596 = vmax.f32 %v1571, %v1379
        %v1597 = vmax.f32 %v1572, %v1382
        %v1598 = vmax.f32 %v1573, %v1387
        %v1599 = vmax.f32 %v1574, %v1390
        %v1600 = vmax.f32 %v1575, %v1395
        %v1601 = vmax.f32 %v1576, %v1398
        %v1602 = vmax.f32 %v1577, %v1403
        %v1603 = vmax.f32 %v1578, %v1406
        %v1604 = vmax.f32 %v1579, %v1411
        %v1605 = vmax.f32 %v1580, %v1414
        %v1606 = vmax.f32 %v1581, %v1419
        %v1607 = vmax.f32 %v1582, %v1422
        %v1608 = vmax.f32 %v1583, %v1427
        %v1609 = vmax.f32 %v1584, %v1430
        %v1610 = vmax.f32 %v1585, %v1435
        %v1611 = vmax.f32 %v1586, %v1438
        %v1612 = vmax.f32 %v1587, %v1443
        %v1613 = vmax.f32 %v1588, %v1446
        %v1614 = vmax.f32 %v1589, %v1451
        %v1615 = vmax.f32 %v1590, %v1454
        %v1616 = vmax.f32 %v1591, %v1459
        %v1617 = vmax.f32 %v1592, %v1462
        %v1618 = vmax.f32 %v1593, %v1467
        %v1619 = vmax.f32 %v1594, %v1470
        %v1620 = vmax.f32 %v1595, %v1475
        %v1621 = vmax.f32 %v1596, %v1478
        %v1622 = vmax.f32 %v1597, %v1483
        %v1623 = vmax.f32 %v1598, %v1486
        %v1624 = vmax.f32 %v1599, %v1491
        %v1625 = vmax.f32 %v1600, %v1494
        %v1626 = vmax.f32 %v1601, %v1499
        %v1627 = vmax.f32 %v1602, %v1502
        %v1628 = vmax.f32 %v1603, %v1507
        %v1629 = vmax.f32 %v1604, %v1510
        %v1630 = vmax.f32 %v1605, %v1515
        %v1631 = vmax.f32 %v1606, %v1518
        %v1632 = vmax.f32 %v1607, %v1523
        %v1633 = vmax.f32 %v1608, %v1526
        %v1634 = vmax.f32 %v1609, %v1531
        %v1635 = vmax.f32 %v1610, %v1534
        %v1636 = vmax.f32 %v1611, %v1539
        %v1637 = vmax.f32 %v1612, %v1542
        %v1638 = vmax.f32 %v1613, %v1547
        %v1639 = vmax.f32 %v1614, %v1550
        %v1640 = vmax.f32 %v1615, %v1555
        %v1641 = vmax.f32 %v1616, %v1558
        %v1642 = vmax.f32 %v1617, %v1563
        %v1643 = vmax.f32 %v1618, %v1566
        %v1644 = vld [vmem:[%s2] sm:$0x1]
        %v1646 = vlaneseq
        %v1647 = vshrl.u32 %v1646, 7
        %v1648 = vsub.s32 0, %v1647
        %v1649 = vrot.slane %v1644, %v1648
        %v1651 = vadd.f32 %v1619, %v1649
        %v1652 = vadd.f32 %v1620, %v1649
        %v1653 = vadd.f32 %v1621, %v1649
        %v1654 = vadd.f32 %v1622, %v1649
        %v1655 = vadd.f32 %v1623, %v1649
        %v1656 = vadd.f32 %v1624, %v1649
        %v1657 = vadd.f32 %v1625, %v1649
        %v1658 = vadd.f32 %v1626, %v1649
        %v1659 = vadd.f32 %v1627, %v1649
        %v1660 = vadd.f32 %v1628, %v1649
        %v1661 = vadd.f32 %v1629, %v1649
        %v1662 = vadd.f32 %v1630, %v1649
        %v1663 = vadd.f32 %v1631, %v1649
        %v1664 = vadd.f32 %v1632, %v1649
        %v1665 = vadd.f32 %v1633, %v1649
        %v1666 = vadd.f32 %v1634, %v1649
        %v1667 = vadd.f32 %v1635, %v1649
        %v1668 = vadd.f32 %v1636, %v1649
        %v1669 = vadd.f32 %v1637, %v1649
        %v1670 = vadd.f32 %v1638, %v1649
        %v1671 = vadd.f32 %v1639, %v1649
        %v1672 = vadd.f32 %v1640, %v1649
        %v1673 = vadd.f32 %v1641, %v1649
        %v1674 = vadd.f32 %v1642, %v1649
        %v1675 = vadd.f32 %v1643, %v1649
        %v1676 = vmax.f32 %v1651, 0.0
        %v1677 = vmax.f32 %v1652, 0.0
        %v1678 = vmax.f32 %v1653, 0.0
        %v1679 = vmax.f32 %v1654, 0.0
        %v1680 = vmax.f32 %v1655, 0.0
        %v1681 = vmax.f32 %v1656, 0.0
        %v1682 = vmax.f32 %v1657, 0.0
        %v1683 = vmax.f32 %v1658, 0.0
        %v1684 = vmax.f32 %v1659, 0.0
        %v1685 = vmax.f32 %v1660, 0.0
        %v1686 = vmax.f32 %v1661, 0.0
        %v1687 = vmax.f32 %v1662, 0.0
        %v1688 = vmax.f32 %v1663, 0.0
        %v1689 = vmax.f32 %v1664, 0.0
        %v1690 = vmax.f32 %v1665, 0.0
        %v1691 = vmax.f32 %v1666, 0.0
        %v1692 = vmax.f32 %v1667, 0.0
        %v1693 = vmax.f32 %v1668, 0.0
        %v1694 = vmax.f32 %v1669, 0.0
        %v1695 = vmax.f32 %v1670, 0.0
        %v1696 = vmax.f32 %v1671, 0.0
        %v1697 = vmax.f32 %v1672, 0.0
        %v1698 = vmax.f32 %v1673, 0.0
        %v1699 = vmax.f32 %v1674, 0.0
        %v1700 = vmax.f32 %v1675, 0.0
        %v1701 = vpack.c.bf16 %v1677, %v1676
        %v1702 = vpack.c.bf16 %v1679, %v1678
        %v1703 = vpack.c.bf16 %v1681, %v1680
        %v1704 = vpack.c.bf16 %v1683, %v1682
        %v1705 = vpack.c.bf16 %v1685, %v1684
        %v1706 = vpack.c.bf16 %v1687, %v1686
        %v1707 = vpack.c.bf16 %v1689, %v1688
        %v1708 = vpack.c.bf16 %v1691, %v1690
        %v1709 = vpack.c.bf16 %v1693, %v1692
        %v1710 = vpack.c.bf16 %v1695, %v1694
        %v1711 = vpack.c.bf16 %v1697, %v1696
        %v1712 = vpack.c.bf16 %v1699, %v1698
        %v1713 = vpack.c.bf16 %v1700, %v1700
        %v1727 = vunpack.c.l.b16 %v1701
        %v1728 = vunpack.c.h.b16 %v1701
        %v1729 = vunpack.c.l.b16 %v1702
        %v1730 = vunpack.c.h.b16 %v1702
        %v1731 = vunpack.c.l.b16 %v1703
        %v1732 = vunpack.c.h.b16 %v1703
        %v1733 = vunpack.c.l.b16 %v1704
        %v1734 = vunpack.c.h.b16 %v1704
        %v1735 = vunpack.c.l.b16 %v1705
        %v1736 = vunpack.c.h.b16 %v1705
        %v1737 = vunpack.c.l.b16 %v1706
        %v1738 = vunpack.c.h.b16 %v1706
        %v1739 = vunpack.c.l.b16 %v1707
        %v1740 = vunpack.c.h.b16 %v1707
        %v1741 = vunpack.c.l.b16 %v1708
        %v1742 = vunpack.c.h.b16 %v1708
        %v1743 = vunpack.c.l.b16 %v1709
        %v1744 = vunpack.c.h.b16 %v1709
        %v1745 = vunpack.c.l.b16 %v1710
        %v1746 = vunpack.c.h.b16 %v1710
        %v1747 = vunpack.c.l.b16 %v1711
        %v1748 = vunpack.c.h.b16 %v1711
        %v1749 = vunpack.c.l.b16 %v1712
        %v1750 = vunpack.c.h.b16 %v1712
        %v1751 = vunpack.c.l.b16 %v1713
        %v1752 = vpack.c.b16 %v1727, %v1727
        %v1753 = vpack.c.b16 %v1728, %v1728
        %v1754 = vpack.c.b16 %v1729, %v1729
        %v1755 = vpack.c.b16 %v1730, %v1730
        %v1756 = vpack.c.b16 %v1731, %v1731
        %v1757 = vpack.c.b16 %v1732, %v1732
        %v1758 = vpack.c.b16 %v1733, %v1733
        %v1759 = vpack.c.b16 %v1734, %v1734
        %v1760 = vpack.c.b16 %v1735, %v1735
        %v1761 = vpack.c.b16 %v1736, %v1736
        %v1762 = vpack.c.b16 %v1737, %v1737
        %v1763 = vpack.c.b16 %v1738, %v1738
        %v1764 = vpack.c.b16 %v1739, %v1739
        %v1765 = vpack.c.b16 %v1740, %v1740
        %v1766 = vpack.c.b16 %v1741, %v1741
        %v1767 = vpack.c.b16 %v1742, %v1742
        %v1768 = vpack.c.b16 %v1743, %v1743
        %v1769 = vpack.c.b16 %v1744, %v1744
        %v1770 = vpack.c.b16 %v1745, %v1745
        %v1771 = vpack.c.b16 %v1746, %v1746
        %v1772 = vpack.c.b16 %v1747, %v1747
        %v1773 = vpack.c.b16 %v1748, %v1748
        %v1774 = vpack.c.b16 %v1749, %v1749
        %v1775 = vpack.c.b16 %v1750, %v1750
        %v1776 = vpack.c.b16 %v1751, %v1751
        %vm1802 = vcmask 44032
        %1803 = vst.msk [vmem:[%s577] sm:$0xf] %vm1802, %v1752
        %1804 = vst.msk [vmem:[%s577 + $0x4] sm:$0xf] %vm1802, %v1753
        %1805 = vst.msk [vmem:[%s577 + $0x8] sm:$0xf] %vm1802, %v1754
        %1806 = vst.msk [vmem:[%s577 + $0xc] sm:$0xf] %vm1802, %v1755
        %1807 = vst.msk [vmem:[%s577 + $0x10] sm:$0xf] %vm1802, %v1756
        %1808 = vst.msk [vmem:[%s577 + $0x14] sm:$0xf] %vm1802, %v1757
        %1809 = vst.msk [vmem:[%s577 + $0x18] sm:$0xf] %vm1802, %v1758
        %1810 = vst.msk [vmem:[%s577 + $0x1c] sm:$0xf] %vm1802, %v1759
        %1811 = vst.msk [vmem:[%s577 + $0x20] sm:$0xf] %vm1802, %v1760
        %1812 = vst.msk [vmem:[%s577 + $0x24] sm:$0xf] %vm1802, %v1761
        %1813 = vst.msk [vmem:[%s577 + $0x28] sm:$0xf] %vm1802, %v1762
        %1814 = vst.msk [vmem:[%s577 + $0x2c] sm:$0xf] %vm1802, %v1763
        %1815 = vst.msk [vmem:[%s577 + $0x30] sm:$0xf] %vm1802, %v1764
        %1816 = vst.msk [vmem:[%s577 + $0x34] sm:$0xf] %vm1802, %v1765
        %1817 = vst.msk [vmem:[%s577 + $0x38] sm:$0xf] %vm1802, %v1766
        %1818 = vst.msk [vmem:[%s577 + $0x3c] sm:$0xf] %vm1802, %v1767
        %1819 = vst.msk [vmem:[%s577 + $0x40] sm:$0xf] %vm1802, %v1768
        %1820 = vst.msk [vmem:[%s577 + $0x44] sm:$0xf] %vm1802, %v1769
        %1821 = vst.msk [vmem:[%s577 + $0x48] sm:$0xf] %vm1802, %v1770
        %1822 = vst.msk [vmem:[%s577 + $0x4c] sm:$0xf] %vm1802, %v1771
        %1823 = vst.msk [vmem:[%s577 + $0x50] sm:$0xf] %vm1802, %v1772
        %1824 = vst.msk [vmem:[%s577 + $0x54] sm:$0xf] %vm1802, %v1773
        %1825 = vst.msk [vmem:[%s577 + $0x58] sm:$0xf] %vm1802, %v1774
        %1826 = vst.msk [vmem:[%s577 + $0x5c] sm:$0xf] %vm1802, %v1775
        %1827 = vst.msk [vmem:[%s577 + $0x60] sm:$0xf] %vm1802, %v1776
        %s1828 = sand.u32 %s90, 1
        %s1829 = sand.u32 %s90, 1
        %s1830 = smul.addr %s1829, 100
        %s1831 = scalar_lea.vmem [#allocation3], %s1830
        // Predicated region
        $region95: #{net_forward.3} parent=89 // pred_check
          %p1832 = pneg %p100
        $region96: #{net_forward.3} parent=89 // pred_check_branch
          %1834 = sbr.rel (%p1832) target = $region98
        $region97: #{net_forward.3} parent=89 // pred_region
          %s1835 = smul.u32 25, %s14
          %s1836 = ssub.s32 49, %s1835
          %p1837 = scmp.lt.s32.totalorder %s1836, 25
          %s1838 = scalar_select %p1837, %s1836, 25
          %s1839 = smul.u32 64, %s1838
          %p1840 = scmp.ne.s32.totalorder 0, %s1839
          %s1841 = smul.addr %s1835, 4
          %s1842 = scalar_lea.vmem %s3, %s1841
          // Predicated region
          $region99: #{net_forward.3} parent=97 // pred_check
            %p1843 = pneg %p1840
          $region100: #{net_forward.3} parent=97 // pred_check_branch
            %1845 = sbr.rel (%p1843) target = $region102
          $region101: #{net_forward.3} parent=97 // pred_region
            // Predicated region
            $region103: #{net_forward.3} parent=101 // pred_check
              _
            $region104: #{net_forward.3} parent=101 // pred_check_branch
              %1847 = sbr.rel target = $region106
            $region105: #{net_forward.3} parent=101 // pred_region
              // Predicated region
              $region125: #{net_forward.3} parent=105 // pred_check
                _
              $region126: #{net_forward.3} parent=105 // pred_check_branch
                %1945 = sbr.rel (0) target = $region128
              $region127: #{net_forward.3} parent=105 // pred_region
                %s1947 = sdiv.u32.pop %s1838, 25
                %s1948 = srem.u32.pop %s1838, 25
                // While loop
                $region129: #{net_forward.3} parent=127 // loop_pre_header
                  _
                $region130: #{net_forward.3} parent=127 // loop_header
                  %s1950 = sphi 0, %s1952
                  %p1951 = scmp.ge.s32.totalorder %s1950, %s1947
                  %s1955 = sphi 0, %s2010
                  %s1956 = sphi %s1831, %s2013
                  %s1957 = sphi %s1842, %s2014
                $region131: #{net_forward.3} parent=127 // loop_header_branch
                  %1954 = sbr.rel (%p1951) target = $region135
                $region132: #{net_forward.3} parent=127 // loop_body
                  %v1958 = vld [vmem:[%s1956] sm:$0xf]
                  %1959 = vst [vmem:[%s1957] sm:$0xf] %v1958
                  %v1960 = vld [vmem:[%s1956 + $0x4] sm:$0xf]
                  %1961 = vst [vmem:[%s1957 + $0x4] sm:$0xf] %v1960
                  %v1962 = vld [vmem:[%s1956 + $0x8] sm:$0xf]
                  %1963 = vst [vmem:[%s1957 + $0x8] sm:$0xf] %v1962
                  %v1964 = vld [vmem:[%s1956 + $0xc] sm:$0xf]
                  %1965 = vst [vmem:[%s1957 + $0xc] sm:$0xf] %v1964
                  %v1966 = vld [vmem:[%s1956 + $0x10] sm:$0xf]
                  %1967 = vst [vmem:[%s1957 + $0x10] sm:$0xf] %v1966
                  %v1968 = vld [vmem:[%s1956 + $0x14] sm:$0xf]
                  %1969 = vst [vmem:[%s1957 + $0x14] sm:$0xf] %v1968
                  %v1970 = vld [vmem:[%s1956 + $0x18] sm:$0xf]
                  %1971 = vst [vmem:[%s1957 + $0x18] sm:$0xf] %v1970
                  %v1972 = vld [vmem:[%s1956 + $0x1c] sm:$0xf]
                  %1973 = vst [vmem:[%s1957 + $0x1c] sm:$0xf] %v1972
                  %v1974 = vld [vmem:[%s1956 + $0x20] sm:$0xf]
                  %1975 = vst [vmem:[%s1957 + $0x20] sm:$0xf] %v1974
                  %v1976 = vld [vmem:[%s1956 + $0x24] sm:$0xf]
                  %1977 = vst [vmem:[%s1957 + $0x24] sm:$0xf] %v1976
                  %v1978 = vld [vmem:[%s1956 + $0x28] sm:$0xf]
                  %1979 = vst [vmem:[%s1957 + $0x28] sm:$0xf] %v1978
                  %v1980 = vld [vmem:[%s1956 + $0x2c] sm:$0xf]
                  %1981 = vst [vmem:[%s1957 + $0x2c] sm:$0xf] %v1980
                  %v1982 = vld [vmem:[%s1956 + $0x30] sm:$0xf]
                  %1983 = vst [vmem:[%s1957 + $0x30] sm:$0xf] %v1982
                  %v1984 = vld [vmem:[%s1956 + $0x34] sm:$0xf]
                  %1985 = vst [vmem:[%s1957 + $0x34] sm:$0xf] %v1984
                  %v1986 = vld [vmem:[%s1956 + $0x38] sm:$0xf]
                  %1987 = vst [vmem:[%s1957 + $0x38] sm:$0xf] %v1986
                  %v1988 = vld [vmem:[%s1956 + $0x3c] sm:$0xf]
                  %1989 = vst [vmem:[%s1957 + $0x3c] sm:$0xf] %v1988
                  %v1990 = vld [vmem:[%s1956 + $0x40] sm:$0xf]
                  %1991 = vst [vmem:[%s1957 + $0x40] sm:$0xf] %v1990
                  %v1992 = vld [vmem:[%s1956 + $0x44] sm:$0xf]
                  %1993 = vst [vmem:[%s1957 + $0x44] sm:$0xf] %v1992
                  %v1994 = vld [vmem:[%s1956 + $0x48] sm:$0xf]
                  %1995 = vst [vmem:[%s1957 + $0x48] sm:$0xf] %v1994
                  %v1996 = vld [vmem:[%s1956 + $0x4c] sm:$0xf]
                  %1997 = vst [vmem:[%s1957 + $0x4c] sm:$0xf] %v1996
                  %v1998 = vld [vmem:[%s1956 + $0x50] sm:$0xf]
                  %1999 = vst [vmem:[%s1957 + $0x50] sm:$0xf] %v1998
                  %v2000 = vld [vmem:[%s1956 + $0x54] sm:$0xf]
                  %2001 = vst [vmem:[%s1957 + $0x54] sm:$0xf] %v2000
                  %v2002 = vld [vmem:[%s1956 + $0x58] sm:$0xf]
                  %2003 = vst [vmem:[%s1957 + $0x58] sm:$0xf] %v2002
                  %v2004 = vld [vmem:[%s1956 + $0x5c] sm:$0xf]
                  %2005 = vst [vmem:[%s1957 + $0x5c] sm:$0xf] %v2004
                  %v2006 = vld [vmem:[%s1956 + $0x60] sm:$0xf]
                  %2007 = vst [vmem:[%s1957 + $0x60] sm:$0xf] %v2006
                  %s2008 = sadd.s32 1, %s1955
                  %p2009 = scmp.ge.s32.totalorder %s2008, %s1947
                  %s2010 = scalar_select %p2009, 0, %s2008
                  %s2011 = smul.u32 %s2010, 100
                  %s2012 = smul.u32 %s2010, 100
                  %s2013 = scalar_lea.vmem %s1831, %s2011 [#allocation3]
                  %s2014 = scalar_lea.vmem %s1842, %s2012
                $region133: #{net_forward.3} parent=127 // loop_footer
                  %s1952 = sadd.s32 %s1950, 1
                $region134: #{net_forward.3} parent=127 // loop_footer_branch
                  %1949 = sbr.rel target = $region130
                $region135: #{net_forward.3} parent=127 // loop_exit
                  _
                %s2015 = sdiv.u32.pop %s1838, 25
                %s2016 = srem.u32.pop %s1838, 25
                %s2017 = smul.u32 %s2015, 25
                %s2018 = smul.u32 4, %s2017
                %s2019 = scalar_lea.vmem %s1831, %s2018 [#allocation3]
                %s2020 = smul.u32 4, %s2017
                %s2021 = scalar_lea.vmem %s1842, %s2020
                // While loop
                $region136: #{net_forward.3} parent=127 // loop_pre_header
                  _
                $region137: #{net_forward.3} parent=127 // loop_header
                  %s2023 = sphi 0, %s2025
                  %p2024 = scmp.ge.s32.totalorder %s2023, %s2016
                  %s2028 = sphi 0, %s2035
                  %s2029 = sphi %s2019, %s2038
                  %s2030 = sphi %s2021, %s2039
                $region138: #{net_forward.3} parent=127 // loop_header_branch
                  %2027 = sbr.rel (%p2024) target = $region142
                $region139: #{net_forward.3} parent=127 // loop_body
                  %v2031 = vld [vmem:[%s2029] sm:$0xf]
                  %2032 = vst [vmem:[%s2030] sm:$0xf] %v2031
                  %s2033 = sadd.s32 1, %s2028
                  %p2034 = scmp.ge.s32.totalorder %s2033, %s2016
                  %s2035 = scalar_select %p2034, 0, %s2033
                  %s2036 = smul.u32 %s2035, 4
                  %s2037 = smul.u32 %s2035, 4
                  %s2038 = scalar_lea.vmem %s2019, %s2036 [#allocation3]
                  %s2039 = scalar_lea.vmem %s2021, %s2037
                $region140: #{net_forward.3} parent=127 // loop_footer
                  %s2025 = sadd.s32 %s2023, 1
                $region141: #{net_forward.3} parent=127 // loop_footer_branch
                  %2022 = sbr.rel target = $region137
                $region142: #{net_forward.3} parent=127 // loop_exit
                  _
              $region128: #{net_forward.3} parent=105 // pred_fallthru
                _
            $region106: #{net_forward.3} parent=101 // pred_fallthru
              _
            // Predicated region
            $region107: #{net_forward.3} parent=101 // pred_check
              _
            $region108: #{net_forward.3} parent=101 // pred_check_branch
              %1849 = sbr.rel (0) target = $region110
            $region109: #{net_forward.3} parent=101 // pred_region
              %s1851 = sdiv.u32.pop %s1838, 25
              %s1852 = srem.u32.pop %s1838, 25
              // While loop
              $region111: #{net_forward.3} parent=109 // loop_pre_header
                _
              $region112: #{net_forward.3} parent=109 // loop_header
                %s1854 = sphi 0, %s1856
                %p1855 = scmp.ge.s32.totalorder %s1854, %s1851
                %s1859 = sphi 0, %s1914
                %s1860 = sphi %s1831, %s1917
                %s1861 = sphi %s1842, %s1918
              $region113: #{net_forward.3} parent=109 // loop_header_branch
                %1858 = sbr.rel (%p1855) target = $region117
              $region114: #{net_forward.3} parent=109 // loop_body
                %v1862 = vld [vmem:[%s1860] sm:$0xf]
                %1863 = vst [vmem:[%s1861] sm:$0xf] %v1862
                %v1864 = vld [vmem:[%s1860 + $0x4] sm:$0xf]
                %1865 = vst [vmem:[%s1861 + $0x4] sm:$0xf] %v1864
                %v1866 = vld [vmem:[%s1860 + $0x8] sm:$0xf]
                %1867 = vst [vmem:[%s1861 + $0x8] sm:$0xf] %v1866
                %v1868 = vld [vmem:[%s1860 + $0xc] sm:$0xf]
                %1869 = vst [vmem:[%s1861 + $0xc] sm:$0xf] %v1868
                %v1870 = vld [vmem:[%s1860 + $0x10] sm:$0xf]
                %1871 = vst [vmem:[%s1861 + $0x10] sm:$0xf] %v1870
                %v1872 = vld [vmem:[%s1860 + $0x14] sm:$0xf]
                %1873 = vst [vmem:[%s1861 + $0x14] sm:$0xf] %v1872
                %v1874 = vld [vmem:[%s1860 + $0x18] sm:$0xf]
                %1875 = vst [vmem:[%s1861 + $0x18] sm:$0xf] %v1874
                %v1876 = vld [vmem:[%s1860 + $0x1c] sm:$0xf]
                %1877 = vst [vmem:[%s1861 + $0x1c] sm:$0xf] %v1876
                %v1878 = vld [vmem:[%s1860 + $0x20] sm:$0xf]
                %1879 = vst [vmem:[%s1861 + $0x20] sm:$0xf] %v1878
                %v1880 = vld [vmem:[%s1860 + $0x24] sm:$0xf]
                %1881 = vst [vmem:[%s1861 + $0x24] sm:$0xf] %v1880
                %v1882 = vld [vmem:[%s1860 + $0x28] sm:$0xf]
                %1883 = vst [vmem:[%s1861 + $0x28] sm:$0xf] %v1882
                %v1884 = vld [vmem:[%s1860 + $0x2c] sm:$0xf]
                %1885 = vst [vmem:[%s1861 + $0x2c] sm:$0xf] %v1884
                %v1886 = vld [vmem:[%s1860 + $0x30] sm:$0xf]
                %1887 = vst [vmem:[%s1861 + $0x30] sm:$0xf] %v1886
                %v1888 = vld [vmem:[%s1860 + $0x34] sm:$0xf]
                %1889 = vst [vmem:[%s1861 + $0x34] sm:$0xf] %v1888
                %v1890 = vld [vmem:[%s1860 + $0x38] sm:$0xf]
                %1891 = vst [vmem:[%s1861 + $0x38] sm:$0xf] %v1890
                %v1892 = vld [vmem:[%s1860 + $0x3c] sm:$0xf]
                %1893 = vst [vmem:[%s1861 + $0x3c] sm:$0xf] %v1892
                %v1894 = vld [vmem:[%s1860 + $0x40] sm:$0xf]
                %1895 = vst [vmem:[%s1861 + $0x40] sm:$0xf] %v1894
                %v1896 = vld [vmem:[%s1860 + $0x44] sm:$0xf]
                %1897 = vst [vmem:[%s1861 + $0x44] sm:$0xf] %v1896
                %v1898 = vld [vmem:[%s1860 + $0x48] sm:$0xf]
                %1899 = vst [vmem:[%s1861 + $0x48] sm:$0xf] %v1898
                %v1900 = vld [vmem:[%s1860 + $0x4c] sm:$0xf]
                %1901 = vst [vmem:[%s1861 + $0x4c] sm:$0xf] %v1900
                %v1902 = vld [vmem:[%s1860 + $0x50] sm:$0xf]
                %1903 = vst [vmem:[%s1861 + $0x50] sm:$0xf] %v1902
                %v1904 = vld [vmem:[%s1860 + $0x54] sm:$0xf]
                %1905 = vst [vmem:[%s1861 + $0x54] sm:$0xf] %v1904
                %v1906 = vld [vmem:[%s1860 + $0x58] sm:$0xf]
                %1907 = vst [vmem:[%s1861 + $0x58] sm:$0xf] %v1906
                %v1908 = vld [vmem:[%s1860 + $0x5c] sm:$0xf]
                %1909 = vst [vmem:[%s1861 + $0x5c] sm:$0xf] %v1908
                %v1910 = vld [vmem:[%s1860 + $0x60] sm:$0xf]
                %1911 = vst [vmem:[%s1861 + $0x60] sm:$0xf] %v1910
                %s1912 = sadd.s32 1, %s1859
                %p1913 = scmp.ge.s32.totalorder %s1912, %s1851
                %s1914 = scalar_select %p1913, 0, %s1912
                %s1915 = smul.u32 %s1914, 100
                %s1916 = smul.u32 %s1914, 100
                %s1917 = scalar_lea.vmem %s1831, %s1915 [#allocation3]
                %s1918 = scalar_lea.vmem %s1842, %s1916
              $region115: #{net_forward.3} parent=109 // loop_footer
                %s1856 = sadd.s32 %s1854, 1
              $region116: #{net_forward.3} parent=109 // loop_footer_branch
                %1853 = sbr.rel target = $region112
              $region117: #{net_forward.3} parent=109 // loop_exit
                _
              %s1919 = sdiv.u32.pop %s1838, 25
              %s1920 = srem.u32.pop %s1838, 25
              %s1921 = smul.u32 %s1919, 25
              %s1922 = smul.u32 4, %s1921
              %s1923 = scalar_lea.vmem %s1831, %s1922 [#allocation3]
              %s1924 = smul.u32 4, %s1921
              %s1925 = scalar_lea.vmem %s1842, %s1924
              // While loop
              $region118: #{net_forward.3} parent=109 // loop_pre_header
                _
              $region119: #{net_forward.3} parent=109 // loop_header
                %s1927 = sphi 0, %s1929
                %p1928 = scmp.ge.s32.totalorder %s1927, %s1920
                %s1932 = sphi 0, %s1939
                %s1933 = sphi %s1923, %s1942
                %s1934 = sphi %s1925, %s1943
              $region120: #{net_forward.3} parent=109 // loop_header_branch
                %1931 = sbr.rel (%p1928) target = $region124
              $region121: #{net_forward.3} parent=109 // loop_body
                %v1935 = vld [vmem:[%s1933] sm:$0xf]
                %1936 = vst [vmem:[%s1934] sm:$0xf] %v1935
                %s1937 = sadd.s32 1, %s1932
                %p1938 = scmp.ge.s32.totalorder %s1937, %s1920
                %s1939 = scalar_select %p1938, 0, %s1937
                %s1940 = smul.u32 %s1939, 4
                %s1941 = smul.u32 %s1939, 4
                %s1942 = scalar_lea.vmem %s1923, %s1940 [#allocation3]
                %s1943 = scalar_lea.vmem %s1925, %s1941
              $region122: #{net_forward.3} parent=109 // loop_footer
                %s1929 = sadd.s32 %s1927, 1
              $region123: #{net_forward.3} parent=109 // loop_footer_branch
                %1926 = sbr.rel target = $region119
              $region124: #{net_forward.3} parent=109 // loop_exit
                _
            $region110: #{net_forward.3} parent=101 // pred_fallthru
              _
          $region102: #{net_forward.3} parent=97 // pred_fallthru
            _
          %2040 = vnop
        $region98: #{net_forward.3} parent=89 // pred_fallthru
          _
      $region90: #{net_forward.3} parent=5 // pred_fallthru
        _
      %p2041 = scmp.le.s32.totalorder 2, %s9
      // Predicated region
      $region143: #{net_forward.3} parent=5 // pred_check
        %p2042 = pneg %p2041
      $region144: #{net_forward.3} parent=5 // pred_check_branch
        %2044 = sbr.rel (%p2042) target = $region146
      $region145: #{net_forward.3} parent=5 // pred_region
        %s2045 = ssub.s32 %s9, 2
        // Predicated region
        $region147: #{net_forward.3} parent=145 // pred_check
          %p2046 = pneg %p106
        $region148: #{net_forward.3} parent=145 // pred_check_branch
          %2048 = sbr.rel (%p2046) target = $region150
        $region149: #{net_forward.3} parent=145 // pred_region
          %s2049 = sand.u32 %s91, 1
          %s2050 = sand.u32 %s91, 1
          %s2051 = smul.addr %s2050, 100
          %s2052 = scalar_lea.vmem [#allocation3], %s2051
        $region150: #{net_forward.3} parent=145 // pred_fallthru
          _
      $region146: #{net_forward.3} parent=5 // pred_fallthru
        _
    $region6: #{net_forward.3} parent=1 // loop_footer
      %s13 = sadd.s32 1, %s9
    $region7: #{net_forward.3} parent=1 // loop_footer_branch
      %8 = sbr.rel target = $region3
    $region8: #{net_forward.3} parent=1 // loop_exit
      _

// kernel: net_forward.4
$region0: #{net_forward.4}
  #allocation0 [shape = 'u32[]', space=smem, size = 0x4, offset = 0x4, fixed_abs, tag = 'smem constant byte address 0x4 - core index']
  #allocation1 [shape = 'u32[144,128]{1,0:T(1,128)}', space=vmem, size = 0x12000, scoped, tag = 'internal scratch']
  %s0 = inlined_call_operand.vmem [shape: bf16[4,50,150], index: 0, kind: input, shape index: {}]
  %s1 = inlined_call_operand.vmem [shape: bf16[150,16], index: 1, kind: input, shape index: {}]
  %s2 = inlined_call_operand.vmem [shape: f32[1,16], index: 2, kind: input, shape index: {}]
  %s3 = inlined_call_operand.vmem [shape: bf16[50,16], index: 3, kind: output, shape index: {}]
  %s4 = sld [smem:[#allocation0]]
  $region141: #{net_forward.4} parent=0
    _
  %s6 = ssub.s32 1, %s4
  %s7 = scalar_select 0, %s6, %s4
  $region1: #{net_forward.4} parent=0
    #allocation2 [shape = 'u8[131072]{0}', space=vmem, size = 0x20000, scoped, tag = 'input window, operand 0']
    #allocation3 [shape = 'u8[16384]{0}', space=vmem, size = 0x4000, scoped, tag = 'output window, operand 0']
    loop: start=0, step=1, limit=4
    $region2: #{net_forward.4} parent=1 // loop_pre_header
      _
    $region3: #{net_forward.4} parent=1 // loop_header
      %s9 = sphi 0, %s13
      %p10 = scmp.ge.s32.totalorder %s9, 4
      %s19 = sphi 0, %s21
      %s22 = sphi 0, %s19
      %s23 = sphi 0, %s22
      %s39 = sphi 0, %s23
      %s43 = sphi 0, %s43
      %s45 = sphi 0, %s43
      %s46 = sphi 0, %s45
      %s60 = sphi 0, %s46
      %s64 = sphi 0, %s64
      %s66 = sphi 0, %s64
      %s67 = sphi 0, %s66
      %s81 = sphi 0, %s67
      %s87 = sphi 0, %s89
      %s90 = sphi 0, %s87
      %s91 = sphi 0, %s90
      %s107 = sphi 0, %s91
    $region4: #{net_forward.4} parent=1 // loop_header_branch
      %12 = sbr.rel (%p10) target = $region8
    $region5: #{net_forward.4} parent=1 // loop_body
      %s14 = ssub.s32 %s9, 1
      %s15 = ssub.s32 %s9, 2
      %s16 = sadd.s32 %s9, 1
      %s17 = ssub.s32 %s9, %s16
      %p18 = scmp.eq.s32.totalorder %s17, 0
      %s20 = sadd.s32 %s19, 1
      %s21 = scalar_select %p18, %s19, %s20
      %p24 = pneg %p18
      %p25 = scmp.eq.s32.totalorder %s9, 1
      %p26 = por %p24, %p25
      %p27 = scmp.ne.s32.totalorder %s19, %s22
      %p28 = scmp.eq.s32.totalorder %s9, 0
      %p29 = por %p27, %p28
      %p30 = scmp.ne.s32.totalorder %s19, %s22
      %p31 = scmp.eq.s32.totalorder %s14, 1
      %p32 = por %p30, %p31
      %p33 = scmp.ne.s32.totalorder %s22, %s23
      %p34 = scmp.eq.s32.totalorder %s14, 0
      %p35 = por %p33, %p34
      %p36 = scmp.ne.s32.totalorder %s22, %s23
      %p37 = scmp.eq.s32.totalorder %s15, 1
      %p38 = por %p36, %p37
      %p40 = scmp.ne.s32.totalorder %s23, %s39
      %p41 = scmp.eq.s32.totalorder %s15, 0
      %p42 = por %p40, %p41
      %s44 = sadd.s32 %s43, 1
      %p47 = scmp.eq.s32.totalorder %s9, 1
      %p48 = scmp.ne.s32.totalorder %s43, %s45
      %p49 = scmp.eq.s32.totalorder %s9, 0
      %p50 = por %p48, %p49
      %p51 = scmp.ne.s32.totalorder %s43, %s45
      %p52 = scmp.eq.s32.totalorder %s14, 1
      %p53 = por %p51, %p52
      %p54 = scmp.ne.s32.totalorder %s45, %s46
      %p55 = scmp.eq.s32.totalorder %s14, 0
      %p56 = por %p54, %p55
      %p57 = scmp.ne.s32.totalorder %s45, %s46
      %p58 = scmp.eq.s32.totalorder %s15, 1
      %p59 = por %p57, %p58
      %p61 = scmp.ne.s32.totalorder %s46, %s60
      %p62 = scmp.eq.s32.totalorder %s15, 0
      %p63 = por %p61, %p62
      %s65 = sadd.s32 %s64, 1
      %p68 = scmp.eq.s32.totalorder %s9, 1
      %p69 = scmp.ne.s32.totalorder %s64, %s66
      %p70 = scmp.eq.s32.totalorder %s9, 0
      %p71 = por %p69, %p70
      %p72 = scmp.ne.s32.totalorder %s64, %s66
      %p73 = scmp.eq.s32.totalorder %s14, 1
      %p74 = por %p72, %p73
      %p75 = scmp.ne.s32.totalorder %s66, %s67
      %p76 = scmp.eq.s32.totalorder %s14, 0
      %p77 = por %p75, %p76
      %p78 = scmp.ne.s32.totalorder %s66, %s67
      %p79 = scmp.eq.s32.totalorder %s15, 1
      %p80 = por %p78, %p79
      %p82 = scmp.ne.s32.totalorder %s67, %s81
      %p83 = scmp.eq.s32.totalorder %s15, 0
      %p84 = por %p82, %p83
      %s85 = ssub.s32 %s9, %s16
      %p86 = scmp.eq.s32.totalorder %s85, 0
      %s88 = sadd.s32 %s87, 1
      %s89 = scalar_select %p86, %s87, %s88
      %p92 = pneg %p86
      %p93 = scmp.eq.s32.totalorder %s9, 1
      %p94 = por %p92, %p93
      %p95 = scmp.ne.s32.totalorder %s87, %s90
      %p96 = scmp.eq.s32.totalorder %s9, 0
      %p97 = por %p95, %p96
      %p98 = scmp.ne.s32.totalorder %s87, %s90
      %p99 = scmp.eq.s32.totalorder %s14, 1
      %p100 = por %p98, %p99
      %p101 = scmp.ne.s32.totalorder %s90, %s91
      %p102 = scmp.eq.s32.totalorder %s14, 0
      %p103 = por %p101, %p102
      %p104 = scmp.ne.s32.totalorder %s90, %s91
      %p105 = scmp.eq.s32.totalorder %s15, 1
      %p106 = por %p104, %p105
      %p108 = scmp.ne.s32.totalorder %s91, %s107
      %p109 = scmp.eq.s32.totalorder %s15, 0
      %p110 = por %p108, %p109
      %p111 = scmp.le.s32.totalorder 1, %s9
      %p112 = scmp.lt.s32.totalorder %s9, 3
      %p113 = pnand %p111, %p112
      %p114 = pneg %p113
      // Predicated region
      $region9: #{net_forward.4} parent=5 // pred_check
        _
      $region10: #{net_forward.4} parent=5 // pred_check_branch
        %116 = sbr.rel (%p113) target = $region12
      $region11: #{net_forward.4} parent=5 // pred_region
        %s117 = ssub.s32 %s9, 1
        // Predicated region
        $region13: #{net_forward.4} parent=11 // pred_check
          %p118 = pneg %p56
        $region14: #{net_forward.4} parent=11 // pred_check_branch
          %120 = sbr.rel (%p118) target = $region16
        $region15: #{net_forward.4} parent=11 // pred_region
          _
        $region16: #{net_forward.4} parent=11 // pred_fallthru
          _
        // Predicated region
        $region17: #{net_forward.4} parent=11 // pred_check
          %p121 = pneg %p77
        $region18: #{net_forward.4} parent=11 // pred_check_branch
          %123 = sbr.rel (%p121) target = $region20
        $region19: #{net_forward.4} parent=11 // pred_region
          _
        $region20: #{net_forward.4} parent=11 // pred_fallthru
          _
      $region12: #{net_forward.4} parent=5 // pred_fallthru
        _
      %p124 = scmp.lt.s32.totalorder %s9, 2
      // Predicated region
      $region21: #{net_forward.4} parent=5 // pred_check
        %p125 = pneg %p124
      $region22: #{net_forward.4} parent=5 // pred_check_branch
        %127 = sbr.rel (%p125) target = $region24
      $region23: #{net_forward.4} parent=5 // pred_region
        // Predicated region
        $region25: #{net_forward.4} parent=23 // pred_check
          %p128 = pneg %p29
        $region26: #{net_forward.4} parent=23 // pred_check_branch
          %130 = sbr.rel (%p128) target = $region28
        $region27: #{net_forward.4} parent=23 // pred_region
          %s131 = sand.u32 %s19, 1
          %s132 = sand.u32 %s19, 1
          %s133 = smul.addr %s132, 128
          %s134 = scalar_lea.vmem [#allocation2], %s133
          %s135 = smul.u32 4, %s9
          %s136 = ssub.s32 7, %s135
          %p137 = scmp.lt.s32.totalorder %s136, 4
          %s138 = scalar_select %p137, %s136, 4
          %s139 = smul.u32 256, %s138
          %s140 = smul.u32 %s139, 2
          %p141 = scmp.ne.s32.totalorder 0, %s140
          %s142 = smul.addr %s135, 2
          %s143 = smul.addr %s142, 4
          %s144 = scalar_lea.vmem %s0, %s143
          // Predicated region
          $region29: #{net_forward.4} parent=27 // pred_check
            %p145 = pneg %p141
          $region30: #{net_forward.4} parent=27 // pred_check_branch
            %147 = sbr.rel (%p145) target = $region32
          $region31: #{net_forward.4} parent=27 // pred_region
            // Predicated region
            $region33: #{net_forward.4} parent=31 // pred_check
              _
            $region34: #{net_forward.4} parent=31 // pred_check_branch
              %149 = sbr.rel (0) target = $region36
            $region35: #{net_forward.4} parent=31 // pred_region
              // Predicated region
              $region55: #{net_forward.4} parent=35 // pred_check
                _
              $region56: #{net_forward.4} parent=35 // pred_check_branch
                %234 = sbr.rel (0) target = $region58
              $region57: #{net_forward.4} parent=35 // pred_region
                %s235 = sshrl.u32 %s138, 2
                // While loop
                $region59: #{net_forward.4} parent=57 // loop_pre_header
                  _
                $region60: #{net_forward.4} parent=57 // loop_header
                  %s237 = sphi 0, %s239
                  %p238 = scmp.ge.s32.totalorder %s237, %s235
                  %s242 = sphi 0, %s279
                  %s243 = sphi %s144, %s282
                  %s244 = sphi %s134, %s283
                $region61: #{net_forward.4} parent=57 // loop_header_branch
                  %241 = sbr.rel (%p238) target = $region65
                $region62: #{net_forward.4} parent=57 // loop_body
                  %v245 = vld [vmem:[%s243] sm:$0xff]
                  %246 = vst [vmem:[%s244] sm:$0xff] %v245
                  %v247 = vld [vmem:[%s243 + $0x8] sm:$0xff]
                  %248 = vst [vmem:[%s244 + $0x8] sm:$0xff] %v247
                  %v249 = vld [vmem:[%s243 + $0x10] sm:$0xff]
                  %250 = vst [vmem:[%s244 + $0x10] sm:$0xff] %v249
                  %v251 = vld [vmem:[%s243 + $0x18] sm:$0xff]
                  %252 = vst [vmem:[%s244 + $0x18] sm:$0xff] %v251
                  %v253 = vld [vmem:[%s243 + $0x38] sm:$0xff]
                  %254 = vst [vmem:[%s244 + $0x20] sm:$0xff] %v253
                  %v255 = vld [vmem:[%s243 + $0x40] sm:$0xff]
                  %256 = vst [vmem:[%s244 + $0x28] sm:$0xff] %v255
                  %v257 = vld [vmem:[%s243 + $0x48] sm:$0xff]
                  %258 = vst [vmem:[%s244 + $0x30] sm:$0xff] %v257
                  %v259 = vld [vmem:[%s243 + $0x50] sm:$0xff]
                  %260 = vst [vmem:[%s244 + $0x38] sm:$0xff] %v259
                  %v261 = vld [vmem:[%s243 + $0x70] sm:$0xff]
                  %262 = vst [vmem:[%s244 + $0x40] sm:$0xff] %v261
                  %v263 = vld [vmem:[%s243 + $0x78] sm:$0xff]
                  %264 = vst [vmem:[%s244 + $0x48] sm:$0xff] %v263
                  %v265 = vld [vmem:[%s243 + $0x80] sm:$0xff]
                  %266 = vst [vmem:[%s244 + $0x50] sm:$0xff] %v265
                  %v267 = vld [vmem:[%s243 + $0x88] sm:$0xff]
                  %268 = vst [vmem:[%s244 + $0x58] sm:$0xff] %v267
                  %v269 = vld [vmem:[%s243 + $0xa8] sm:$0xff]
                  %270 = vst [vmem:[%s244 + $0x60] sm:$0xff] %v269
                  %v271 = vld [vmem:[%s243 + $0xb0] sm:$0xff]
                  %272 = vst [vmem:[%s244 + $0x68] sm:$0xff] %v271
                  %v273 = vld [vmem:[%s243 + $0xb8] sm:$0xff]
                  %274 = vst [vmem:[%s244 + $0x70] sm:$0xff] %v273
                  %v275 = vld [vmem:[%s243 + $0xc0] sm:$0xff]
                  %276 = vst [vmem:[%s244 + $0x78] sm:$0xff] %v275
                  %s277 = sadd.s32 1, %s242
                  %p278 = scmp.ge.s32.totalorder %s277, %s235
                  %s279 = scalar_select %p278, 0, %s277
                  %s280 = smul.u32 %s279, 32
                  %s281 = smul.u32 %s279, 32
                  %s282 = scalar_lea.vmem %s144, %s280
                  %s283 = scalar_lea.vmem %s134, %s281 [#allocation2]
                $region63: #{net_forward.4} parent=57 // loop_footer
                  %s239 = sadd.s32 %s237, 1
                $region64: #{net_forward.4} parent=57 // loop_footer_branch
                  %236 = sbr.rel target = $region60
                $region65: #{net_forward.4} parent=57 // loop_exit
                  _
                %s284 = sshrl.u32 %s138, 2
                %s285 = sand.u32 %s138, 3
                %s286 = smul.u32 %s284, 4
                %s287 = smul.u32 8, %s286
                %s288 = scalar_lea.vmem %s144, %s287
                %s289 = smul.u32 8, %s286
                %s290 = scalar_lea.vmem %s134, %s289 [#allocation2]
                // While loop
                $region66: #{net_forward.4} parent=57 // loop_pre_header
                  _
                $region67: #{net_forward.4} parent=57 // loop_header
                  %s292 = sphi 0, %s294
                  %p293 = scmp.ge.s32.totalorder %s292, %s285
                  %s297 = sphi 0, %s310
                  %s298 = sphi %s288, %s313
                  %s299 = sphi %s290, %s314
                $region68: #{net_forward.4} parent=57 // loop_header_branch
                  %296 = sbr.rel (%p293) target = $region72
                $region69: #{net_forward.4} parent=57 // loop_body
                  %v300 = vld [vmem:[%s298] sm:$0xff]
                  %301 = vst [vmem:[%s299] sm:$0xff] %v300
                  %v302 = vld [vmem:[%s298 + $0x38] sm:$0xff]
                  %303 = vst [vmem:[%s299 + $0x20] sm:$0xff] %v302
                  %v304 = vld [vmem:[%s298 + $0x70] sm:$0xff]
                  %305 = vst [vmem:[%s299 + $0x40] sm:$0xff] %v304
                  %v306 = vld [vmem:[%s298 + $0xa8] sm:$0xff]
                  %307 = vst [vmem:[%s299 + $0x60] sm:$0xff] %v306
                  %s308 = sadd.s32 1, %s297
                  %p309 = scmp.ge.s32.totalorder %s308, %s285
                  %s310 = scalar_select %p309, 0, %s308
                  %s311 = smul.u32 %s310, 8
                  %s312 = smul.u32 %s310, 8
                  %s313 = scalar_lea.vmem %s288, %s311
                  %s314 = scalar_lea.vmem %s290, %s312 [#allocation2]
                $region70: #{net_forward.4} parent=57 // loop_footer
                  %s294 = sadd.s32 %s292, 1
                $region71: #{net_forward.4} parent=57 // loop_footer_branch
                  %291 = sbr.rel target = $region67
                $region72: #{net_forward.4} parent=57 // loop_exit
                  _
              $region58: #{net_forward.4} parent=35 // pred_fallthru
                _
              // Predicated region
              $region73: #{net_forward.4} parent=35 // pred_check
                _
              $region74: #{net_forward.4} parent=35 // pred_check_branch
                %316 = sbr.rel target = $region76
              $region75: #{net_forward.4} parent=35 // pred_region
                _
              $region76: #{net_forward.4} parent=35 // pred_fallthru
                _
            $region36: #{net_forward.4} parent=31 // pred_fallthru
              _
            // Predicated region
            $region37: #{net_forward.4} parent=31 // pred_check
              _
            $region38: #{net_forward.4} parent=31 // pred_check_branch
              %151 = sbr.rel target = $region40
            $region39: #{net_forward.4} parent=31 // pred_region
              %s153 = sshrl.u32 %s138, 2
              // While loop
              $region41: #{net_forward.4} parent=39 // loop_pre_header
                _
              $region42: #{net_forward.4} parent=39 // loop_header
                %s155 = sphi 0, %s157
                %p156 = scmp.ge.s32.totalorder %s155, %s153
                %s160 = sphi 0, %s197
                %s161 = sphi %s144, %s200
                %s162 = sphi %s134, %s201
              $region43: #{net_forward.4} parent=39 // loop_header_branch
                %159 = sbr.rel (%p156) target = $region47
              $region44: #{net_forward.4} parent=39 // loop_body
                %v163 = vld [vmem:[%s161] sm:$0xff]
                %164 = vst [vmem:[%s162] sm:$0xff] %v163
                %v165 = vld [vmem:[%s161 + $0x8] sm:$0xff]
                %166 = vst [vmem:[%s162 + $0x8] sm:$0xff] %v165
                %v167 = vld [vmem:[%s161 + $0x10] sm:$0xff]
                %168 = vst [vmem:[%s162 + $0x10] sm:$0xff] %v167
                %v169 = vld [vmem:[%s161 + $0x18] sm:$0xff]
                %170 = vst [vmem:[%s162 + $0x18] sm:$0xff] %v169
                %v171 = vld [vmem:[%s161 + $0x38] sm:$0xff]
                %172 = vst [vmem:[%s162 + $0x20] sm:$0xff] %v171
                %v173 = vld [vmem:[%s161 + $0x40] sm:$0xff]
                %174 = vst [vmem:[%s162 + $0x28] sm:$0xff] %v173
                %v175 = vld [vmem:[%s161 + $0x48] sm:$0xff]
                %176 = vst [vmem:[%s162 + $0x30] sm:$0xff] %v175
                %v177 = vld [vmem:[%s161 + $0x50] sm:$0xff]
                %178 = vst [vmem:[%s162 + $0x38] sm:$0xff] %v177
                %v179 = vld [vmem:[%s161 + $0x70] sm:$0xff]
                %180 = vst [vmem:[%s162 + $0x40] sm:$0xff] %v179
                %v181 = vld [vmem:[%s161 + $0x78] sm:$0xff]
                %182 = vst [vmem:[%s162 + $0x48] sm:$0xff] %v181
                %v183 = vld [vmem:[%s161 + $0x80] sm:$0xff]
                %184 = vst [vmem:[%s162 + $0x50] sm:$0xff] %v183
                %v185 = vld [vmem:[%s161 + $0x88] sm:$0xff]
                %186 = vst [vmem:[%s162 + $0x58] sm:$0xff] %v185
                %v187 = vld [vmem:[%s161 + $0xa8] sm:$0xff]
                %188 = vst [vmem:[%s162 + $0x60] sm:$0xff] %v187
                %v189 = vld [vmem:[%s161 + $0xb0] sm:$0xff]
                %190 = vst [vmem:[%s162 + $0x68] sm:$0xff] %v189
                %v191 = vld [vmem:[%s161 + $0xb8] sm:$0xff]
                %192 = vst [vmem:[%s162 + $0x70] sm:$0xff] %v191
                %v193 = vld [vmem:[%s161 + $0xc0] sm:$0xff]
                %194 = vst [vmem:[%s162 + $0x78] sm:$0xff] %v193
                %s195 = sadd.s32 1, %s160
                %p196 = scmp.ge.s32.totalorder %s195, %s153
                %s197 = scalar_select %p196, 0, %s195
                %s198 = smul.u32 %s197, 32
                %s199 = smul.u32 %s197, 32
                %s200 = scalar_lea.vmem %s144, %s198
                %s201 = scalar_lea.vmem %s134, %s199 [#allocation2]
              $region45: #{net_forward.4} parent=39 // loop_footer
                %s157 = sadd.s32 %s155, 1
              $region46: #{net_forward.4} parent=39 // loop_footer_branch
                %154 = sbr.rel target = $region42
              $region47: #{net_forward.4} parent=39 // loop_exit
                _
              %s202 = sshrl.u32 %s138, 2
              %s203 = sand.u32 %s138, 3
              %s204 = smul.u32 %s202, 4
              %s205 = smul.u32 8, %s204
              %s206 = scalar_lea.vmem %s144, %s205
              %s207 = smul.u32 8, %s204
              %s208 = scalar_lea.vmem %s134, %s207 [#allocation2]
              // While loop
              $region48: #{net_forward.4} parent=39 // loop_pre_header
                _
              $region49: #{net_forward.4} parent=39 // loop_header
                %s210 = sphi 0, %s212
                %p211 = scmp.ge.s32.totalorder %s210, %s203
                %s215 = sphi 0, %s228
                %s216 = sphi %s206, %s231
                %s217 = sphi %s208, %s232
              $region50: #{net_forward.4} parent=39 // loop_header_branch
                %214 = sbr.rel (%p211) target = $region54
              $region51: #{net_forward.4} parent=39 // loop_body
                %v218 = vld [vmem:[%s216] sm:$0xff]
                %219 = vst [vmem:[%s217] sm:$0xff] %v218
                %v220 = vld [vmem:[%s216 + $0x38] sm:$0xff]
                %221 = vst [vmem:[%s217 + $0x20] sm:$0xff] %v220
                %v222 = vld [vmem:[%s216 + $0x70] sm:$0xff]
                %223 = vst [vmem:[%s217 + $0x40] sm:$0xff] %v222
                %v224 = vld [vmem:[%s216 + $0xa8] sm:$0xff]
                %225 = vst [vmem:[%s217 + $0x60] sm:$0xff] %v224
                %s226 = sadd.s32 1, %s215
                %p227 = scmp.ge.s32.totalorder %s226, %s203
                %s228 = scalar_select %p227, 0, %s226
                %s229 = smul.u32 %s228, 8
                %s230 = smul.u32 %s228, 8
                %s231 = scalar_lea.vmem %s206, %s229
                %s232 = scalar_lea.vmem %s208, %s230 [#allocation2]
              $region52: #{net_forward.4} parent=39 // loop_footer
                %s212 = sadd.s32 %s210, 1
              $region53: #{net_forward.4} parent=39 // loop_footer_branch
                %209 = sbr.rel target = $region49
              $region54: #{net_forward.4} parent=39 // loop_exit
                _
            $region40: #{net_forward.4} parent=31 // pred_fallthru
              _
          $region32: #{net_forward.4} parent=27 // pred_fallthru
            _
          %317 = vnop
        $region28: #{net_forward.4} parent=23 // pred_fallthru
          _
      $region24: #{net_forward.4} parent=5 // pred_fallthru
        _
      %p318 = scmp.le.s32.totalorder 1, %s9
      %p319 = scmp.lt.s32.totalorder %s9, 3
      %p320 = pnand %p318, %p319
      %p321 = pneg %p320
      // Predicated region
      $region77: #{net_forward.4} parent=5 // pred_check
        _
      $region78: #{net_forward.4} parent=5 // pred_check_branch
        %323 = sbr.rel (%p320) target = $region80
      $region79: #{net_forward.4} parent=5 // pred_region
        %s324 = ssub.s32 %s9, 1
        %s325 = sand.u32 %s22, 1
        %s326 = sand.u32 %s22, 1
        %s327 = smul.addr %s326, 128
        %s328 = scalar_lea.vmem [#allocation2], %s327
        // Predicated region
        $region81: #{net_forward.4} parent=79 // pred_check
          %p329 = pneg %p35
        $region82: #{net_forward.4} parent=79 // pred_check_branch
          %331 = sbr.rel (%p329) target = $region84
        $region83: #{net_forward.4} parent=79 // pred_region
          _
        $region84: #{net_forward.4} parent=79 // pred_fallthru
          _
        %s332 = sand.u32 %s22, 1
        %s333 = sand.u32 %s22, 1
        %s334 = smul.addr %s333, 128
        %s335 = scalar_lea.vmem [#allocation2], %s334
        %p336 = pneg %p35
        %p337 = pneg %p32
        %p338 = pneg %p56
        %p339 = pneg %p53
        %p340 = pneg %p77
        %p341 = pneg %p74
        %p342 = pneg %p103
        %p343 = pneg %p100
        %s344 = sand.u32 %s90, 1
        %s345 = sand.u32 %s90, 1
        %s346 = smul.addr %s345, 16
        %s347 = scalar_lea.vmem [#allocation3], %s346
        %s348 = smul.u32 4, %s14
        %s349 = ssub.s32 7, %s348
        %p350 = scmp.lt.s32.totalorder %s349, 4
        %s351 = scalar_select %p350, %s349, 4
        %s352 = smul.u32 256, %s351
        %s353 = smul.u32 %s352, 2
        %s354 = smul.u32 4, %s14
        %s355 = ssub.s32 7, %s354
        %p356 = scmp.lt.s32.totalorder %s355, 4
        %s357 = scalar_select %p356, %s355, 4
        %s358 = smul.u32 64, %s357
        %v360 = vld [vmem:[%s1] sm:$0xf]
        %v361 = vld [vmem:[%s1 + $0x4] sm:$0xf]
        %v362 = vld [vmem:[%s1 + $0x8] sm:$0xf]
        %v363 = vld [vmem:[%s1 + $0xc] sm:$0xf]
        %v364 = vld [vmem:[%s1 + $0x10] sm:$0xf]
        %v365 = vld [vmem:[%s1 + $0x14] sm:$0xf]
        %v366 = vld [vmem:[%s1 + $0x18] sm:$0xf]
        %v367 = vld [vmem:[%s1 + $0x1c] sm:$0xf]
        %v368 = vld [vmem:[%s1 + $0x20] sm:$0xf]
        %v369 = vld [vmem:[%s1 + $0x24] sm:$0xf]
        %v370 = vld [vmem:[%s1 + $0x28] sm:$0xf]
        %v371 = vld [vmem:[%s1 + $0x2c] sm:$0xf]
        %v372 = vld [vmem:[%s1 + $0x30] sm:$0xf]
        %v373 = vld [vmem:[%s1 + $0x34] sm:$0xf]
        %v374 = vld [vmem:[%s1 + $0x38] sm:$0xf]
        %v375 = vld [vmem:[%s1 + $0x3c] sm:$0xf]
        %v376 = vld [vmem:[%s1 + $0x40] sm:$0xf]
        %v377 = vld [vmem:[%s1 + $0x44] sm:$0xf]
        %v378 = vld [vmem:[%s1 + $0x48] sm:$0x7]
        %v379 = vld [vmem:[%s328] sm:$0xff]
        %v380 = vld [vmem:[%s328 + $0x8] sm:$0xff]
        %v381 = vld [vmem:[%s328 + $0x10] sm:$0xff]
        %v382 = vld [vmem:[%s328 + $0x18] sm:$0xff]
        %v383 = vld [vmem:[%s328 + $0x20] sm:$0xff]
        %v384 = vld [vmem:[%s328 + $0x28] sm:$0xff]
        %v385 = vld [vmem:[%s328 + $0x30] sm:$0xff]
        %v386 = vld [vmem:[%s328 + $0x38] sm:$0xff]
        %v387 = vld [vmem:[%s328 + $0x40] sm:$0xff]
        %v388 = vld [vmem:[%s328 + $0x48] sm:$0xff]
        %v389 = vld [vmem:[%s328 + $0x50] sm:$0xff]
        %v390 = vld [vmem:[%s328 + $0x58] sm:$0xff]
        %v391 = vld [vmem:[%s328 + $0x60] sm:$0xff]
        %v392 = vld [vmem:[%s328 + $0x68] sm:$0xff]
        %v393 = vld [vmem:[%s328 + $0x70] sm:$0xff]
        %v394 = vld [vmem:[%s328 + $0x78] sm:$0xff]
        %v411 = vunpack.c.l.b16 %v379
        %v412 = vunpack.c.h.b16 %v379
        %v413 = vunpack.c.l.b16 %v380
        %v414 = vunpack.c.h.b16 %v380
        %v415 = vunpack.c.l.b16 %v381
        %v416 = vunpack.c.h.b16 %v381
        %v417 = vunpack.c.l.b16 %v382
        %v418 = vunpack.c.h.b16 %v382
        %v419 = vunpack.c.l.b16 %v383
        %v420 = vunpack.c.h.b16 %v383
        %v421 = vunpack.c.l.b16 %v384
        %v422 = vunpack.c.h.b16 %v384
        %v423 = vunpack.c.l.b16 %v385
        %v424 = vunpack.c.h.b16 %v385
        %v425 = vunpack.c.l.b16 %v386
        %v426 = vunpack.c.h.b16 %v386
        %v427 = vunpack.c.l.b16 %v387
        %v428 = vunpack.c.h.b16 %v387
        %v429 = vunpack.c.l.b16 %v388
        %v430 = vunpack.c.h.b16 %v388
        %v431 = vunpack.c.l.b16 %v389
        %v432 = vunpack.c.h.b16 %v389
        %v433 = vunpack.c.l.b16 %v390
        %v434 = vunpack.c.h.b16 %v390
        %v435 = vunpack.c.l.b16 %v391
        %v436 = vunpack.c.h.b16 %v391
        %v437 = vunpack.c.l.b16 %v392
        %v438 = vunpack.c.h.b16 %v392
        %v439 = vunpack.c.l.b16 %v393
        %v440 = vunpack.c.h.b16 %v393
        %v441 = vunpack.c.l.b16 %v394
        %v442 = vunpack.c.h.b16 %v394
        %v443 = vpack.c.b16 %v413, %v411
        %v444 = vpack.c.b16 %v414, %v412
        %v445 = vpack.c.b16 %v417, %v415
        %v446 = vpack.c.b16 %v418, %v416
        %v447 = vpack.c.b16 %v421, %v419
        %v448 = vpack.c.b16 %v422, %v420
        %v449 = vpack.c.b16 %v425, %v423
        %v450 = vpack.c.b16 %v426, %v424
        %v451 = vpack.c.b16 %v429, %v427
        %v452 = vpack.c.b16 %v430, %v428
        %v453 = vpack.c.b16 %v433, %v431
        %v454 = vpack.c.b16 %v434, %v432
        %v455 = vpack.c.b16 %v437, %v435
        %v456 = vpack.c.b16 %v438, %v436
        %v457 = vpack.c.b16 %v441, %v439
        %v458 = vpack.c.b16 %v442, %v440
        %v486 = vunpack.c.l.b16 %v360
        %v487 = vunpack.c.l.b16 %v361
        %v488 = vunpack.c.l.b16 %v362
        %v489 = vunpack.c.l.b16 %v363
        %v490 = vunpack.c.l.b16 %v364
        %v491 = vunpack.c.l.b16 %v365
        %v492 = vunpack.c.l.b16 %v366
        %v493 = vunpack.c.l.b16 %v367
        %v494 = vunpack.c.l.b16 %v368
        %v495 = vunpack.c.l.b16 %v369
        %v496 = vunpack.c.l.b16 %v370
        %v497 = vunpack.c.l.b16 %v371
        %v498 = vunpack.c.l.b16 %v372
        %v499 = vunpack.c.l.b16 %v373
        %v500 = vunpack.c.l.b16 %v374
        %v501 = vunpack.c.l.b16 %v375
        %v502 = vunpack.c.l.b16 %v376
        %v503 = vunpack.c.l.b16 %v377
        %v504 = vunpack.c.l.b16 %v378
        %v505 = vpack.c.b16 %v487, %v486
        %v506 = vpack.c.b16 %v489, %v488
        %v507 = vpack.c.b16 %v491, %v490
        %v508 = vpack.c.b16 %v493, %v492
        %v509 = vpack.c.b16 %v495, %v494
        %v510 = vpack.c.b16 %v497, %v496
        %v511 = vpack.c.b16 %v499, %v498
        %v512 = vpack.c.b16 %v501, %v500
        %v513 = vpack.c.b16 %v503, %v502
        %v514 = vpack.c.b16 %v504, %v504
        %vm524 = vcmask 179200
        %v526 = vsel %vm524, %v444, 0
        %v529 = vsel %vm524, %v446, 0
        %v532 = vsel %vm524, %v448, 0
        %v535 = vsel %vm524, %v450, 0
        %v538 = vsel %vm524, %v452, 0
        %v541 = vsel %vm524, %v454, 0
        %v544 = vsel %vm524, %v456, 0
        %v547 = vsel %vm524, %v458, 0
        %vm549 = vcmask 1042432
        %v551 = vsel %vm549, %v514, 0
        %553 = vmatprep.subr.bf16.mxu0 0
        %554 = vmatpush1.bf16.msra.mxu0 %v505
        %555 = vmatprep.subr.bf16.mxu0 0
        %556 = vmatpush1.bf16.msra.mxu0 %v506
        %557 = vmatprep.subr.bf16.mxu0 0
        %558 = vmatpush1.bf16.msra.mxu0 %v507
        %559 = vmatprep.subr.bf16.mxu0 0
        %560 = vmatpush1.bf16.msra.mxu0 %v508
        %561 = vmatprep.subr.bf16.mxu0 0
        %562 = vmatpush1.bf16.msra.mxu0 %v509
        %563 = vmatprep.subr.bf16.mxu0 0
        %564 = vmatpush1.bf16.msra.mxu0 %v510
        %565 = vmatprep.subr.bf16.mxu0 0
        %566 = vmatpush1.bf16.msra.mxu0 %v511
        %567 = vmatprep.subr.bf16.mxu0 0
        %568 = vmatpush1.bf16.msra.mxu0 %v512
        %569 = vmatprep.subr.bf16.mxu0 0
        %570 = vmatpush1.bf16.msra.mxu0 %v513
        %571 = vmatprep.subr.bf16.mxu0 0
        %572 = vmatpush1.bf16.msra.mxu0 %v551
        %573 = vmatprep.subr.bf16.mxu0 0
        %574 = vmatpush1.bf16.msra.mxu0 0
        %575 = vmatprep.subr.bf16.mxu0 0
        %576 = vmatpush1.bf16.msra.mxu0 0
        %577 = vmatprep.subr.bf16.mxu0 0
        %578 = vmatpush1.bf16.msra.mxu0 0
        %579 = vmatprep.subr.bf16.mxu0 0
        %580 = vmatpush1.bf16.msra.mxu0 0
        %581 = vmatprep.subr.bf16.mxu0 0
        %582 = vmatpush1.bf16.msra.mxu0 0
        %583 = vmatprep.subr.bf16.mxu0 0
        %584 = vmatpush1.bf16.msra.mxu0 0
        %585 = vmatprep.mubr.bf16.mxu0 %v526
        %586 = vmatmul.mubr.bf16.gmra.mrb[0].mxu0 %v443
        %v587 = vpop.f32.mrb[0].mxu0
        %v588 = vadd.f32 0.0, %v587
        %v589 = vpop.f32.mrb[0].mxu0
        %v590 = vpop.f32.mrb[0].mxu0
        %v591 = vadd.f32 0.0, %v590
        %v592 = vpop.f32.mrb[0].mxu0
        %593 = vmatprep.mubr.bf16.mxu0 %v529
        %594 = vmatmul.mubr.bf16.gmra.mrb[0].mxu0 %v445
        %v595 = vpop.f32.mrb[0].mxu0
        %v596 = vadd.f32 0.0, %v595
        %v597 = vpop.f32.mrb[0].mxu0
        %v598 = vpop.f32.mrb[0].mxu0
        %v599 = vadd.f32 0.0, %v598
        %v600 = vpop.f32.mrb[0].mxu0
        %601 = vmatprep.mubr.bf16.mxu0 %v532
        %602 = vmatmul.mubr.bf16.gmra.mrb[0].mxu0 %v447
        %v603 = vpop.f32.mrb[0].mxu0
        %v604 = vadd.f32 0.0, %v603
        %v605 = vpop.f32.mrb[0].mxu0
        %v606 = vpop.f32.mrb[0].mxu0
        %v607 = vadd.f32 0.0, %v606
        %v608 = vpop.f32.mrb[0].mxu0
        %609 = vmatprep.mubr.bf16.mxu0 %v535
        %610 = vmatmul.mubr.bf16.gmra.mrb[0].mxu0 %v449
        %v611 = vpop.f32.mrb[0].mxu0
        %v612 = vadd.f32 0.0, %v611
        %v613 = vpop.f32.mrb[0].mxu0
        %v614 = vpop.f32.mrb[0].mxu0
        %v615 = vadd.f32 0.0, %v614
        %v616 = vpop.f32.mrb[0].mxu0
        %617 = vmatprep.mubr.bf16.mxu0 %v538
        %618 = vmatmul.mubr.bf16.gmra.mrb[0].mxu0 %v451
        %v619 = vpop.f32.mrb[0].mxu0
        %v620 = vadd.f32 0.0, %v619
        %v621 = vpop.f32.mrb[0].mxu0
        %v622 = vpop.f32.mrb[0].mxu0
        %v623 = vadd.f32 0.0, %v622
        %v624 = vpop.f32.mrb[0].mxu0
        %625 = vmatprep.mubr.bf16.mxu0 %v541
        %626 = vmatmul.mubr.bf16.gmra.mrb[0].mxu0 %v453
        %v627 = vpop.f32.mrb[0].mxu0
        %v628 = vadd.f32 0.0, %v627
        %v629 = vpop.f32.mrb[0].mxu0
        %v630 = vpop.f32.mrb[0].mxu0
        %v631 = vadd.f32 0.0, %v630
        %v632 = vpop.f32.mrb[0].mxu0
        %633 = vmatprep.mubr.bf16.mxu0 %v544
        %634 = vmatmul.mubr.bf16.gmra.mrb[0].mxu0 %v455
        %v635 = vpop.f32.mrb[0].mxu0
        %v636 = vadd.f32 0.0, %v635
        %v637 = vpop.f32.mrb[0].mxu0
        %v638 = vpop.f32.mrb[0].mxu0
        %v639 = vadd.f32 0.0, %v638
        %v640 = vpop.f32.mrb[0].mxu0
        %641 = vmatprep.mubr.bf16.mxu0 %v547
        %642 = vmatmul.mubr.bf16.gmra.mrb[0].mxu0 %v457
        %v643 = vpop.f32.mrb[0].mxu0
        %v644 = vadd.f32 0.0, %v643
        %v645 = vpop.f32.mrb[0].mxu0
        %v646 = vpop.f32.mrb[0].mxu0
        %v647 = vadd.f32 0.0, %v646
        %v648 = vpop.f32.mrb[0].mxu0
        %649 = vdwg.mxu0
        %v650 = vmax.f32 %v588, %v604
        %v651 = vmax.f32 %v591, %v607
        %v652 = vmax.f32 %v596, %v612
        %v653 = vmax.f32 %v599, %v615
        %v654 = vmax.f32 %v650, %v620
        %v655 = vmax.f32 %v651, %v623
        %v656 = vmax.f32 %v652, %v628
        %v657 = vmax.f32 %v653, %v631
        %v658 = vmax.f32 %v654, %v636
        %v659 = vmax.f32 %v655, %v639
        %v660 = vmax.f32 %v656, %v644
        %v661 = vmax.f32 %v657, %v647
        %v662 = vld [vmem:[%s2] sm:$0x1]
        %v664 = vlaneseq
        %v665 = vshrl.u32 %v664, 7
        %v666 = vsub.s32 0, %v665
        %v667 = vrot.slane %v662, %v666
        %v669 = vadd.f32 %v658, %v667
        %v670 = vadd.f32 %v659, %v667
        %v671 = vadd.f32 %v660, %v667
        %v672 = vadd.f32 %v661, %v667
        %v673 = vmax.f32 %v669, 0.0
        %v674 = vmax.f32 %v670, 0.0
        %v675 = vmax.f32 %v671, 0.0
        %v676 = vmax.f32 %v672, 0.0
        %v677 = vpack.c.bf16 %v674, %v673
        %v678 = vpack.c.bf16 %v676, %v675
        %v681 = vunpack.c.l.b16 %v677
        %v682 = vunpack.c.h.b16 %v677
        %v683 = vunpack.c.l.b16 %v678
        %v684 = vunpack.c.h.b16 %v678
        %v685 = vpack.c.b16 %v681, %v681
        %v686 = vpack.c.b16 %v682, %v682
        %v687 = vpack.c.b16 %v683, %v683
        %v688 = vpack.c.b16 %v684, %v684
        %vm693 = vcmask 125952
        %694 = vst.msk [vmem:[%s347] sm:$0xf] %vm693, %v685
        %695 = vst.msk [vmem:[%s347 + $0x4] sm:$0xf] %vm693, %v686
        %696 = vst.msk [vmem:[%s347 + $0x8] sm:$0xf] %vm693, %v687
        %697 = vst.msk [vmem:[%s347 + $0xc] sm:$0xf] %vm693, %v688
        %s698 = sand.u32 %s90, 1
        %s699 = sand.u32 %s90, 1
        %s700 = smul.addr %s699, 16
        %s701 = scalar_lea.vmem [#allocation3], %s700
        // Predicated region
        $region85: #{net_forward.4} parent=79 // pred_check
          %p702 = pneg %p100
        $region86: #{net_forward.4} parent=79 // pred_check_branch
          %704 = sbr.rel (%p702) target = $region88
        $region87: #{net_forward.4} parent=79 // pred_region
          %s705 = smul.u32 4, %s14
          %s706 = ssub.s32 7, %s705
          %p707 = scmp.lt.s32.totalorder %s706, 4
          %s708 = scalar_select %p707, %s706, 4
          %s709 = smul.u32 64, %s708
          %p710 = scmp.ne.s32.totalorder 0, %s709
          %s711 = smul.addr %s705, 4
          %s712 = scalar_lea.vmem %s3, %s711
          // Predicated region
          $region89: #{net_forward.4} parent=87 // pred_check
            %p713 = pneg %p710
          $region90: #{net_forward.4} parent=87 // pred_check_branch
            %715 = sbr.rel (%p713) target = $region92
          $region91: #{net_forward.4} parent=87 // pred_region
            // Predicated region
            $region93: #{net_forward.4} parent=91 // pred_check
              _
            $region94: #{net_forward.4} parent=91 // pred_check_branch
              %717 = sbr.rel target = $region96
            $region95: #{net_forward.4} parent=91 // pred_region
              // Predicated region
              $region115: #{net_forward.4} parent=95 // pred_check
                _
              $region116: #{net_forward.4} parent=95 // pred_check_branch
                %772 = sbr.rel (0) target = $region118
              $region117: #{net_forward.4} parent=95 // pred_region
                %s774 = sshrl.u32 %s708, 2
                // While loop
                $region119: #{net_forward.4} parent=117 // loop_pre_header
                  _
                $region120: #{net_forward.4} parent=117 // loop_header
                  %s776 = sphi 0, %s778
                  %p777 = scmp.ge.s32.totalorder %s776, %s774
                  %s781 = sphi 0, %s794
                  %s782 = sphi %s701, %s797
                  %s783 = sphi %s712, %s798
                $region121: #{net_forward.4} parent=117 // loop_header_branch
                  %780 = sbr.rel (%p777) target = $region125
                $region122: #{net_forward.4} parent=117 // loop_body
                  %v784 = vld [vmem:[%s782] sm:$0xf]
                  %785 = vst [vmem:[%s783] sm:$0xf] %v784
                  %v786 = vld [vmem:[%s782 + $0x4] sm:$0xf]
                  %787 = vst [vmem:[%s783 + $0x4] sm:$0xf] %v786
                  %v788 = vld [vmem:[%s782 + $0x8] sm:$0xf]
                  %789 = vst [vmem:[%s783 + $0x8] sm:$0xf] %v788
                  %v790 = vld [vmem:[%s782 + $0xc] sm:$0xf]
                  %791 = vst [vmem:[%s783 + $0xc] sm:$0xf] %v790
                  %s792 = sadd.s32 1, %s781
                  %p793 = scmp.ge.s32.totalorder %s792, %s774
                  %s794 = scalar_select %p793, 0, %s792
                  %s795 = smul.u32 %s794, 16
                  %s796 = smul.u32 %s794, 16
                  %s797 = scalar_lea.vmem %s701, %s795 [#allocation3]
                  %s798 = scalar_lea.vmem %s712, %s796
                $region123: #{net_forward.4} parent=117 // loop_footer
                  %s778 = sadd.s32 %s776, 1
                $region124: #{net_forward.4} parent=117 // loop_footer_branch
                  %775 = sbr.rel target = $region120
                $region125: #{net_forward.4} parent=117 // loop_exit
                  _
                %s799 = sshrl.u32 %s708, 2
                %s800 = sand.u32 %s708, 3
                %s801 = smul.u32 %s799, 4
                %s802 = smul.u32 4, %s801
                %s803 = scalar_lea.vmem %s701, %s802 [#allocation3]
                %s804 = smul.u32 4, %s801
                %s805 = scalar_lea.vmem %s712, %s804
                // While loop
                $region126: #{net_forward.4} parent=117 // loop_pre_header
                  _
                $region127: #{net_forward.4} parent=117 // loop_header
                  %s807 = sphi 0, %s809
                  %p808 = scmp.ge.s32.totalorder %s807, %s800
                  %s812 = sphi 0, %s819
                  %s813 = sphi %s803, %s822
                  %s814 = sphi %s805, %s823
                $region128: #{net_forward.4} parent=117 // loop_header_branch
                  %811 = sbr.rel (%p808) target = $region132
                $region129: #{net_forward.4} parent=117 // loop_body
                  %v815 = vld [vmem:[%s813] sm:$0xf]
                  %816 = vst [vmem:[%s814] sm:$0xf] %v815
                  %s817 = sadd.s32 1, %s812
                  %p818 = scmp.ge.s32.totalorder %s817, %s800
                  %s819 = scalar_select %p818, 0, %s817
                  %s820 = smul.u32 %s819, 4
                  %s821 = smul.u32 %s819, 4
                  %s822 = scalar_lea.vmem %s803, %s820 [#allocation3]
                  %s823 = scalar_lea.vmem %s805, %s821
                $region130: #{net_forward.4} parent=117 // loop_footer
                  %s809 = sadd.s32 %s807, 1
                $region131: #{net_forward.4} parent=117 // loop_footer_branch
                  %806 = sbr.rel target = $region127
                $region132: #{net_forward.4} parent=117 // loop_exit
                  _
              $region118: #{net_forward.4} parent=95 // pred_fallthru
                _
            $region96: #{net_forward.4} parent=91 // pred_fallthru
              _
            // Predicated region
            $region97: #{net_forward.4} parent=91 // pred_check
              _
            $region98: #{net_forward.4} parent=91 // pred_check_branch
              %719 = sbr.rel (0) target = $region100
            $region99: #{net_forward.4} parent=91 // pred_region
              %s721 = sshrl.u32 %s708, 2
              // While loop
              $region101: #{net_forward.4} parent=99 // loop_pre_header
                _
              $region102: #{net_forward.4} parent=99 // loop_header
                %s723 = sphi 0, %s725
                %p724 = scmp.ge.s32.totalorder %s723, %s721
                %s728 = sphi 0, %s741
                %s729 = sphi %s701, %s744
                %s730 = sphi %s712, %s745
              $region103: #{net_forward.4} parent=99 // loop_header_branch
                %727 = sbr.rel (%p724) target = $region107
              $region104: #{net_forward.4} parent=99 // loop_body
                %v731 = vld [vmem:[%s729] sm:$0xf]
                %732 = vst [vmem:[%s730] sm:$0xf] %v731
                %v733 = vld [vmem:[%s729 + $0x4] sm:$0xf]
                %734 = vst [vmem:[%s730 + $0x4] sm:$0xf] %v733
                %v735 = vld [vmem:[%s729 + $0x8] sm:$0xf]
                %736 = vst [vmem:[%s730 + $0x8] sm:$0xf] %v735
                %v737 = vld [vmem:[%s729 + $0xc] sm:$0xf]
                %738 = vst [vmem:[%s730 + $0xc] sm:$0xf] %v737
                %s739 = sadd.s32 1, %s728
                %p740 = scmp.ge.s32.totalorder %s739, %s721
                %s741 = scalar_select %p740, 0, %s739
                %s742 = smul.u32 %s741, 16
                %s743 = smul.u32 %s741, 16
                %s744 = scalar_lea.vmem %s701, %s742 [#allocation3]
                %s745 = scalar_lea.vmem %s712, %s743
              $region105: #{net_forward.4} parent=99 // loop_footer
                %s725 = sadd.s32 %s723, 1
              $region106: #{net_forward.4} parent=99 // loop_footer_branch
                %722 = sbr.rel target = $region102
              $region107: #{net_forward.4} parent=99 // loop_exit
                _
              %s746 = sshrl.u32 %s708, 2
              %s747 = sand.u32 %s708, 3
              %s748 = smul.u32 %s746, 4
              %s749 = smul.u32 4, %s748
              %s750 = scalar_lea.vmem %s701, %s749 [#allocation3]
              %s751 = smul.u32 4, %s748
              %s752 = scalar_lea.vmem %s712, %s751
              // While loop
              $region108: #{net_forward.4} parent=99 // loop_pre_header
                _
              $region109: #{net_forward.4} parent=99 // loop_header
                %s754 = sphi 0, %s756
                %p755 = scmp.ge.s32.totalorder %s754, %s747
                %s759 = sphi 0, %s766
                %s760 = sphi %s750, %s769
                %s761 = sphi %s752, %s770
              $region110: #{net_forward.4} parent=99 // loop_header_branch
                %758 = sbr.rel (%p755) target = $region114
              $region111: #{net_forward.4} parent=99 // loop_body
                %v762 = vld [vmem:[%s760] sm:$0xf]
                %763 = vst [vmem:[%s761] sm:$0xf] %v762
                %s764 = sadd.s32 1, %s759
                %p765 = scmp.ge.s32.totalorder %s764, %s747
                %s766 = scalar_select %p765, 0, %s764
                %s767 = smul.u32 %s766, 4
                %s768 = smul.u32 %s766, 4
                %s769 = scalar_lea.vmem %s750, %s767 [#allocation3]
                %s770 = scalar_lea.vmem %s752, %s768
              $region112: #{net_forward.4} parent=99 // loop_footer
                %s756 = sadd.s32 %s754, 1
              $region113: #{net_forward.4} parent=99 // loop_footer_branch
                %753 = sbr.rel target = $region109
              $region114: #{net_forward.4} parent=99 // loop_exit
                _
            $region100: #{net_forward.4} parent=91 // pred_fallthru
              _
          $region92: #{net_forward.4} parent=87 // pred_fallthru
            _
          %824 = vnop
        $region88: #{net_forward.4} parent=79 // pred_fallthru
          _
      $region80: #{net_forward.4} parent=5 // pred_fallthru
        _
      %p825 = scmp.le.s32.totalorder 2, %s9
      // Predicated region
      $region133: #{net_forward.4} parent=5 // pred_check
        %p826 = pneg %p825
      $region134: #{net_forward.4} parent=5 // pred_check_branch
        %828 = sbr.rel (%p826) target = $region136
      $region135: #{net_forward.4} parent=5 // pred_region
        %s829 = ssub.s32 %s9, 2
        // Predicated region
        $region137: #{net_forward.4} parent=135 // pred_check
          %p830 = pneg %p106
        $region138: #{net_forward.4} parent=135 // pred_check_branch
          %832 = sbr.rel (%p830) target = $region140
        $region139: #{net_forward.4} parent=135 // pred_region
          %s833 = sand.u32 %s91, 1
          %s834 = sand.u32 %s91, 1
          %s835 = smul.addr %s834, 16
          %s836 = scalar_lea.vmem [#allocation3], %s835
        $region140: #{net_forward.4} parent=135 // pred_fallthru
          _
      $region136: #{net_forward.4} parent=5 // pred_fallthru
        _
    $region6: #{net_forward.4} parent=1 // loop_footer
      %s13 = sadd.s32 1, %s9
    $region7: #{net_forward.4} parent=1 // loop_footer_branch
      %8 = sbr.rel target = $region3
    $region8: #{net_forward.4} parent=1 // loop_exit
      _

// kernel: net_forward.5
$region0: #{net_forward.5}
  #allocation0 [shape = 'u32[]', space=smem, size = 0x4, offset = 0x4, fixed_abs, tag = 'smem constant byte address 0x4 - core index']
  #allocation1 [shape = 'u32[144,128]{1,0:T(1,128)}', space=vmem, size = 0x12000, scoped, tag = 'internal scratch']
  %s0 = inlined_call_operand.vmem [shape: bf16[2,400], index: 0, kind: input, shape index: {}]
  %s1 = inlined_call_operand.vmem [shape: bf16[400,120], index: 1, kind: input, shape index: {}]
  %s2 = inlined_call_operand.vmem [shape: f32[1,120], index: 2, kind: input, shape index: {}]
  %s3 = inlined_call_operand.vmem [shape: bf16[120,84], index: 3, kind: input, shape index: {}]
  %s4 = inlined_call_operand.vmem [shape: f32[1,84], index: 4, kind: input, shape index: {}]
  %s5 = inlined_call_operand.vmem [shape: bf16[84,10], index: 5, kind: input, shape index: {}]
  %s6 = inlined_call_operand.vmem [shape: f32[1,10], index: 6, kind: input, shape index: {}]
  %s7 = inlined_call_operand.hbm [shape: f32[2,10], index: 7, kind: output, shape index: {}]
  %s8 = sld [smem:[#allocation0]]
  $region38: #{net_forward.5} parent=0
    _
  %s10 = ssub.s32 1, %s8
  %s11 = scalar_select 0, %s10, %s8
  $region1: #{net_forward.5} parent=0
    #allocation2 [shape = 'u8[1024]{0}', space=vmem, size = 0x400, scoped, tag = 'output window, operand 0, single buffered']
    #allocation3 [shape = 's32[1]{0}', space=sflag, size = 0x4, scoped, tag = 'scoped memory for net_forward.5']
    %12 = vsyncpa [#allocation3], 0
    // Predicated region
    $region2: #{net_forward.5} parent=1 // pred_check
      _
    $region3: #{net_forward.5} parent=1 // pred_check_branch
      %14 = sbr.rel (0) target = $region5
    $region4: #{net_forward.5} parent=1 // pred_region
      _
    $region5: #{net_forward.5} parent=1 // pred_fallthru
      _
    // Predicated region
    $region6: #{net_forward.5} parent=1 // pred_check
      _
    $region7: #{net_forward.5} parent=1 // pred_check_branch
      %16 = sbr.rel (0) target = $region9
    $region8: #{net_forward.5} parent=1 // pred_region
      _
    $region9: #{net_forward.5} parent=1 // pred_fallthru
      _
    // Predicated region
    $region10: #{net_forward.5} parent=1 // pred_check
      _
    $region11: #{net_forward.5} parent=1 // pred_check_branch
      %18 = sbr.rel (0) target = $region13
    $region12: #{net_forward.5} parent=1 // pred_region
      _
    $region13: #{net_forward.5} parent=1 // pred_fallthru
      _
    // Predicated region
    $region14: #{net_forward.5} parent=1 // pred_check
      _
    $region15: #{net_forward.5} parent=1 // pred_check_branch
      %20 = sbr.rel (0) target = $region17
    $region16: #{net_forward.5} parent=1 // pred_region
      _
    $region17: #{net_forward.5} parent=1 // pred_fallthru
      _
    // Predicated region
    $region18: #{net_forward.5} parent=1 // pred_check
      _
    $region19: #{net_forward.5} parent=1 // pred_check_branch
      %22 = sbr.rel (0) target = $region21
    $region20: #{net_forward.5} parent=1 // pred_region
      _
    $region21: #{net_forward.5} parent=1 // pred_fallthru
      _
    // Predicated region
    $region22: #{net_forward.5} parent=1 // pred_check
      _
    $region23: #{net_forward.5} parent=1 // pred_check_branch
      %24 = sbr.rel (0) target = $region25
    $region24: #{net_forward.5} parent=1 // pred_region
      _
    $region25: #{net_forward.5} parent=1 // pred_fallthru
      _
    // Predicated region
    $region26: #{net_forward.5} parent=1 // pred_check
      _
    $region27: #{net_forward.5} parent=1 // pred_check_branch
      %26 = sbr.rel (0) target = $region29
    $region28: #{net_forward.5} parent=1 // pred_region
      _
    $region29: #{net_forward.5} parent=1 // pred_fallthru
      _
    %v28 = vld [vmem:[%s0] sm:$0xf]
    %v29 = vld [vmem:[%s1] sm:$0xf]
    %v30 = vld [vmem:[%s1 + $0x4] sm:$0xf]
    %v31 = vld [vmem:[%s1 + $0x8] sm:$0xf]
    %v32 = vld [vmem:[%s1 + $0xc] sm:$0xf]
    %v33 = vld [vmem:[%s1 + $0x10] sm:$0xf]
    %v34 = vld [vmem:[%s1 + $0x14] sm:$0xf]
    %v35 = vld [vmem:[%s1 + $0x18] sm:$0xf]
    %v36 = vld [vmem:[%s1 + $0x1c] sm:$0xf]
    %v37 = vld [vmem:[%s1 + $0x20] sm:$0xf]
    %v38 = vld [vmem:[%s1 + $0x24] sm:$0xf]
    %v39 = vld [vmem:[%s1 + $0x28] sm:$0xf]
    %v40 = vld [vmem:[%s1 + $0x2c] sm:$0xf]
    %v41 = vld [vmem:[%s1 + $0x30] sm:$0xf]
    %v42 = vld [vmem:[%s1 + $0x34] sm:$0xf]
    %v43 = vld [vmem:[%s1 + $0x38] sm:$0xf]
    %v44 = vld [vmem:[%s1 + $0x3c] sm:$0xf]
    %v45 = vld [vmem:[%s1 + $0x40] sm:$0xf]
    %v46 = vld [vmem:[%s1 + $0x44] sm:$0xf]
    %v47 = vld [vmem:[%s1 + $0x48] sm:$0xf]
    %v48 = vld [vmem:[%s1 + $0x4c] sm:$0xf]
    %v49 = vld [vmem:[%s1 + $0x50] sm:$0xf]
    %v50 = vld [vmem:[%s1 + $0x54] sm:$0xf]
    %v51 = vld [vmem:[%s1 + $0x58] sm:$0xf]
    %v52 = vld [vmem:[%s1 + $0x5c] sm:$0xf]
    %v53 = vld [vmem:[%s1 + $0x60] sm:$0xf]
    %v54 = vld [vmem:[%s1 + $0x64] sm:$0xf]
    %v55 = vld [vmem:[%s1 + $0x68] sm:$0xf]
    %v56 = vld [vmem:[%s1 + $0x6c] sm:$0xf]
    %v57 = vld [vmem:[%s1 + $0x70] sm:$0xf]
    %v58 = vld [vmem:[%s1 + $0x74] sm:$0xf]
    %v59 = vld [vmem:[%s1 + $0x78] sm:$0xf]
    %v60 = vld [vmem:[%s1 + $0x7c] sm:$0xf]
    %v61 = vld [vmem:[%s1 + $0x80] sm:$0xf]
    %v62 = vld [vmem:[%s1 + $0x84] sm:$0xf]
    %v63 = vld [vmem:[%s1 + $0x88] sm:$0xf]
    %v64 = vld [vmem:[%s1 + $0x8c] sm:$0xf]
    %v65 = vld [vmem:[%s1 + $0x90] sm:$0xf]
    %v66 = vld [vmem:[%s1 + $0x94] sm:$0xf]
    %v67 = vld [vmem:[%s1 + $0x98] sm:$0xf]
    %v68 = vld [vmem:[%s1 + $0x9c] sm:$0xf]
    %v69 = vld [vmem:[%s1 + $0xa0] sm:$0xf]
    %v70 = vld [vmem:[%s1 + $0xa4] sm:$0xf]
    %v71 = vld [vmem:[%s1 + $0xa8] sm:$0xf]
    %v72 = vld [vmem:[%s1 + $0xac] sm:$0xf]
    %v73 = vld [vmem:[%s1 + $0xb0] sm:$0xf]
    %v74 = vld [vmem:[%s1 + $0xb4] sm:$0xf]
    %v75 = vld [vmem:[%s1 + $0xb8] sm:$0xf]
    %v76 = vld [vmem:[%s1 + $0xbc] sm:$0xf]
    %v77 = vld [vmem:[%s1 + $0xc0] sm:$0xf]
    %v78 = vld [vmem:[%s1 + $0xc4] sm:$0xf]
    %v79 = vld [vmem:[%s2] sm:$0x1]
    %v81 = vlaneseq
    %v82 = vshrl.u32 %v81, 7
    %v83 = vsub.s32 0, %v82
    %v84 = vrot.slane %v79, %v83
    %v88 = vunpack.c.l.s4 1966171168
    %v89 = vunpack.c.0.s8 %v88
    %v90 = vlaneseq
    %v91 = vshrl.u32 %v90, 7
    %v92 = vsub.s32 %v89, %v91
    %v93 = vrot.slane %v28, %v92
    %v94 = vcombine.high %v93, %v93
    %v96 = vunpack.c.l.s4 1966171168
    %v97 = vunpack.c.0.s8 %v96
    %v98 = vlaneseq
    %v99 = vshrl.u32 %v98, 7
    %v100 = vsub.s32 %v97, %v99
    %v101 = vrot.slane %v93, %v100
    %v103 = vunpack.c.l.s4 1966171168
    %v104 = vunpack.c.0.s8 %v103
    %v105 = vlaneseq
    %v106 = vshrl.u32 %v105, 7
    %v107 = vsub.s32 %v104, %v106
    %v108 = vrot.slane %v94, %v107
    %v109 = vcombine.high %v101, %v101
    %v110 = vcombine.high %v108, %v108
    %v164 = vunpack.c.l.b16 %v29
    %v165 = vunpack.c.l.b16 %v30
    %v166 = vunpack.c.l.b16 %v31
    %v167 = vunpack.c.l.b16 %v32
    %v168 = vunpack.c.l.b16 %v33
    %v169 = vunpack.c.l.b16 %v34
    %v170 = vunpack.c.l.b16 %v35
    %v171 = vunpack.c.l.b16 %v36
    %v172 = vunpack.c.l.b16 %v37
    %v173 = vunpack.c.l.b16 %v38
    %v174 = vunpack.c.l.b16 %v39
    %v175 = vunpack.c.l.b16 %v40
    %v176 = vunpack.c.l.b16 %v41
    %v177 = vunpack.c.l.b16 %v42
    %v178 = vunpack.c.l.b16 %v43
    %v179 = vunpack.c.l.b16 %v44
    %v180 = vunpack.c.l.b16 %v45
    %v181 = vunpack.c.l.b16 %v46
    %v182 = vunpack.c.l.b16 %v47
    %v183 = vunpack.c.l.b16 %v48
    %v184 = vunpack.c.l.b16 %v49
    %v185 = vunpack.c.l.b16 %v50
    %v186 = vunpack.c.l.b16 %v51
    %v187 = vunpack.c.l.b16 %v52
    %v188 = vunpack.c.l.b16 %v53
    %v189 = vunpack.c.l.b16 %v54
    %v190 = vunpack.c.l.b16 %v55
    %v191 = vunpack.c.l.b16 %v56
    %v192 = vunpack.c.l.b16 %v57
    %v193 = vunpack.c.l.b16 %v58
    %v194 = vunpack.c.l.b16 %v59
    %v195 = vunpack.c.l.b16 %v60
    %v196 = vunpack.c.l.b16 %v61
    %v197 = vunpack.c.l.b16 %v62
    %v198 = vunpack.c.l.b16 %v63
    %v199 = vunpack.c.l.b16 %v64
    %v200 = vunpack.c.l.b16 %v65
    %v201 = vunpack.c.l.b16 %v66
    %v202 = vunpack.c.l.b16 %v67
    %v203 = vunpack.c.l.b16 %v68
    %v204 = vunpack.c.l.b16 %v69
    %v205 = vunpack.c.l.b16 %v70
    %v206 = vunpack.c.l.b16 %v71
    %v207 = vunpack.c.l.b16 %v72
    %v208 = vunpack.c.l.b16 %v73
    %v209 = vunpack.c.l.b16 %v74
    %v210 = vunpack.c.l.b16 %v75
    %v211 = vunpack.c.l.b16 %v76
    %v212 = vunpack.c.l.b16 %v77
    %v213 = vunpack.c.l.b16 %v78
    %v214 = vpack.c.b16 %v165, %v164
    %v215 = vpack.c.b16 %v167, %v166
    %v216 = vpack.c.b16 %v169, %v168
    %v217 = vpack.c.b16 %v171, %v170
    %v218 = vpack.c.b16 %v173, %v172
    %v219 = vpack.c.b16 %v175, %v174
    %v220 = vpack.c.b16 %v177, %v176
    %v221 = vpack.c.b16 %v179, %v178
    %v222 = vpack.c.b16 %v181, %v180
    %v223 = vpack.c.b16 %v183, %v182
    %v224 = vpack.c.b16 %v185, %v184
    %v225 = vpack.c.b16 %v187, %v186
    %v226 = vpack.c.b16 %v189, %v188
    %v227 = vpack.c.b16 %v191, %v190
    %v228 = vpack.c.b16 %v193, %v192
    %v229 = vpack.c.b16 %v195, %v194
    %v230 = vpack.c.b16 %v197, %v196
    %v231 = vpack.c.b16 %v199, %v198
    %v232 = vpack.c.b16 %v201, %v200
    %v233 = vpack.c.b16 %v203, %v202
    %v234 = vpack.c.b16 %v205, %v204
    %v235 = vpack.c.b16 %v207, %v206
    %v236 = vpack.c.b16 %v209, %v208
    %v237 = vpack.c.b16 %v211, %v210
    %v238 = vpack.c.b16 %v213, %v212
    %vm264 = vcmask 130048
    %v266 = vsel %vm264, %v110, 0
    %268 = vmatprep.subr.bf16.mxu0 0
    %269 = vmatpush1.bf16.msra.mxu0 %v214
    %270 = vmatprep.subr.bf16.mxu0 0
    %271 = vmatpush1.bf16.msra.mxu0 %v215
    %272 = vmatprep.subr.bf16.mxu0 0
    %273 = vmatpush1.bf16.msra.mxu0 %v216
    %274 = vmatprep.subr.bf16.mxu0 0
    %275 = vmatpush1.bf16.msra.mxu0 %v217
    %276 = vmatprep.subr.bf16.mxu0 0
    %277 = vmatpush1.bf16.msra.mxu0 %v218
    %278 = vmatprep.subr.bf16.mxu0 0
    %279 = vmatpush1.bf16.msra.mxu0 %v219
    %280 = vmatprep.subr.bf16.mxu0 0
    %281 = vmatpush1.bf16.msra.mxu0 %v220
    %282 = vmatprep.subr.bf16.mxu0 0
    %283 = vmatpush1.bf16.msra.mxu0 %v221
    %284 = vmatprep.subr.bf16.mxu0 0
    %285 = vmatpush1.bf16.msra.mxu0 %v222
    %286 = vmatprep.subr.bf16.mxu0 0
    %287 = vmatpush1.bf16.msra.mxu0 %v223
    %288 = vmatprep.subr.bf16.mxu0 0
    %289 = vmatpush1.bf16.msra.mxu0 %v224
    %290 = vmatprep.subr.bf16.mxu0 0
    %291 = vmatpush1.bf16.msra.mxu0 %v225
    %292 = vmatprep.subr.bf16.mxu0 0
    %293 = vmatpush1.bf16.msra.mxu0 %v226
    %294 = vmatprep.subr.bf16.mxu0 0
    %295 = vmatpush1.bf16.msra.mxu0 %v227
    %296 = vmatprep.subr.bf16.mxu0 0
    %297 = vmatpush1.bf16.msra.mxu0 %v228
    %298 = vmatprep.subr.bf16.mxu0 0
    %299 = vmatpush1.bf16.msra.mxu0 %v229
    %300 = vmatprep.mubr.bf16.mxu0 %v108
    %301 = vmatmul.mubr.bf16.gmra.mrb[0].mxu0 %v101
    %v302 = vpop.f32.mrb[0].mxu0
    %v303 = vadd.f32 %v84, %v302
    %v304 = vpop.f32.mrb[0].mxu0
    %v305 = vpop.f32.mrb[0].mxu0
    %v306 = vpop.f32.mrb[0].mxu0
    %307 = vdwg.mxu0
    %308 = vmatprep.subr.bf16.mxu0 0
    %309 = vmatpush1.bf16.msra.mxu0 %v230
    %310 = vmatprep.subr.bf16.mxu0 0
    %311 = vmatpush1.bf16.msra.mxu0 %v231
    %312 = vmatprep.subr.bf16.mxu0 0
    %313 = vmatpush1.bf16.msra.mxu0 %v232
    %314 = vmatprep.subr.bf16.mxu0 0
    %315 = vmatpush1.bf16.msra.mxu0 %v233
    %316 = vmatprep.subr.bf16.mxu0 0
    %317 = vmatpush1.bf16.msra.mxu0 %v234
    %318 = vmatprep.subr.bf16.mxu0 0
    %319 = vmatpush1.bf16.msra.mxu0 %v235
    %320 = vmatprep.subr.bf16.mxu0 0
    %321 = vmatpush1.bf16.msra.mxu0 %v236
    %322 = vmatprep.subr.bf16.mxu0 0
    %323 = vmatpush1.bf16.msra.mxu0 %v237
    %324 = vmatprep.subr.bf16.mxu0 0
    %325 = vmatpush1.bf16.msra.mxu0 %v238
    %326 = vmatprep.subr.bf16.mxu0 0
    %327 = vmatpush1.bf16.msra.mxu0 0
    %328 = vmatprep.subr.bf16.mxu0 0
    %329 = vmatpush1.bf16.msra.mxu0 0
    %330 = vmatprep.subr.bf16.mxu0 0
    %331 = vmatpush1.bf16.msra.mxu0 0
    %332 = vmatprep.subr.bf16.mxu0 0
    %333 = vmatpush1.bf16.msra.mxu0 0
    %334 = vmatprep.subr.bf16.mxu0 0
    %335 = vmatpush1.bf16.msra.mxu0 0
    %336 = vmatprep.subr.bf16.mxu0 0
    %337 = vmatpush1.bf16.msra.mxu0 0
    %338 = vmatprep.subr.bf16.mxu0 0
    %339 = vmatpush1.bf16.msra.mxu0 0
    %340 = vmatprep.mubr.bf16.mxu0 %v266
    %341 = vmatmul.mubr.bf16.gmra.mrb[0].mxu0 %v109
    %v342 = vpop.f32.mrb[0].mxu0
    %v343 = vadd.f32 %v303, %v342
    %v344 = vpop.f32.mrb[0].mxu0
    %v345 = vpop.f32.mrb[0].mxu0
    %v346 = vpop.f32.mrb[0].mxu0
    %347 = vdwg.mxu0
    %v348 = vmax.f32 %v343, 0.0
    %v349 = vpack.c.bf16 %v348, %v348
    %v350 = vld [vmem:[%s3] sm:$0xf]
    %v351 = vld [vmem:[%s3 + $0x4] sm:$0xf]
    %v352 = vld [vmem:[%s3 + $0x8] sm:$0xf]
    %v353 = vld [vmem:[%s3 + $0xc] sm:$0xf]
    %v354 = vld [vmem:[%s3 + $0x10] sm:$0xf]
    %v355 = vld [vmem:[%s3 + $0x14] sm:$0xf]
    %v356 = vld [vmem:[%s3 + $0x18] sm:$0xf]
    %v357 = vld [vmem:[%s3 + $0x1c] sm:$0xf]
    %v358 = vld [vmem:[%s3 + $0x20] sm:$0xf]
    %v359 = vld [vmem:[%s3 + $0x24] sm:$0xf]
    %v360 = vld [vmem:[%s3 + $0x28] sm:$0xf]
    %v361 = vld [vmem:[%s3 + $0x2c] sm:$0xf]
    %v362 = vld [vmem:[%s3 + $0x30] sm:$0xf]
    %v363 = vld [vmem:[%s3 + $0x34] sm:$0xf]
    %v364 = vld [vmem:[%s3 + $0x38] sm:$0xf]
    %v365 = vld [vmem:[%s4] sm:$0x1]
    %v367 = vlaneseq
    %v368 = vshrl.u32 %v367, 7
    %v369 = vsub.s32 0, %v368
    %v370 = vrot.slane %v365, %v369
    %v387 = vunpack.c.l.b16 %v350
    %v388 = vunpack.c.l.b16 %v351
    %v389 = vunpack.c.l.b16 %v352
    %v390 = vunpack.c.l.b16 %v353
    %v391 = vunpack.c.l.b16 %v354
    %v392 = vunpack.c.l.b16 %v355
    %v393 = vunpack.c.l.b16 %v356
    %v394 = vunpack.c.l.b16 %v357
    %v395 = vunpack.c.l.b16 %v358
    %v396 = vunpack.c.l.b16 %v359
    %v397 = vunpack.c.l.b16 %v360
    %v398 = vunpack.c.l.b16 %v361
    %v399 = vunpack.c.l.b16 %v362
    %v400 = vunpack.c.l.b16 %v363
    %v401 = vunpack.c.l.b16 %v364
    %v402 = vpack.c.b16 %v388, %v387
    %v403 = vpack.c.b16 %v390, %v389
    %v404 = vpack.c.b16 %v392, %v391
    %v405 = vpack.c.b16 %v394, %v393
    %v406 = vpack.c.b16 %v396, %v395
    %v407 = vpack.c.b16 %v398, %v397
    %v408 = vpack.c.b16 %v400, %v399
    %v409 = vpack.c.b16 %v401, %v401
    %vm417 = vcmask 982016
    %v419 = vsel %vm417, %v349, 0
    %vm421 = vcmask 1043456
    %v423 = vsel %vm421, %v409, 0
    %425 = vmatprep.subr.bf16.mxu0 0
    %426 = vmatpush1.bf16.msra.mxu0 %v402
    %427 = vmatprep.subr.bf16.mxu0 0
    %428 = vmatpush1.bf16.msra.mxu0 %v403
    %429 = vmatprep.subr.bf16.mxu0 0
    %430 = vmatpush1.bf16.msra.mxu0 %v404
    %431 = vmatprep.subr.bf16.mxu0 0
    %432 = vmatpush1.bf16.msra.mxu0 %v405
    %433 = vmatprep.subr.bf16.mxu0 0
    %434 = vmatpush1.bf16.msra.mxu0 %v406
    %435 = vmatprep.subr.bf16.mxu0 0
    %436 = vmatpush1.bf16.msra.mxu0 %v407
    %437 = vmatprep.subr.bf16.mxu0 0
    %438 = vmatpush1.bf16.msra.mxu0 %v408
    %439 = vmatprep.subr.bf16.mxu0 0
    %440 = vmatpush1.bf16.msra.mxu0 %v423
    %441 = vmatprep.subr.bf16.mxu0 0
    %442 = vmatpush1.bf16.msra.mxu0 0
    %443 = vmatprep.subr.bf16.mxu0 0
    %444 = vmatpush1.bf16.msra.mxu0 0
    %445 = vmatprep.subr.bf16.mxu0 0
    %446 = vmatpush1.bf16.msra.mxu0 0
    %447 = vmatprep.subr.bf16.mxu0 0
    %448 = vmatpush1.bf16.msra.mxu0 0
    %449 = vmatprep.subr.bf16.mxu0 0
    %450 = vmatpush1.bf16.msra.mxu0 0
    %451 = vmatprep.subr.bf16.mxu0 0
    %452 = vmatpush1.bf16.msra.mxu0 0
    %453 = vmatprep.subr.bf16.mxu0 0
    %454 = vmatpush1.bf16.msra.mxu0 0
    %455 = vmatprep.subr.bf16.mxu0 0
    %456 = vmatpush1.bf16.msra.mxu0 0
    %457 = vmatprep.mubr.bf16.mxu0 0
    %458 = vmatmul.mubr.bf16.gmra.mrb[0].mxu0 %v419
    %v459 = vpop.f32.mrb[0].mxu0
    %v460 = vadd.f32 %v370, %v459
    %v461 = vpop.f32.mrb[0].mxu0
    %v462 = vpop.f32.mrb[0].mxu0
    %v463 = vpop.f32.mrb[0].mxu0
    %464 = vdwg.mxu0
    %v465 = vmax.f32 %v460, 0.0
    %v466 = vpack.c.bf16 %v465, %v465
    %v467 = vld [vmem:[%s5] sm:$0xf]
    %v468 = vld [vmem:[%s5 + $0x4] sm:$0xf]
    %v469 = vld [vmem:[%s5 + $0x8] sm:$0xf]
    %v470 = vld [vmem:[%s5 + $0xc] sm:$0xf]
    %v471 = vld [vmem:[%s5 + $0x10] sm:$0xf]
    %v472 = vld [vmem:[%s5 + $0x14] sm:$0xf]
    %v473 = vld [vmem:[%s5 + $0x18] sm:$0xf]
    %v474 = vld [vmem:[%s5 + $0x1c] sm:$0xf]
    %v475 = vld [vmem:[%s5 + $0x20] sm:$0xf]
    %v476 = vld [vmem:[%s5 + $0x24] sm:$0xf]
    %v477 = vld [vmem:[%s5 + $0x28] sm:$0x3]
    %v478 = vld [vmem:[%s6] sm:$0x1]
    %v480 = vlaneseq
    %v481 = vshrl.u32 %v480, 7
    %v482 = vsub.s32 0, %v481
    %v483 = vrot.slane %v478, %v482
    %v496 = vunpack.c.l.b16 %v467
    %v497 = vunpack.c.l.b16 %v468
    %v498 = vunpack.c.l.b16 %v469
    %v499 = vunpack.c.l.b16 %v470
    %v500 = vunpack.c.l.b16 %v471
    %v501 = vunpack.c.l.b16 %v472
    %v502 = vunpack.c.l.b16 %v473
    %v503 = vunpack.c.l.b16 %v474
    %v504 = vunpack.c.l.b16 %v475
    %v505 = vunpack.c.l.b16 %v476
    %v506 = vunpack.c.l.b16 %v477
    %v507 = vpack.c.b16 %v497, %v496
    %v508 = vpack.c.b16 %v499, %v498
    %v509 = vpack.c.b16 %v501, %v500
    %v510 = vpack.c.b16 %v503, %v502
    %v511 = vpack.c.b16 %v505, %v504
    %v512 = vpack.c.b16 %v506, %v506
    %vm518 = vcmask 687104
    %v520 = vsel %vm518, %v466, 0
    %vm522 = vcmask 1041408
    %v524 = vsel %vm522, %v512, 0
    %526 = vmatprep.subr.bf16.mxu0 0
    %527 = vmatpush1.bf16.msra.mxu0 %v507
    %528 = vmatprep.subr.bf16.mxu0 0
    %529 = vmatpush1.bf16.msra.mxu0 %v508
    %530 = vmatprep.subr.bf16.mxu0 0
    %531 = vmatpush1.bf16.msra.mxu0 %v509
    %532 = vmatprep.subr.bf16.mxu0 0
    %533 = vmatpush1.bf16.msra.mxu0 %v510
    %534 = vmatprep.subr.bf16.mxu0 0
    %535 = vmatpush1.bf16.msra.mxu0 %v511
    %536 = vmatprep.subr.bf16.mxu0 0
    %537 = vmatpush1.bf16.msra.mxu0 %v524
    %538 = vmatprep.subr.bf16.mxu0 0
    %539 = vmatpush1.bf16.msra.mxu0 0
    %540 = vmatprep.subr.bf16.mxu0 0
    %541 = vmatpush1.bf16.msra.mxu0 0
    %542 = vmatprep.subr.bf16.mxu0 0
    %543 = vmatpush1.bf16.msra.mxu0 0
    %544 = vmatprep.subr.bf16.mxu0 0
    %545 = vmatpush1.bf16.msra.mxu0 0
    %546 = vmatprep.subr.bf16.mxu0 0
    %547 = vmatpush1.bf16.msra.mxu0 0
    %548 = vmatprep.subr.bf16.mxu0 0
    %549 = vmatpush1.bf16.msra.mxu0 0
    %550 = vmatprep.subr.bf16.mxu0 0
    %551 = vmatpush1.bf16.msra.mxu0 0
    %552 = vmatprep.subr.bf16.mxu0 0
    %553 = vmatpush1.bf16.msra.mxu0 0
    %554 = vmatprep.subr.bf16.mxu0 0
    %555 = vmatpush1.bf16.msra.mxu0 0
    %556 = vmatprep.subr.bf16.mxu0 0
    %557 = vmatpush1.bf16.msra.mxu0 0
    %558 = vmatprep.mubr.bf16.mxu0 0
    %559 = vmatmul.mubr.bf16.gmra.mrb[0].mxu0 %v520
    %v560 = vpop.f32.mrb[0].mxu0
    %v561 = vadd.f32 %v483, %v560
    %v562 = vpop.f32.mrb[0].mxu0
    %v563 = vpop.f32.mrb[0].mxu0
    %v564 = vpop.f32.mrb[0].mxu0
    %565 = vdwg.mxu0
    %vm566 = vcmask 74752
    %567 = vst.msk [vmem:[#allocation2] sm:$0x3] %vm566, %v561
    // Predicated region
    $region30: #{net_forward.5} parent=1 // pred_check
      _
    $region31: #{net_forward.5} parent=1 // pred_check_branch
      %569 = sbr.rel (0) target = $region33
    $region32: #{net_forward.5} parent=1 // pred_region
      %s571 = ssub.s32 32, 32
      %572 = vsyncadd [#allocation3], %s571
      %s574 = sshll.u32 [#allocation2], 4
      %s575 = int_to_ptr.vmem [resolvable:$true] %s574
      %577 = dma.vmem_to_hbm [thread:$0]  %s575, 32, %s7, [#allocation3]
    $region33: #{net_forward.5} parent=1 // pred_fallthru
      _
    // Predicated region
    $region34: #{net_forward.5} parent=1 // pred_check
      _
    $region35: #{net_forward.5} parent=1 // pred_check_branch
      %579 = sbr.rel (0) target = $region37
    $region36: #{net_forward.5} parent=1 // pred_region
      %580 = dma.done [#allocation3], 32
    $region37: #{net_forward.5} parent=1 // pred_fallthru
      _
    %581 = vsyncpa [#allocation3], 1

</llo_original>
